<compile_context>
chip_gen: v7x
topology: tpu7x:2x2x1
jax: 0.10.0
libtpu: 0.0.40
codegen_flags: <defaults>
</compile_context>

<pallas_src>
import jax
import jax.numpy as jnp
from jax.experimental import pallas as pl
from jax.experimental.pallas import tpu as pltpu

EPS = 1e-5
SLOPE = 0.1


def _leaky(x):
    # max(x, 0.1*x): one mul + one max (cheaper than compare+select on the VPU)
    return jnp.maximum(x, SLOPE * x)


def _round_up(n, m):
    return ((n + m - 1) // m) * m


def _pick_images_per_step(n_im, h_img, target_rows=256):
    """Largest divisor of the batch keeping rows-per-step near the target M."""
    best = 1
    for cand in range(1, n_im + 1):
        if n_im % cand == 0 and cand * h_img <= max(target_rows, h_img):
            best = cand
    return best


def _full_spec(a, single_buffer):
    """Whole-array block with a constant index map (weight resident in VMEM once).

    Single-buffered when supported: the block never changes across the grid, so the
    default double buffering would only waste VMEM (matters on v7x 64 MiB / v5e's
    small scoped default)."""
    idx = lambda b, nd=a.ndim: (0,) * nd
    if single_buffer and hasattr(pl, "Buffered"):
        try:
            return pl.BlockSpec(a.shape, idx, pipeline_mode=pl.Buffered(1))
        except TypeError:  # older BlockSpec without pipeline_mode
            pass
    return pl.BlockSpec(a.shape, idx)


# ---------------------------------------------------------------------------
# Fused BottleneckCSP kernel (Bt images per grid step, lane-dense slab layout)
# ---------------------------------------------------------------------------
def _csp_kernel(x_ref, w1_ref, b1_ref,
                wb1_ref, bb1_ref, wb2_ref, bb2_ref,
                w3_ref, b3_ref, w2_ref, b2_ref,
                w4a_ref, w4b_ref, b4_ref, o_ref):
    bt, h_img, _ = o_ref.shape
    wc1 = x_ref.shape[2]
    wcc = w1_ref.shape[1]
    n_blk = wb1_ref.shape[0]

    hp = _round_up(h_img + 2, 8)        # rows per image incl. one halo row per side
    m_pad = bt * hp

    # ---- padded bf16 input slab (cast in-kernel; halo-row contents are irrelevant:
    #      every consumer is masked or row-local and its halo rows are never read) ----
    ztop = jnp.zeros((1, wc1), jnp.bfloat16)
    zbot = jnp.zeros((hp - 1 - h_img, wc1), jnp.bfloat16)
    pieces = []
    for b in range(bt):
        pieces += [ztop, x_ref[b].astype(jnp.bfloat16), zbot]
    xq = jnp.concatenate(pieces, axis=0)                       # (m_pad, W*C1)

    # ---- hoisted validity mask: True on real image rows, False on halo/pad rows ----
    row = jax.lax.broadcasted_iota(jnp.int32, (m_pad, wcc), 0)
    valid = (row >= 1) & (row < 1 + h_img)
    for b in range(1, bt):
        lo = b * hp + 1
        valid = valid | ((row >= lo) & (row < lo + h_img))

    # cv1 (1x1 conv, BN scale pre-folded) + LeakyReLU; halo rows forced to zero.
    h0 = jnp.dot(xq, w1_ref[...], preferred_element_type=jnp.float32) + b1_ref[...]
    h0 = jnp.where(valid, _leaky(h0), 0.0).astype(jnp.bfloat16)

    zrow = jnp.zeros((1, wcc), jnp.bfloat16)

    def body(j, h):
        # Bottleneck j: 1x1 -> 3x3 -> residual, fixed (m_pad, wcc) shapes every step.
        t = jnp.dot(h, wb1_ref[j], preferred_element_type=jnp.float32) + bb1_ref[j]
        t = jnp.where(valid, _leaky(t), 0.0).astype(jnp.bfloat16)  # zero halo = conv pad
        # 3x3 conv: gather the 3 row taps along lanes -> one K = 3*W*c_ MXU matmul.
        t_up = jnp.concatenate([zrow, t[:-1]], axis=0)    # t_up[i] = t[i-1]
        t_dn = jnp.concatenate([t[1:], zrow], axis=0)     # t_dn[i] = t[i+1]
        t3 = jnp.concatenate([t_up, t, t_dn], axis=-1)    # (m_pad, 3*W*c_)
        conv = jnp.dot(t3, wb2_ref[j], preferred_element_type=jnp.float32) + bb2_ref[j]
        upd = jnp.where(valid, _leaky(conv), 0.0)
        return (h.astype(jnp.float32) + upd).astype(jnp.bfloat16)  # residual add

    h = jax.lax.fori_loop(0, n_blk, body, h0, unroll=True)

    # cv3 / cv2 (plain 1x1 convs with the standalone BN folded in) + LeakyReLU.
    z1 = _leaky(jnp.dot(h, w3_ref[...], preferred_element_type=jnp.float32)
                + b3_ref[...]).astype(jnp.bfloat16)
    z2 = _leaky(jnp.dot(xq, w2_ref[...], preferred_element_type=jnp.float32)
                + b2_ref[...]).astype(jnp.bfloat16)

    # cv4 on concat(z1, z2) expressed as a split matmul; BN scale folded into W4.
    y = (jnp.dot(z1, w4a_ref[...], preferred_element_type=jnp.float32)
         + jnp.dot(z2, w4b_ref[...], preferred_element_type=jnp.float32)
         + b4_ref[...])
    y = _leaky(y).astype(o_ref.dtype)

    for b in range(bt):                                    # store only the valid rows
        o_ref[b] = y[b * hp + 1: b * hp + 1 + h_img, :]


def bottleneck_csp_forward(x, packed, single_buffer_weights=True, target_rows=256):
    """x: (N, H, W, C1) f32 NHWC.  Mirrors BottleneckCSP.forward (inference BN)."""
    n_im, hh, ww, c1 = x.shape
    c2 = packed["w4a"].shape[1] // ww
    bt = _pick_images_per_step(n_im, hh, target_rows)

    # Raw f32 input streamed (reshape is free / contiguous); bf16 cast happens in-kernel.
    x3 = x.reshape(n_im, hh, ww * c1)

    weight_names = ["w1", "b1", "wb1", "bb1", "wb2", "bb2",
                    "w3", "b3", "w2", "b2", "w4a", "w4b", "b4"]
    weights = [packed[k] for k in weight_names]

    out = pl.pallas_call(
        _csp_kernel,
        out_shape=jax.ShapeDtypeStruct((n_im, hh, ww * c2), jnp.bfloat16),
        grid=(n_im // bt,),
        in_specs=[pl.BlockSpec((bt, hh, ww * c1), lambda b: (b, 0, 0))]
                 + [_full_spec(w, single_buffer_weights) for w in weights],
        out_specs=pl.BlockSpec((bt, hh, ww * c2), lambda b: (b, 0, 0)),
        compiler_params=pltpu.CompilerParams(
            dimension_semantics=("parallel",),
            vmem_limit_bytes=64 * 1024 * 1024),  # explicit budget for the weight slabs
    )(x3, *weights)
    return out.reshape(n_im, hh, ww, c2)


# ---------------------------------------------------------------------------
# Parameters: raw (PyTorch-like) init -> BN folding -> slab packing
# ---------------------------------------------------------------------------
def init_params(key, c1, c2, n=1, e=0.5):
    c_ = int(c2 * e)
    ks = jax.random.split(key, 7 + 4 * n)

    def conv_w(k, cin, cout, kk):
        w = jax.random.normal(k, (kk, kk, cin, cout), jnp.float32) / jnp.sqrt(kk * kk * cin)
        return w if kk > 1 else w[0, 0]

    def bn(k, c):
        k1, k2, k3, k4 = jax.random.split(k, 4)
        gamma = 1.0 + 0.1 * jax.random.normal(k1, (c,), jnp.float32)
        beta = 0.1 * jax.random.normal(k2, (c,), jnp.float32)
        mean = 0.1 * jax.random.normal(k3, (c,), jnp.float32)
        var = jax.random.uniform(k4, (c,), jnp.float32, minval=0.5, maxval=1.5)
        s = gamma / jnp.sqrt(var + EPS)
        return s, beta - mean * s

    p = {"c1": c1, "c2": c2, "c_": c_, "n": n}
    p["cv1_w"] = conv_w(ks[0], c1, c_, 1)
    p["cv1_s"], p["cv1_b"] = bn(ks[1], c_)
    p["cv2_w"] = conv_w(ks[2], c1, c_, 1)           # plain conv (no BN / act)
    p["cv3_w"] = conv_w(ks[3], c_, c_, 1)           # plain conv (no BN / act)
    p["cv4_w"] = conv_w(ks[4], 2 * c_, c2, 1)
    p["cv4_s"], p["cv4_b"] = bn(ks[5], c2)
    p["bn_s"], p["bn_b"] = bn(ks[6], 2 * c_)        # standalone bn over 2*c_
    p["m"] = []
    for i in range(n):
        w1 = conv_w(ks[7 + 4 * i], c_, c_, 1)
        s1, b1 = bn(ks[8 + 4 * i], c_)
        w2 = conv_w(ks[9 + 4 * i], c_, c_, 3)
        s2, b2 = bn(ks[10 + 4 * i], c_)
        p["m"].append(dict(w1=w1, s1=s1, b1=b1, w2=w2, s2=s2, b2=b2))
    return p


def fold_params(p):
    """Fold every BatchNorm scale into the preceding conv weight (inference mode)."""
    c_ = p["c_"]
    f = {"n": p["n"]}
    f["cv1_w"] = p["cv1_w"] * p["cv1_s"][None, :]
    f["cv1_b"] = p["cv1_b"]
    # standalone bn over cat(y1, y2): its scale folds backwards into cv3 / cv2.
    f["cv3_w"] = p["cv3_w"] * p["bn_s"][None, :c_]
    f["cv3_b"] = p["bn_b"][:c_]
    f["cv2_w"] = p["cv2_w"] * p["bn_s"][None, c_:]
    f["cv2_b"] = p["bn_b"][c_:]
    w4 = p["cv4_w"] * p["cv4_s"][None, :]
    f["cv4a_w"], f["cv4b_w"] = w4[:c_], w4[c_:]
    f["cv4_b"] = p["cv4_b"]
    f["m"] = [dict(w1=b["w1"] * b["s1"][None, :], b1=b["b1"],
                   w2=b["w2"] * b["s2"][None, None, None, :], b2=b["b2"])
              for b in p["m"]]
    return f


def pack_params(f, width):
    """bf16-quantize folded weights and pack them into lane-dense slab matrices."""
    eye = lambda k=0: jnp.eye(width, k=k, dtype=jnp.float32)

    def bd(w):        # (Cin, Cout) -> block-diagonal (W*Cin, W*Cout): 1x1 conv on the slab
        return jnp.kron(eye(), w)

    def banded_k(w):  # (3,3,Cin,Cout) -> (3*W*Cin, W*Cout): dy taps stacked along K
        taps = [jnp.kron(eye(1), w[dy, 0]) + jnp.kron(eye(0), w[dy, 1])
                + jnp.kron(eye(-1), w[dy, 2]) for dy in range(3)]
        return jnp.concatenate(taps, axis=0)

    def tb(b):        # per-channel bias -> (1, W*C) slab bias (kept f32)
        return jnp.tile(b, width)[None, :]

    q = lambda w: w.astype(jnp.bfloat16)
    return {
        "w1": q(bd(f["cv1_w"])), "b1": tb(f["cv1_b"]),
        "w3": q(bd(f["cv3_w"])), "b3": tb(f["cv3_b"]),
        "w2": q(bd(f["cv2_w"])), "b2": tb(f["cv2_b"]),
        "w4a": q(bd(f["cv4a_w"])), "w4b": q(bd(f["cv4b_w"])), "b4": tb(f["cv4_b"]),
        "wb1": jnp.stack([q(bd(b["w1"])) for b in f["m"]]),
        "bb1": jnp.stack([tb(b["b1"]) for b in f["m"]]),
        "wb2": jnp.stack([q(banded_k(b["w2"])) for b in f["m"]]),
        "bb2": jnp.stack([tb(b["b2"]) for b in f["m"]]),
    }


# ---------------------------------------------------------------------------
# Pure-JAX reference (same folded, bf16-quantized weights; f32 math)
# ---------------------------------------------------------------------------
def _q(w):
    return w.astype(jnp.bfloat16).astype(jnp.float32)


def reference_forward(x, f):
    def pw(t, w, b=None):
        y = jnp.einsum("nhwc,cd->nhwd", t, _q(w))
        return y if b is None else y + b

    def c3(t, w, b):
        _, hh, ww, _ = t.shape
        tp = jnp.pad(t, ((0, 0), (1, 1), (1, 1), (0, 0)))
        acc = 0.0
        for dy in range(3):
            for dx in range(3):
                acc = acc + jnp.einsum("nhwc,cd->nhwd",
                                       tp[:, dy:dy + hh, dx:dx + ww, :], _q(w[dy, dx]))
        return acc + b

    xq = _q(x)
    h = _leaky(pw(xq, f["cv1_w"], f["cv1_b"]))
    for blk in f["m"]:
        t = _leaky(pw(h, blk["w1"], blk["b1"]))
        h = h + _leaky(c3(t, blk["w2"], blk["b2"]))
    z1 = _leaky(pw(h, f["cv3_w"], f["cv3_b"]))
    z2 = _leaky(pw(xq, f["cv2_w"], f["cv2_b"]))
    y = pw(z1, f["cv4a_w"]) + pw(z2, f["cv4b_w"]) + f["cv4_b"]
    return _leaky(y)


if __name__ == "__main__":
    key = jax.random.PRNGKey(0)
    kx, kp = jax.random.split(key)

    # small config: c1 = c2 = 16 -> c_ = 8 ; n = 2 bottlenecks ; 16x16 image, batch 2
    N, H, W, C1, C2, NB = 2, 16, 16, 16, 16, 2
    x = jax.random.normal(kx, (N, H, W, C1), jnp.float32)     # NHWC

    raw = init_params(kp, C1, C2, n=NB, e=0.5)
    folded = fold_params(raw)
    packed = pack_params(folded, W)

    def run(single_buffer):
        fn = jax.jit(lambda xx, pp: bottleneck_csp_forward(
            xx, pp, single_buffer_weights=single_buffer))
        o = fn(x, packed)
        jax.block_until_ready(o)
        return o

    try:
        out = run(True)          # single-buffered constant weight blocks
    except Exception:            # pipeline_mode / Buffered(1) unsupported -> plain specs
        out = run(False)

    out = out.astype(jnp.float32)
    assert out.shape == (N, H, W, C2), out.shape
    assert bool(jnp.all(jnp.isfinite(out)))

    # correctness check vs pure-JAX reference (tolerance covers bf16 intermediates/output)
    ref = reference_forward(x, folded)
    err = float(jnp.max(jnp.abs(out - ref)))
    scale = float(jnp.max(jnp.abs(ref))) + 1e-6
    assert err <= 0.06 * scale + 1e-2, (err, scale)

    print("KERNEL_OK")
</pallas_src>

<mosaic_0001>
module attributes {stable_mosaic.version = 11 : i64} {
  func.func @_csp_kernel(%arg0: i32, %arg1: memref<2x16x256xf32, #tpu.memory_space<vmem>>, %arg2: memref<256x128xbf16, #tpu.memory_space<vmem>>, %arg3: memref<1x128xf32, #tpu.memory_space<vmem>>, %arg4: memref<2x128x128xbf16, #tpu.memory_space<vmem>>, %arg5: memref<2x1x128xf32, #tpu.memory_space<vmem>>, %arg6: memref<2x384x128xbf16, #tpu.memory_space<vmem>>, %arg7: memref<2x1x128xf32, #tpu.memory_space<vmem>>, %arg8: memref<128x128xbf16, #tpu.memory_space<vmem>>, %arg9: memref<1x128xf32, #tpu.memory_space<vmem>>, %arg10: memref<256x128xbf16, #tpu.memory_space<vmem>>, %arg11: memref<1x128xf32, #tpu.memory_space<vmem>>, %arg12: memref<128x256xbf16, #tpu.memory_space<vmem>>, %arg13: memref<128x256xbf16, #tpu.memory_space<vmem>>, %arg14: memref<1x256xf32, #tpu.memory_space<vmem>>, %arg15: memref<2x16x256xbf16, #tpu.memory_space<vmem>>) attributes {dimension_semantics = [#tpu.dimension_semantics<parallel>], iteration_bounds = array<i64: 1>, scalar_prefetch = 0 : i64, scratch_operands = 0 : i64, tpu.core_type = #tpu.core_type<tc>, window_params = [{transform_indices = @transform_0, window_bounds = array<i64: 2, 16, 256>}, {pipeline_mode = #tpu.pipeline_mode<synchronous>, transform_indices = @transform_1, window_bounds = array<i64: 256, 128>}, {pipeline_mode = #tpu.pipeline_mode<synchronous>, transform_indices = @transform_2, window_bounds = array<i64: 1, 128>}, {pipeline_mode = #tpu.pipeline_mode<synchronous>, transform_indices = @transform_3, window_bounds = array<i64: 2, 128, 128>}, {pipeline_mode = #tpu.pipeline_mode<synchronous>, transform_indices = @transform_4, window_bounds = array<i64: 2, 1, 128>}, {pipeline_mode = #tpu.pipeline_mode<synchronous>, transform_indices = @transform_5, window_bounds = array<i64: 2, 384, 128>}, {pipeline_mode = #tpu.pipeline_mode<synchronous>, transform_indices = @transform_6, window_bounds = array<i64: 2, 1, 128>}, {pipeline_mode = #tpu.pipeline_mode<synchronous>, transform_indices = @transform_7, window_bounds = array<i64: 128, 128>}, {pipeline_mode = #tpu.pipeline_mode<synchronous>, transform_indices = @transform_8, window_bounds = array<i64: 1, 128>}, {pipeline_mode = #tpu.pipeline_mode<synchronous>, transform_indices = @transform_9, window_bounds = array<i64: 256, 128>}, {pipeline_mode = #tpu.pipeline_mode<synchronous>, transform_indices = @transform_10, window_bounds = array<i64: 1, 128>}, {pipeline_mode = #tpu.pipeline_mode<synchronous>, transform_indices = @transform_11, window_bounds = array<i64: 128, 256>}, {pipeline_mode = #tpu.pipeline_mode<synchronous>, transform_indices = @transform_12, window_bounds = array<i64: 128, 256>}, {pipeline_mode = #tpu.pipeline_mode<synchronous>, transform_indices = @transform_13, window_bounds = array<i64: 1, 256>}, {transform_indices = @transform_14, window_bounds = array<i64: 2, 16, 256>}]} {
    %cst = arith.constant 0.000000e+00 : bf16
    %0 = vector.broadcast %cst : bf16 to vector<1x256xbf16>
    %cst_0 = arith.constant 0.000000e+00 : bf16
    %1 = vector.broadcast %cst_0 : bf16 to vector<7x256xbf16>
    %c0 = arith.constant 0 : index
    %c0_1 = arith.constant 0 : index
    %c0_2 = arith.constant 0 : index
    %2 = vector.load %arg1[%c0, %c0_1, %c0_2] : memref<2x16x256xf32, #tpu.memory_space<vmem>>, vector<1x16x256xf32>
    %3 = vector.shape_cast %2 : vector<1x16x256xf32> to vector<16x256xf32>
    %4 = arith.truncf %3 : vector<16x256xf32> to vector<16x256xbf16>
    %c1 = arith.constant 1 : index
    %c0_3 = arith.constant 0 : index
    %c0_4 = arith.constant 0 : index
    %5 = vector.load %arg1[%c1, %c0_3, %c0_4] : memref<2x16x256xf32, #tpu.memory_space<vmem>>, vector<1x16x256xf32>
    %6 = vector.shape_cast %5 : vector<1x16x256xf32> to vector<16x256xf32>
    %7 = arith.truncf %6 : vector<16x256xf32> to vector<16x256xbf16>
    %8 = tpu.concatenate %0, %4, %1, %0, %7, %1 in 0 : vector<1x256xbf16>, vector<16x256xbf16>, vector<7x256xbf16>, vector<1x256xbf16>, vector<16x256xbf16>, vector<7x256xbf16> -> vector<48x256xbf16>
    %9 = tpu.iota {dimensions = array<i32: 0>} : vector<48x128xi32>
    %c1_i32 = arith.constant 1 : i32
    %10 = vector.broadcast %c1_i32 : i32 to vector<48x128xi32>
    %11 = arith.cmpi sge, %9, %10 : vector<48x128xi32>
    %c17_i32 = arith.constant 17 : i32
    %12 = vector.broadcast %c17_i32 : i32 to vector<48x128xi32>
    %13 = arith.cmpi slt, %9, %12 : vector<48x128xi32>
    %14 = arith.andi %11, %13 : vector<48x128xi1>
    %c25_i32 = arith.constant 25 : i32
    %15 = vector.broadcast %c25_i32 : i32 to vector<48x128xi32>
    %16 = arith.cmpi sge, %9, %15 : vector<48x128xi32>
    %c41_i32 = arith.constant 41 : i32
    %17 = vector.broadcast %c41_i32 : i32 to vector<48x128xi32>
    %18 = arith.cmpi slt, %9, %17 : vector<48x128xi32>
    %19 = arith.andi %16, %18 : vector<48x128xi1>
    %20 = arith.ori %14, %19 : vector<48x128xi1>
    %c0_5 = arith.constant 0 : index
    %c0_6 = arith.constant 0 : index
    %21 = vector.load %arg2[%c0_5, %c0_6] : memref<256x128xbf16, #tpu.memory_space<vmem>>, vector<256x128xbf16>
    %cst_7 = arith.constant dense<0.000000e+00> : vector<48x128xf32>
    %22 = tpu.matmul %8, %21, %cst_7 {dimension_numbers = #tpu.dot_dimension_numbers<[1], [0], [0], [1], [0, 0, 1, 1], [], []>} : vector<48x256xbf16>, vector<256x128xbf16>, vector<48x128xf32> -> vector<48x128xf32>
    %c0_8 = arith.constant 0 : index
    %c0_9 = arith.constant 0 : index
    %23 = vector.load %arg3[%c0_8, %c0_9] : memref<1x128xf32, #tpu.memory_space<vmem>>, vector<1x128xf32>
    %24 = vector.broadcast %23 : vector<1x128xf32> to vector<48x128xf32>
    %25 = arith.addf %22, %24 : vector<48x128xf32>
    %cst_10 = arith.constant 1.000000e-01 : f32
    %26 = vector.broadcast %cst_10 : f32 to vector<48x128xf32>
    %27 = arith.mulf %26, %25 : vector<48x128xf32>
    %28 = arith.maximumf %25, %27 : vector<48x128xf32>
    %cst_11 = arith.constant 0.000000e+00 : f32
    %29 = vector.broadcast %cst_11 : f32 to vector<48x128xf32>
    %30 = arith.select %20, %28, %29 : vector<48x128xi1>, vector<48x128xf32>
    %31 = arith.truncf %30 : vector<48x128xf32> to vector<48x128xbf16>
    %cst_12 = arith.constant 0.000000e+00 : bf16
    %32 = vector.broadcast %cst_12 : bf16 to vector<1x128xbf16>
    %c0_i32 = arith.constant 0 : i32
    %33 = arith.index_cast %c0_i32 : i32 to index
    %c0_13 = arith.constant 0 : index
    %c0_14 = arith.constant 0 : index
    %34 = vector.load %arg4[%33, %c0_13, %c0_14] : memref<2x128x128xbf16, #tpu.memory_space<vmem>>, vector<1x128x128xbf16>
    %35 = vector.shape_cast %34 : vector<1x128x128xbf16> to vector<128x128xbf16>
    %cst_15 = arith.constant dense<0.000000e+00> : vector<48x128xf32>
    %36 = tpu.matmul %31, %35, %cst_15 {dimension_numbers = #tpu.dot_dimension_numbers<[1], [0], [0], [1], [0, 0, 1, 1], [], []>} : vector<48x128xbf16>, vector<128x128xbf16>, vector<48x128xf32> -> vector<48x128xf32>
    %37 = arith.index_cast %c0_i32 : i32 to index
    %c0_16 = arith.constant 0 : index
    %c0_17 = arith.constant 0 : index
    %38 = vector.load %arg5[%37, %c0_16, %c0_17] : memref<2x1x128xf32, #tpu.memory_space<vmem>>, vector<1x1x128xf32>
    %39 = vector.shape_cast %38 : vector<1x1x128xf32> to vector<1x128xf32>
    %40 = vector.broadcast %39 : vector<1x128xf32> to vector<48x128xf32>
    %41 = arith.addf %36, %40 : vector<48x128xf32>
    %cst_18 = arith.constant 1.000000e-01 : f32
    %42 = vector.broadcast %cst_18 : f32 to vector<48x128xf32>
    %43 = arith.mulf %42, %41 : vector<48x128xf32>
    %44 = arith.maximumf %41, %43 : vector<48x128xf32>
    %cst_19 = arith.constant 0.000000e+00 : f32
    %45 = vector.broadcast %cst_19 : f32 to vector<48x128xf32>
    %46 = arith.select %20, %44, %45 : vector<48x128xi1>, vector<48x128xf32>
    %47 = arith.truncf %46 : vector<48x128xf32> to vector<48x128xbf16>
    %48 = vector.extract_strided_slice %47 {offsets = [0, 0], sizes = [47, 128], strides = [1, 1]} : vector<48x128xbf16> to vector<47x128xbf16>
    %49 = tpu.concatenate %32, %48 in 0 : vector<1x128xbf16>, vector<47x128xbf16> -> vector<48x128xbf16>
    %50 = vector.extract_strided_slice %47 {offsets = [1, 0], sizes = [47, 128], strides = [1, 1]} : vector<48x128xbf16> to vector<47x128xbf16>
    %51 = tpu.concatenate %50, %32 in 0 : vector<47x128xbf16>, vector<1x128xbf16> -> vector<48x128xbf16>
    %52 = tpu.concatenate %49, %47, %51 in 1 : vector<48x128xbf16>, vector<48x128xbf16>, vector<48x128xbf16> -> vector<48x384xbf16>
    %53 = arith.index_cast %c0_i32 : i32 to index
    %c0_20 = arith.constant 0 : index
    %c0_21 = arith.constant 0 : index
    %54 = vector.load %arg6[%53, %c0_20, %c0_21] : memref<2x384x128xbf16, #tpu.memory_space<vmem>>, vector<1x384x128xbf16>
    %55 = vector.shape_cast %54 : vector<1x384x128xbf16> to vector<384x128xbf16>
    %cst_22 = arith.constant dense<0.000000e+00> : vector<48x128xf32>
    %56 = tpu.matmul %52, %55, %cst_22 {dimension_numbers = #tpu.dot_dimension_numbers<[1], [0], [0], [1], [0, 0, 1, 1], [], []>} : vector<48x384xbf16>, vector<384x128xbf16>, vector<48x128xf32> -> vector<48x128xf32>
    %57 = arith.index_cast %c0_i32 : i32 to index
    %c0_23 = arith.constant 0 : index
    %c0_24 = arith.constant 0 : index
    %58 = vector.load %arg7[%57, %c0_23, %c0_24] : memref<2x1x128xf32, #tpu.memory_space<vmem>>, vector<1x1x128xf32>
    %59 = vector.shape_cast %58 : vector<1x1x128xf32> to vector<1x128xf32>
    %60 = vector.broadcast %59 : vector<1x128xf32> to vector<48x128xf32>
    %61 = arith.addf %56, %60 : vector<48x128xf32>
    %cst_25 = arith.constant 1.000000e-01 : f32
    %62 = vector.broadcast %cst_25 : f32 to vector<48x128xf32>
    %63 = arith.mulf %62, %61 : vector<48x128xf32>
    %64 = arith.maximumf %61, %63 : vector<48x128xf32>
    %cst_26 = arith.constant 0.000000e+00 : f32
    %65 = vector.broadcast %cst_26 : f32 to vector<48x128xf32>
    %66 = arith.select %20, %64, %65 : vector<48x128xi1>, vector<48x128xf32>
    %67 = arith.extf %31 : vector<48x128xbf16> to vector<48x128xf32>
    %68 = arith.addf %67, %66 : vector<48x128xf32>
    %69 = arith.truncf %68 : vector<48x128xf32> to vector<48x128xbf16>
    %c1_i32_27 = arith.constant 1 : i32
    %70 = arith.index_cast %c1_i32_27 : i32 to index
    %c0_28 = arith.constant 0 : index
    %c0_29 = arith.constant 0 : index
    %71 = vector.load %arg4[%70, %c0_28, %c0_29] : memref<2x128x128xbf16, #tpu.memory_space<vmem>>, vector<1x128x128xbf16>
    %72 = vector.shape_cast %71 : vector<1x128x128xbf16> to vector<128x128xbf16>
    %cst_30 = arith.constant dense<0.000000e+00> : vector<48x128xf32>
    %73 = tpu.matmul %69, %72, %cst_30 {dimension_numbers = #tpu.dot_dimension_numbers<[1], [0], [0], [1], [0, 0, 1, 1], [], []>} : vector<48x128xbf16>, vector<128x128xbf16>, vector<48x128xf32> -> vector<48x128xf32>
    %74 = arith.index_cast %c1_i32_27 : i32 to index
    %c0_31 = arith.constant 0 : index
    %c0_32 = arith.constant 0 : index
    %75 = vector.load %arg5[%74, %c0_31, %c0_32] : memref<2x1x128xf32, #tpu.memory_space<vmem>>, vector<1x1x128xf32>
    %76 = vector.shape_cast %75 : vector<1x1x128xf32> to vector<1x128xf32>
    %77 = vector.broadcast %76 : vector<1x128xf32> to vector<48x128xf32>
    %78 = arith.addf %73, %77 : vector<48x128xf32>
    %cst_33 = arith.constant 1.000000e-01 : f32
    %79 = vector.broadcast %cst_33 : f32 to vector<48x128xf32>
    %80 = arith.mulf %79, %78 : vector<48x128xf32>
    %81 = arith.maximumf %78, %80 : vector<48x128xf32>
    %cst_34 = arith.constant 0.000000e+00 : f32
    %82 = vector.broadcast %cst_34 : f32 to vector<48x128xf32>
    %83 = arith.select %20, %81, %82 : vector<48x128xi1>, vector<48x128xf32>
    %84 = arith.truncf %83 : vector<48x128xf32> to vector<48x128xbf16>
    %85 = vector.extract_strided_slice %84 {offsets = [0, 0], sizes = [47, 128], strides = [1, 1]} : vector<48x128xbf16> to vector<47x128xbf16>
    %86 = tpu.concatenate %32, %85 in 0 : vector<1x128xbf16>, vector<47x128xbf16> -> vector<48x128xbf16>
    %87 = vector.extract_strided_slice %84 {offsets = [1, 0], sizes = [47, 128], strides = [1, 1]} : vector<48x128xbf16> to vector<47x128xbf16>
    %88 = tpu.concatenate %87, %32 in 0 : vector<47x128xbf16>, vector<1x128xbf16> -> vector<48x128xbf16>
    %89 = tpu.concatenate %86, %84, %88 in 1 : vector<48x128xbf16>, vector<48x128xbf16>, vector<48x128xbf16> -> vector<48x384xbf16>
    %90 = arith.index_cast %c1_i32_27 : i32 to index
    %c0_35 = arith.constant 0 : index
    %c0_36 = arith.constant 0 : index
    %91 = vector.load %arg6[%90, %c0_35, %c0_36] : memref<2x384x128xbf16, #tpu.memory_space<vmem>>, vector<1x384x128xbf16>
    %92 = vector.shape_cast %91 : vector<1x384x128xbf16> to vector<384x128xbf16>
    %cst_37 = arith.constant dense<0.000000e+00> : vector<48x128xf32>
    %93 = tpu.matmul %89, %92, %cst_37 {dimension_numbers = #tpu.dot_dimension_numbers<[1], [0], [0], [1], [0, 0, 1, 1], [], []>} : vector<48x384xbf16>, vector<384x128xbf16>, vector<48x128xf32> -> vector<48x128xf32>
    %94 = arith.index_cast %c1_i32_27 : i32 to index
    %c0_38 = arith.constant 0 : index
    %c0_39 = arith.constant 0 : index
    %95 = vector.load %arg7[%94, %c0_38, %c0_39] : memref<2x1x128xf32, #tpu.memory_space<vmem>>, vector<1x1x128xf32>
    %96 = vector.shape_cast %95 : vector<1x1x128xf32> to vector<1x128xf32>
    %97 = vector.broadcast %96 : vector<1x128xf32> to vector<48x128xf32>
    %98 = arith.addf %93, %97 : vector<48x128xf32>
    %cst_40 = arith.constant 1.000000e-01 : f32
    %99 = vector.broadcast %cst_40 : f32 to vector<48x128xf32>
    %100 = arith.mulf %99, %98 : vector<48x128xf32>
    %101 = arith.maximumf %98, %100 : vector<48x128xf32>
    %cst_41 = arith.constant 0.000000e+00 : f32
    %102 = vector.broadcast %cst_41 : f32 to vector<48x128xf32>
    %103 = arith.select %20, %101, %102 : vector<48x128xi1>, vector<48x128xf32>
    %104 = arith.extf %69 : vector<48x128xbf16> to vector<48x128xf32>
    %105 = arith.addf %104, %103 : vector<48x128xf32>
    %106 = arith.truncf %105 : vector<48x128xf32> to vector<48x128xbf16>
    %c2_i32 = arith.constant 2 : i32
    %c0_42 = arith.constant 0 : index
    %c0_43 = arith.constant 0 : index
    %107 = vector.load %arg8[%c0_42, %c0_43] : memref<128x128xbf16, #tpu.memory_space<vmem>>, vector<128x128xbf16>
    %cst_44 = arith.constant dense<0.000000e+00> : vector<48x128xf32>
    %108 = tpu.matmul %106, %107, %cst_44 {dimension_numbers = #tpu.dot_dimension_numbers<[1], [0], [0], [1], [0, 0, 1, 1], [], []>} : vector<48x128xbf16>, vector<128x128xbf16>, vector<48x128xf32> -> vector<48x128xf32>
    %c0_45 = arith.constant 0 : index
    %c0_46 = arith.constant 0 : index
    %109 = vector.load %arg9[%c0_45, %c0_46] : memref<1x128xf32, #tpu.memory_space<vmem>>, vector<1x128xf32>
    %110 = vector.broadcast %109 : vector<1x128xf32> to vector<48x128xf32>
    %111 = arith.addf %108, %110 : vector<48x128xf32>
    %cst_47 = arith.constant 1.000000e-01 : f32
    %112 = vector.broadcast %cst_47 : f32 to vector<48x128xf32>
    %113 = arith.mulf %112, %111 : vector<48x128xf32>
    %114 = arith.maximumf %111, %113 : vector<48x128xf32>
    %115 = arith.truncf %114 : vector<48x128xf32> to vector<48x128xbf16>
    %c0_48 = arith.constant 0 : index
    %c0_49 = arith.constant 0 : index
    %116 = vector.load %arg10[%c0_48, %c0_49] : memref<256x128xbf16, #tpu.memory_space<vmem>>, vector<256x128xbf16>
    %cst_50 = arith.constant dense<0.000000e+00> : vector<48x128xf32>
    %117 = tpu.matmul %8, %116, %cst_50 {dimension_numbers = #tpu.dot_dimension_numbers<[1], [0], [0], [1], [0, 0, 1, 1], [], []>} : vector<48x256xbf16>, vector<256x128xbf16>, vector<48x128xf32> -> vector<48x128xf32>
    %c0_51 = arith.constant 0 : index
    %c0_52 = arith.constant 0 : index
    %118 = vector.load %arg11[%c0_51, %c0_52] : memref<1x128xf32, #tpu.memory_space<vmem>>, vector<1x128xf32>
    %119 = vector.broadcast %118 : vector<1x128xf32> to vector<48x128xf32>
    %120 = arith.addf %117, %119 : vector<48x128xf32>
    %cst_53 = arith.constant 1.000000e-01 : f32
    %121 = vector.broadcast %cst_53 : f32 to vector<48x128xf32>
    %122 = arith.mulf %121, %120 : vector<48x128xf32>
    %123 = arith.maximumf %120, %122 : vector<48x128xf32>
    %124 = arith.truncf %123 : vector<48x128xf32> to vector<48x128xbf16>
    %c0_54 = arith.constant 0 : index
    %c0_55 = arith.constant 0 : index
    %125 = vector.load %arg12[%c0_54, %c0_55] : memref<128x256xbf16, #tpu.memory_space<vmem>>, vector<128x256xbf16>
    %cst_56 = arith.constant dense<0.000000e+00> : vector<48x256xf32>
    %126 = tpu.matmul %115, %125, %cst_56 {dimension_numbers = #tpu.dot_dimension_numbers<[1], [0], [0], [1], [0, 0, 1, 1], [], []>} : vector<48x128xbf16>, vector<128x256xbf16>, vector<48x256xf32> -> vector<48x256xf32>
    %c0_57 = arith.constant 0 : index
    %c0_58 = arith.constant 0 : index
    %127 = vector.load %arg13[%c0_57, %c0_58] : memref<128x256xbf16, #tpu.memory_space<vmem>>, vector<128x256xbf16>
    %cst_59 = arith.constant dense<0.000000e+00> : vector<48x256xf32>
    %128 = tpu.matmul %124, %127, %cst_59 {dimension_numbers = #tpu.dot_dimension_numbers<[1], [0], [0], [1], [0, 0, 1, 1], [], []>} : vector<48x128xbf16>, vector<128x256xbf16>, vector<48x256xf32> -> vector<48x256xf32>
    %129 = arith.addf %126, %128 : vector<48x256xf32>
    %c0_60 = arith.constant 0 : index
    %c0_61 = arith.constant 0 : index
    %130 = vector.load %arg14[%c0_60, %c0_61] : memref<1x256xf32, #tpu.memory_space<vmem>>, vector<1x256xf32>
    %131 = vector.broadcast %130 : vector<1x256xf32> to vector<48x256xf32>
    %132 = arith.addf %129, %131 : vector<48x256xf32>
    %cst_62 = arith.constant 1.000000e-01 : f32
    %133 = vector.broadcast %cst_62 : f32 to vector<48x256xf32>
    %134 = arith.mulf %133, %132 : vector<48x256xf32>
    %135 = arith.maximumf %132, %134 : vector<48x256xf32>
    %136 = arith.truncf %135 : vector<48x256xf32> to vector<48x256xbf16>
    %137 = vector.extract_strided_slice %136 {offsets = [1, 0], sizes = [16, 256], strides = [1, 1]} : vector<48x256xbf16> to vector<16x256xbf16>
    %c0_63 = arith.constant 0 : index
    %c0_64 = arith.constant 0 : index
    %c0_65 = arith.constant 0 : index
    %138 = vector.load %arg15[%c0_63, %c0_64, %c0_65] : memref<2x16x256xbf16, #tpu.memory_space<vmem>>, vector<1x16x256xbf16>
    %139 = vector.shape_cast %138 : vector<1x16x256xbf16> to vector<16x256xbf16>
    %140 = vector.shape_cast %137 : vector<16x256xbf16> to vector<1x16x256xbf16>
    tpu.vector_store %arg15[%c0_63, %c0_64, %c0_65], %140 {strides = array<i32>} : memref<2x16x256xbf16, #tpu.memory_space<vmem>>, vector<1x16x256xbf16>,
    %141 = vector.extract_strided_slice %136 {offsets = [25, 0], sizes = [16, 256], strides = [1, 1]} : vector<48x256xbf16> to vector<16x256xbf16>
    %c1_66 = arith.constant 1 : index
    %c0_67 = arith.constant 0 : index
    %c0_68 = arith.constant 0 : index
    %142 = vector.load %arg15[%c1_66, %c0_67, %c0_68] : memref<2x16x256xbf16, #tpu.memory_space<vmem>>, vector<1x16x256xbf16>
    %143 = vector.shape_cast %142 : vector<1x16x256xbf16> to vector<16x256xbf16>
    %144 = vector.shape_cast %141 : vector<16x256xbf16> to vector<1x16x256xbf16>
    tpu.vector_store %arg15[%c1_66, %c0_67, %c0_68], %144 {strides = array<i32>} : memref<2x16x256xbf16, #tpu.memory_space<vmem>>, vector<1x16x256xbf16>,
    return
  }
  func.func @transform_0(%arg0: i32) -> (i32, i32, i32) {
    %c0_i32 = arith.constant 0 : i32
    %c0_i32_0 = arith.constant 0 : i32
    %c0_i32_1 = arith.constant 0 : i32
    return %arg0, %c0_i32, %c0_i32_0 : i32, i32, i32
  }
  func.func @transform_1(%arg0: i32) -> (i32, i32) {
    %c0_i32 = arith.constant 0 : i32
    %c0_i32_0 = arith.constant 0 : i32
    %c0_i32_1 = arith.constant 0 : i32
    return %c0_i32, %c0_i32_0 : i32, i32
  }
  func.func @transform_2(%arg0: i32) -> (i32, i32) {
    %c0_i32 = arith.constant 0 : i32
    %c0_i32_0 = arith.constant 0 : i32
    %c0_i32_1 = arith.constant 0 : i32
    return %c0_i32, %c0_i32_0 : i32, i32
  }
  func.func @transform_3(%arg0: i32) -> (i32, i32, i32) {
    %c0_i32 = arith.constant 0 : i32
    %c0_i32_0 = arith.constant 0 : i32
    %c0_i32_1 = arith.constant 0 : i32
    %c0_i32_2 = arith.constant 0 : i32
    return %c0_i32, %c0_i32_0, %c0_i32_1 : i32, i32, i32
  }
  func.func @transform_4(%arg0: i32) -> (i32, i32, i32) {
    %c0_i32 = arith.constant 0 : i32
    %c0_i32_0 = arith.constant 0 : i32
    %c0_i32_1 = arith.constant 0 : i32
    %c0_i32_2 = arith.constant 0 : i32
    return %c0_i32, %c0_i32_0, %c0_i32_1 : i32, i32, i32
  }
  func.func @transform_5(%arg0: i32) -> (i32, i32, i32) {
    %c0_i32 = arith.constant 0 : i32
    %c0_i32_0 = arith.constant 0 : i32
    %c0_i32_1 = arith.constant 0 : i32
    %c0_i32_2 = arith.constant 0 : i32
    return %c0_i32, %c0_i32_0, %c0_i32_1 : i32, i32, i32
  }
  func.func @transform_6(%arg0: i32) -> (i32, i32, i32) {
    %c0_i32 = arith.constant 0 : i32
    %c0_i32_0 = arith.constant 0 : i32
    %c0_i32_1 = arith.constant 0 : i32
    %c0_i32_2 = arith.constant 0 : i32
    return %c0_i32, %c0_i32_0, %c0_i32_1 : i32, i32, i32
  }
  func.func @transform_7(%arg0: i32) -> (i32, i32) {
    %c0_i32 = arith.constant 0 : i32
    %c0_i32_0 = arith.constant 0 : i32
    %c0_i32_1 = arith.constant 0 : i32
    return %c0_i32, %c0_i32_0 : i32, i32
  }
  func.func @transform_8(%arg0: i32) -> (i32, i32) {
    %c0_i32 = arith.constant 0 : i32
    %c0_i32_0 = arith.constant 0 : i32
    %c0_i32_1 = arith.constant 0 : i32
    return %c0_i32, %c0_i32_0 : i32, i32
  }
  func.func @transform_9(%arg0: i32) -> (i32, i32) {
    %c0_i32 = arith.constant 0 : i32
    %c0_i32_0 = arith.constant 0 : i32
    %c0_i32_1 = arith.constant 0 : i32
    return %c0_i32, %c0_i32_0 : i32, i32
  }
  func.func @transform_10(%arg0: i32) -> (i32, i32) {
    %c0_i32 = arith.constant 0 : i32
    %c0_i32_0 = arith.constant 0 : i32
    %c0_i32_1 = arith.constant 0 : i32
    return %c0_i32, %c0_i32_0 : i32, i32
  }
  func.func @transform_11(%arg0: i32) -> (i32, i32) {
    %c0_i32 = arith.constant 0 : i32
    %c0_i32_0 = arith.constant 0 : i32
    %c0_i32_1 = arith.constant 0 : i32
    return %c0_i32, %c0_i32_0 : i32, i32
  }
  func.func @transform_12(%arg0: i32) -> (i32, i32) {
    %c0_i32 = arith.constant 0 : i32
    %c0_i32_0 = arith.constant 0 : i32
    %c0_i32_1 = arith.constant 0 : i32
    return %c0_i32, %c0_i32_0 : i32, i32
  }
  func.func @transform_13(%arg0: i32) -> (i32, i32) {
    %c0_i32 = arith.constant 0 : i32
    %c0_i32_0 = arith.constant 0 : i32
    %c0_i32_1 = arith.constant 0 : i32
    return %c0_i32, %c0_i32_0 : i32, i32
  }
  func.func @transform_14(%arg0: i32) -> (i32, i32, i32) {
    %c0_i32 = arith.constant 0 : i32
    %c0_i32_0 = arith.constant 0 : i32
    %c0_i32_1 = arith.constant 0 : i32
    return %arg0, %c0_i32, %c0_i32_0 : i32, i32, i32
  }
}

module attributes {stable_mosaic.version = 11 : i64} {
  func.func @_csp_kernel(%arg0: i32, %arg1: memref<2x16x256xf32, #tpu.memory_space<vmem>>, %arg2: memref<256x128xbf16, #tpu.memory_space<vmem>>, %arg3: memref<1x128xf32, #tpu.memory_space<vmem>>, %arg4: memref<2x128x128xbf16, #tpu.memory_space<vmem>>, %arg5: memref<2x1x128xf32, #tpu.memory_space<vmem>>, %arg6: memref<2x384x128xbf16, #tpu.memory_space<vmem>>, %arg7: memref<2x1x128xf32, #tpu.memory_space<vmem>>, %arg8: memref<128x128xbf16, #tpu.memory_space<vmem>>, %arg9: memref<1x128xf32, #tpu.memory_space<vmem>>, %arg10: memref<256x128xbf16, #tpu.memory_space<vmem>>, %arg11: memref<1x128xf32, #tpu.memory_space<vmem>>, %arg12: memref<128x256xbf16, #tpu.memory_space<vmem>>, %arg13: memref<128x256xbf16, #tpu.memory_space<vmem>>, %arg14: memref<1x256xf32, #tpu.memory_space<vmem>>, %arg15: memref<2x16x256xbf16, #tpu.memory_space<vmem>>) attributes {dimension_semantics = [#tpu.dimension_semantics<parallel>], iteration_bounds = array<i64: 1>, scalar_prefetch = 0 : i64, scratch_operands = 0 : i64, tpu.core_type = #tpu.core_type<tc>, window_params = [{transform_indices = @transform_0, window_bounds = array<i64: 2, 16, 256>}, {pipeline_mode = #tpu.pipeline_mode<synchronous>, transform_indices = @transform_1, window_bounds = array<i64: 256, 128>}, {pipeline_mode = #tpu.pipeline_mode<synchronous>, transform_indices = @transform_2, window_bounds = array<i64: 1, 128>}, {pipeline_mode = #tpu.pipeline_mode<synchronous>, transform_indices = @transform_3, window_bounds = array<i64: 2, 128, 128>}, {pipeline_mode = #tpu.pipeline_mode<synchronous>, transform_indices = @transform_4, window_bounds = array<i64: 2, 1, 128>}, {pipeline_mode = #tpu.pipeline_mode<synchronous>, transform_indices = @transform_5, window_bounds = array<i64: 2, 384, 128>}, {pipeline_mode = #tpu.pipeline_mode<synchronous>, transform_indices = @transform_6, window_bounds = array<i64: 2, 1, 128>}, {pipeline_mode = #tpu.pipeline_mode<synchronous>, transform_indices = @transform_7, window_bounds = array<i64: 128, 128>}, {pipeline_mode = #tpu.pipeline_mode<synchronous>, transform_indices = @transform_8, window_bounds = array<i64: 1, 128>}, {pipeline_mode = #tpu.pipeline_mode<synchronous>, transform_indices = @transform_9, window_bounds = array<i64: 256, 128>}, {pipeline_mode = #tpu.pipeline_mode<synchronous>, transform_indices = @transform_10, window_bounds = array<i64: 1, 128>}, {pipeline_mode = #tpu.pipeline_mode<synchronous>, transform_indices = @transform_11, window_bounds = array<i64: 128, 256>}, {pipeline_mode = #tpu.pipeline_mode<synchronous>, transform_indices = @transform_12, window_bounds = array<i64: 128, 256>}, {pipeline_mode = #tpu.pipeline_mode<synchronous>, transform_indices = @transform_13, window_bounds = array<i64: 1, 256>}, {transform_indices = @transform_14, window_bounds = array<i64: 2, 16, 256>}]} {
    %cst = arith.constant 0.000000e+00 : bf16
    %0 = vector.broadcast %cst : bf16 to vector<1x256xbf16>
    %cst_0 = arith.constant 0.000000e+00 : bf16
    %1 = vector.broadcast %cst_0 : bf16 to vector<7x256xbf16>
    %c0 = arith.constant 0 : index
    %c0_1 = arith.constant 0 : index
    %c0_2 = arith.constant 0 : index
    %2 = vector.load %arg1[%c0, %c0_1, %c0_2] : memref<2x16x256xf32, #tpu.memory_space<vmem>>, vector<1x16x256xf32>
    %3 = vector.shape_cast %2 : vector<1x16x256xf32> to vector<16x256xf32>
    %4 = arith.truncf %3 : vector<16x256xf32> to vector<16x256xbf16>
    %c1 = arith.constant 1 : index
    %c0_3 = arith.constant 0 : index
    %c0_4 = arith.constant 0 : index
    %5 = vector.load %arg1[%c1, %c0_3, %c0_4] : memref<2x16x256xf32, #tpu.memory_space<vmem>>, vector<1x16x256xf32>
    %6 = vector.shape_cast %5 : vector<1x16x256xf32> to vector<16x256xf32>
    %7 = arith.truncf %6 : vector<16x256xf32> to vector<16x256xbf16>
    %8 = tpu.concatenate %0, %4, %1, %0, %7, %1 in 0 : vector<1x256xbf16>, vector<16x256xbf16>, vector<7x256xbf16>, vector<1x256xbf16>, vector<16x256xbf16>, vector<7x256xbf16> -> vector<48x256xbf16>
    %9 = tpu.iota {dimensions = array<i32: 0>} : vector<48x128xi32>
    %c1_i32 = arith.constant 1 : i32
    %10 = vector.broadcast %c1_i32 : i32 to vector<48x128xi32>
    %11 = arith.cmpi sge, %9, %10 : vector<48x128xi32>
    %c17_i32 = arith.constant 17 : i32
    %12 = vector.broadcast %c17_i32 : i32 to vector<48x128xi32>
    %13 = arith.cmpi slt, %9, %12 : vector<48x128xi32>
    %14 = arith.andi %11, %13 : vector<48x128xi1>
    %c25_i32 = arith.constant 25 : i32
    %15 = vector.broadcast %c25_i32 : i32 to vector<48x128xi32>
    %16 = arith.cmpi sge, %9, %15 : vector<48x128xi32>
    %c41_i32 = arith.constant 41 : i32
    %17 = vector.broadcast %c41_i32 : i32 to vector<48x128xi32>
    %18 = arith.cmpi slt, %9, %17 : vector<48x128xi32>
    %19 = arith.andi %16, %18 : vector<48x128xi1>
    %20 = arith.ori %14, %19 : vector<48x128xi1>
    %c0_5 = arith.constant 0 : index
    %c0_6 = arith.constant 0 : index
    %21 = vector.load %arg2[%c0_5, %c0_6] : memref<256x128xbf16, #tpu.memory_space<vmem>>, vector<256x128xbf16>
    %cst_7 = arith.constant dense<0.000000e+00> : vector<48x128xf32>
    %22 = tpu.matmul %8, %21, %cst_7 {dimension_numbers = #tpu.dot_dimension_numbers<[1], [0], [0], [1], [0, 0, 1, 1], [], []>} : vector<48x256xbf16>, vector<256x128xbf16>, vector<48x128xf32> -> vector<48x128xf32>
    %c0_8 = arith.constant 0 : index
    %c0_9 = arith.constant 0 : index
    %23 = vector.load %arg3[%c0_8, %c0_9] : memref<1x128xf32, #tpu.memory_space<vmem>>, vector<1x128xf32>
    %24 = vector.broadcast %23 : vector<1x128xf32> to vector<48x128xf32>
    %25 = arith.addf %22, %24 : vector<48x128xf32>
    %cst_10 = arith.constant 1.000000e-01 : f32
    %26 = vector.broadcast %cst_10 : f32 to vector<48x128xf32>
    %27 = arith.mulf %26, %25 : vector<48x128xf32>
    %28 = arith.maximumf %25, %27 : vector<48x128xf32>
    %cst_11 = arith.constant 0.000000e+00 : f32
    %29 = vector.broadcast %cst_11 : f32 to vector<48x128xf32>
    %30 = arith.select %20, %28, %29 : vector<48x128xi1>, vector<48x128xf32>
    %31 = arith.truncf %30 : vector<48x128xf32> to vector<48x128xbf16>
    %cst_12 = arith.constant 0.000000e+00 : bf16
    %32 = vector.broadcast %cst_12 : bf16 to vector<1x128xbf16>
    %c0_i32 = arith.constant 0 : i32
    %33 = arith.index_cast %c0_i32 : i32 to index
    %c0_13 = arith.constant 0 : index
    %c0_14 = arith.constant 0 : index
    %34 = vector.load %arg4[%33, %c0_13, %c0_14] : memref<2x128x128xbf16, #tpu.memory_space<vmem>>, vector<1x128x128xbf16>
    %35 = vector.shape_cast %34 : vector<1x128x128xbf16> to vector<128x128xbf16>
    %cst_15 = arith.constant dense<0.000000e+00> : vector<48x128xf32>
    %36 = tpu.matmul %31, %35, %cst_15 {dimension_numbers = #tpu.dot_dimension_numbers<[1], [0], [0], [1], [0, 0, 1, 1], [], []>} : vector<48x128xbf16>, vector<128x128xbf16>, vector<48x128xf32> -> vector<48x128xf32>
    %37 = arith.index_cast %c0_i32 : i32 to index
    %c0_16 = arith.constant 0 : index
    %c0_17 = arith.constant 0 : index
    %38 = vector.load %arg5[%37, %c0_16, %c0_17] : memref<2x1x128xf32, #tpu.memory_space<vmem>>, vector<1x1x128xf32>
    %39 = vector.shape_cast %38 : vector<1x1x128xf32> to vector<1x128xf32>
    %40 = vector.broadcast %39 : vector<1x128xf32> to vector<48x128xf32>
    %41 = arith.addf %36, %40 : vector<48x128xf32>
    %cst_18 = arith.constant 1.000000e-01 : f32
    %42 = vector.broadcast %cst_18 : f32 to vector<48x128xf32>
    %43 = arith.mulf %42, %41 : vector<48x128xf32>
    %44 = arith.maximumf %41, %43 : vector<48x128xf32>
    %cst_19 = arith.constant 0.000000e+00 : f32
    %45 = vector.broadcast %cst_19 : f32 to vector<48x128xf32>
    %46 = arith.select %20, %44, %45 : vector<48x128xi1>, vector<48x128xf32>
    %47 = arith.truncf %46 : vector<48x128xf32> to vector<48x128xbf16>
    %48 = vector.extract_strided_slice %47 {offsets = [0, 0], sizes = [47, 128], strides = [1, 1]} : vector<48x128xbf16> to vector<47x128xbf16>
    %49 = tpu.concatenate %32, %48 in 0 : vector<1x128xbf16>, vector<47x128xbf16> -> vector<48x128xbf16>
    %50 = vector.extract_strided_slice %47 {offsets = [1, 0], sizes = [47, 128], strides = [1, 1]} : vector<48x128xbf16> to vector<47x128xbf16>
    %51 = tpu.concatenate %50, %32 in 0 : vector<47x128xbf16>, vector<1x128xbf16> -> vector<48x128xbf16>
    %52 = tpu.concatenate %49, %47, %51 in 1 : vector<48x128xbf16>, vector<48x128xbf16>, vector<48x128xbf16> -> vector<48x384xbf16>
    %53 = arith.index_cast %c0_i32 : i32 to index
    %c0_20 = arith.constant 0 : index
    %c0_21 = arith.constant 0 : index
    %54 = vector.load %arg6[%53, %c0_20, %c0_21] : memref<2x384x128xbf16, #tpu.memory_space<vmem>>, vector<1x384x128xbf16>
    %55 = vector.shape_cast %54 : vector<1x384x128xbf16> to vector<384x128xbf16>
    %cst_22 = arith.constant dense<0.000000e+00> : vector<48x128xf32>
    %56 = tpu.matmul %52, %55, %cst_22 {dimension_numbers = #tpu.dot_dimension_numbers<[1], [0], [0], [1], [0, 0, 1, 1], [], []>} : vector<48x384xbf16>, vector<384x128xbf16>, vector<48x128xf32> -> vector<48x128xf32>
    %57 = arith.index_cast %c0_i32 : i32 to index
    %c0_23 = arith.constant 0 : index
    %c0_24 = arith.constant 0 : index
    %58 = vector.load %arg7[%57, %c0_23, %c0_24] : memref<2x1x128xf32, #tpu.memory_space<vmem>>, vector<1x1x128xf32>
    %59 = vector.shape_cast %58 : vector<1x1x128xf32> to vector<1x128xf32>
    %60 = vector.broadcast %59 : vector<1x128xf32> to vector<48x128xf32>
    %61 = arith.addf %56, %60 : vector<48x128xf32>
    %cst_25 = arith.constant 1.000000e-01 : f32
    %62 = vector.broadcast %cst_25 : f32 to vector<48x128xf32>
    %63 = arith.mulf %62, %61 : vector<48x128xf32>
    %64 = arith.maximumf %61, %63 : vector<48x128xf32>
    %cst_26 = arith.constant 0.000000e+00 : f32
    %65 = vector.broadcast %cst_26 : f32 to vector<48x128xf32>
    %66 = arith.select %20, %64, %65 : vector<48x128xi1>, vector<48x128xf32>
    %67 = arith.extf %31 : vector<48x128xbf16> to vector<48x128xf32>
    %68 = arith.addf %67, %66 : vector<48x128xf32>
    %69 = arith.truncf %68 : vector<48x128xf32> to vector<48x128xbf16>
    %c1_i32_27 = arith.constant 1 : i32
    %70 = arith.index_cast %c1_i32_27 : i32 to index
    %c0_28 = arith.constant 0 : index
    %c0_29 = arith.constant 0 : index
    %71 = vector.load %arg4[%70, %c0_28, %c0_29] : memref<2x128x128xbf16, #tpu.memory_space<vmem>>, vector<1x128x128xbf16>
    %72 = vector.shape_cast %71 : vector<1x128x128xbf16> to vector<128x128xbf16>
    %cst_30 = arith.constant dense<0.000000e+00> : vector<48x128xf32>
    %73 = tpu.matmul %69, %72, %cst_30 {dimension_numbers = #tpu.dot_dimension_numbers<[1], [0], [0], [1], [0, 0, 1, 1], [], []>} : vector<48x128xbf16>, vector<128x128xbf16>, vector<48x128xf32> -> vector<48x128xf32>
    %74 = arith.index_cast %c1_i32_27 : i32 to index
    %c0_31 = arith.constant 0 : index
    %c0_32 = arith.constant 0 : index
    %75 = vector.load %arg5[%74, %c0_31, %c0_32] : memref<2x1x128xf32, #tpu.memory_space<vmem>>, vector<1x1x128xf32>
    %76 = vector.shape_cast %75 : vector<1x1x128xf32> to vector<1x128xf32>
    %77 = vector.broadcast %76 : vector<1x128xf32> to vector<48x128xf32>
    %78 = arith.addf %73, %77 : vector<48x128xf32>
    %cst_33 = arith.constant 1.000000e-01 : f32
    %79 = vector.broadcast %cst_33 : f32 to vector<48x128xf32>
    %80 = arith.mulf %79, %78 : vector<48x128xf32>
    %81 = arith.maximumf %78, %80 : vector<48x128xf32>
    %cst_34 = arith.constant 0.000000e+00 : f32
    %82 = vector.broadcast %cst_34 : f32 to vector<48x128xf32>
    %83 = arith.select %20, %81, %82 : vector<48x128xi1>, vector<48x128xf32>
    %84 = arith.truncf %83 : vector<48x128xf32> to vector<48x128xbf16>
    %85 = vector.extract_strided_slice %84 {offsets = [0, 0], sizes = [47, 128], strides = [1, 1]} : vector<48x128xbf16> to vector<47x128xbf16>
    %86 = tpu.concatenate %32, %85 in 0 : vector<1x128xbf16>, vector<47x128xbf16> -> vector<48x128xbf16>
    %87 = vector.extract_strided_slice %84 {offsets = [1, 0], sizes = [47, 128], strides = [1, 1]} : vector<48x128xbf16> to vector<47x128xbf16>
    %88 = tpu.concatenate %87, %32 in 0 : vector<47x128xbf16>, vector<1x128xbf16> -> vector<48x128xbf16>
    %89 = tpu.concatenate %86, %84, %88 in 1 : vector<48x128xbf16>, vector<48x128xbf16>, vector<48x128xbf16> -> vector<48x384xbf16>
    %90 = arith.index_cast %c1_i32_27 : i32 to index
    %c0_35 = arith.constant 0 : index
    %c0_36 = arith.constant 0 : index
    %91 = vector.load %arg6[%90, %c0_35, %c0_36] : memref<2x384x128xbf16, #tpu.memory_space<vmem>>, vector<1x384x128xbf16>
    %92 = vector.shape_cast %91 : vector<1x384x128xbf16> to vector<384x128xbf16>
    %cst_37 = arith.constant dense<0.000000e+00> : vector<48x128xf32>
    %93 = tpu.matmul %89, %92, %cst_37 {dimension_numbers = #tpu.dot_dimension_numbers<[1], [0], [0], [1], [0, 0, 1, 1], [], []>} : vector<48x384xbf16>, vector<384x128xbf16>, vector<48x128xf32> -> vector<48x128xf32>
    %94 = arith.index_cast %c1_i32_27 : i32 to index
    %c0_38 = arith.constant 0 : index
    %c0_39 = arith.constant 0 : index
    %95 = vector.load %arg7[%94, %c0_38, %c0_39] : memref<2x1x128xf32, #tpu.memory_space<vmem>>, vector<1x1x128xf32>
    %96 = vector.shape_cast %95 : vector<1x1x128xf32> to vector<1x128xf32>
    %97 = vector.broadcast %96 : vector<1x128xf32> to vector<48x128xf32>
    %98 = arith.addf %93, %97 : vector<48x128xf32>
    %cst_40 = arith.constant 1.000000e-01 : f32
    %99 = vector.broadcast %cst_40 : f32 to vector<48x128xf32>
    %100 = arith.mulf %99, %98 : vector<48x128xf32>
    %101 = arith.maximumf %98, %100 : vector<48x128xf32>
    %cst_41 = arith.constant 0.000000e+00 : f32
    %102 = vector.broadcast %cst_41 : f32 to vector<48x128xf32>
    %103 = arith.select %20, %101, %102 : vector<48x128xi1>, vector<48x128xf32>
    %104 = arith.extf %69 : vector<48x128xbf16> to vector<48x128xf32>
    %105 = arith.addf %104, %103 : vector<48x128xf32>
    %106 = arith.truncf %105 : vector<48x128xf32> to vector<48x128xbf16>
    %c2_i32 = arith.constant 2 : i32
    %c0_42 = arith.constant 0 : index
    %c0_43 = arith.constant 0 : index
    %107 = vector.load %arg8[%c0_42, %c0_43] : memref<128x128xbf16, #tpu.memory_space<vmem>>, vector<128x128xbf16>
    %cst_44 = arith.constant dense<0.000000e+00> : vector<48x128xf32>
    %108 = tpu.matmul %106, %107, %cst_44 {dimension_numbers = #tpu.dot_dimension_numbers<[1], [0], [0], [1], [0, 0, 1, 1], [], []>} : vector<48x128xbf16>, vector<128x128xbf16>, vector<48x128xf32> -> vector<48x128xf32>
    %c0_45 = arith.constant 0 : index
    %c0_46 = arith.constant 0 : index
    %109 = vector.load %arg9[%c0_45, %c0_46] : memref<1x128xf32, #tpu.memory_space<vmem>>, vector<1x128xf32>
    %110 = vector.broadcast %109 : vector<1x128xf32> to vector<48x128xf32>
    %111 = arith.addf %108, %110 : vector<48x128xf32>
    %cst_47 = arith.constant 1.000000e-01 : f32
    %112 = vector.broadcast %cst_47 : f32 to vector<48x128xf32>
    %113 = arith.mulf %112, %111 : vector<48x128xf32>
    %114 = arith.maximumf %111, %113 : vector<48x128xf32>
    %115 = arith.truncf %114 : vector<48x128xf32> to vector<48x128xbf16>
    %c0_48 = arith.constant 0 : index
    %c0_49 = arith.constant 0 : index
    %116 = vector.load %arg10[%c0_48, %c0_49] : memref<256x128xbf16, #tpu.memory_space<vmem>>, vector<256x128xbf16>
    %cst_50 = arith.constant dense<0.000000e+00> : vector<48x128xf32>
    %117 = tpu.matmul %8, %116, %cst_50 {dimension_numbers = #tpu.dot_dimension_numbers<[1], [0], [0], [1], [0, 0, 1, 1], [], []>} : vector<48x256xbf16>, vector<256x128xbf16>, vector<48x128xf32> -> vector<48x128xf32>
    %c0_51 = arith.constant 0 : index
    %c0_52 = arith.constant 0 : index
    %118 = vector.load %arg11[%c0_51, %c0_52] : memref<1x128xf32, #tpu.memory_space<vmem>>, vector<1x128xf32>
    %119 = vector.broadcast %118 : vector<1x128xf32> to vector<48x128xf32>
    %120 = arith.addf %117, %119 : vector<48x128xf32>
    %cst_53 = arith.constant 1.000000e-01 : f32
    %121 = vector.broadcast %cst_53 : f32 to vector<48x128xf32>
    %122 = arith.mulf %121, %120 : vector<48x128xf32>
    %123 = arith.maximumf %120, %122 : vector<48x128xf32>
    %124 = arith.truncf %123 : vector<48x128xf32> to vector<48x128xbf16>
    %c0_54 = arith.constant 0 : index
    %c0_55 = arith.constant 0 : index
    %125 = vector.load %arg12[%c0_54, %c0_55] : memref<128x256xbf16, #tpu.memory_space<vmem>>, vector<128x256xbf16>
    %cst_56 = arith.constant dense<0.000000e+00> : vector<48x256xf32>
    %126 = tpu.matmul %115, %125, %cst_56 {dimension_numbers = #tpu.dot_dimension_numbers<[1], [0], [0], [1], [0, 0, 1, 1], [], []>} : vector<48x128xbf16>, vector<128x256xbf16>, vector<48x256xf32> -> vector<48x256xf32>
    %c0_57 = arith.constant 0 : index
    %c0_58 = arith.constant 0 : index
    %127 = vector.load %arg13[%c0_57, %c0_58] : memref<128x256xbf16, #tpu.memory_space<vmem>>, vector<128x256xbf16>
    %cst_59 = arith.constant dense<0.000000e+00> : vector<48x256xf32>
    %128 = tpu.matmul %124, %127, %cst_59 {dimension_numbers = #tpu.dot_dimension_numbers<[1], [0], [0], [1], [0, 0, 1, 1], [], []>} : vector<48x128xbf16>, vector<128x256xbf16>, vector<48x256xf32> -> vector<48x256xf32>
    %129 = arith.addf %126, %128 : vector<48x256xf32>
    %c0_60 = arith.constant 0 : index
    %c0_61 = arith.constant 0 : index
    %130 = vector.load %arg14[%c0_60, %c0_61] : memref<1x256xf32, #tpu.memory_space<vmem>>, vector<1x256xf32>
    %131 = vector.broadcast %130 : vector<1x256xf32> to vector<48x256xf32>
    %132 = arith.addf %129, %131 : vector<48x256xf32>
    %cst_62 = arith.constant 1.000000e-01 : f32
    %133 = vector.broadcast %cst_62 : f32 to vector<48x256xf32>
    %134 = arith.mulf %133, %132 : vector<48x256xf32>
    %135 = arith.maximumf %132, %134 : vector<48x256xf32>
    %136 = arith.truncf %135 : vector<48x256xf32> to vector<48x256xbf16>
    %137 = vector.extract_strided_slice %136 {offsets = [1, 0], sizes = [16, 256], strides = [1, 1]} : vector<48x256xbf16> to vector<16x256xbf16>
    %c0_63 = arith.constant 0 : index
    %c0_64 = arith.constant 0 : index
    %c0_65 = arith.constant 0 : index
    %138 = vector.load %arg15[%c0_63, %c0_64, %c0_65] : memref<2x16x256xbf16, #tpu.memory_space<vmem>>, vector<1x16x256xbf16>
    %139 = vector.shape_cast %138 : vector<1x16x256xbf16> to vector<16x256xbf16>
    %140 = vector.shape_cast %137 : vector<16x256xbf16> to vector<1x16x256xbf16>
    tpu.vector_store %arg15[%c0_63, %c0_64, %c0_65], %140 {strides = array<i32>} : memref<2x16x256xbf16, #tpu.memory_space<vmem>>, vector<1x16x256xbf16>,
    %141 = vector.extract_strided_slice %136 {offsets = [25, 0], sizes = [16, 256], strides = [1, 1]} : vector<48x256xbf16> to vector<16x256xbf16>
    %c1_66 = arith.constant 1 : index
    %c0_67 = arith.constant 0 : index
    %c0_68 = arith.constant 0 : index
    %142 = vector.load %arg15[%c1_66, %c0_67, %c0_68] : memref<2x16x256xbf16, #tpu.memory_space<vmem>>, vector<1x16x256xbf16>
    %143 = vector.shape_cast %142 : vector<1x16x256xbf16> to vector<16x256xbf16>
    %144 = vector.shape_cast %141 : vector<16x256xbf16> to vector<1x16x256xbf16>
    tpu.vector_store %arg15[%c1_66, %c0_67, %c0_68], %144 {strides = array<i32>} : memref<2x16x256xbf16, #tpu.memory_space<vmem>>, vector<1x16x256xbf16>,
    return
  }
  func.func @transform_0(%arg0: i32) -> (i32, i32, i32) {
    %c0_i32 = arith.constant 0 : i32
    %c0_i32_0 = arith.constant 0 : i32
    %c0_i32_1 = arith.constant 0 : i32
    return %arg0, %c0_i32, %c0_i32_0 : i32, i32, i32
  }
  func.func @transform_1(%arg0: i32) -> (i32, i32) {
    %c0_i32 = arith.constant 0 : i32
    %c0_i32_0 = arith.constant 0 : i32
    %c0_i32_1 = arith.constant 0 : i32
    return %c0_i32, %c0_i32_0 : i32, i32
  }
  func.func @transform_2(%arg0: i32) -> (i32, i32) {
    %c0_i32 = arith.constant 0 : i32
    %c0_i32_0 = arith.constant 0 : i32
    %c0_i32_1 = arith.constant 0 : i32
    return %c0_i32, %c0_i32_0 : i32, i32
  }
  func.func @transform_3(%arg0: i32) -> (i32, i32, i32) {
    %c0_i32 = arith.constant 0 : i32
    %c0_i32_0 = arith.constant 0 : i32
    %c0_i32_1 = arith.constant 0 : i32
    %c0_i32_2 = arith.constant 0 : i32
    return %c0_i32, %c0_i32_0, %c0_i32_1 : i32, i32, i32
  }
  func.func @transform_4(%arg0: i32) -> (i32, i32, i32) {
    %c0_i32 = arith.constant 0 : i32
    %c0_i32_0 = arith.constant 0 : i32
    %c0_i32_1 = arith.constant 0 : i32
    %c0_i32_2 = arith.constant 0 : i32
    return %c0_i32, %c0_i32_0, %c0_i32_1 : i32, i32, i32
  }
  func.func @transform_5(%arg0: i32) -> (i32, i32, i32) {
    %c0_i32 = arith.constant 0 : i32
    %c0_i32_0 = arith.constant 0 : i32
    %c0_i32_1 = arith.constant 0 : i32
    %c0_i32_2 = arith.constant 0 : i32
    return %c0_i32, %c0_i32_0, %c0_i32_1 : i32, i32, i32
  }
  func.func @transform_6(%arg0: i32) -> (i32, i32, i32) {
    %c0_i32 = arith.constant 0 : i32
    %c0_i32_0 = arith.constant 0 : i32
    %c0_i32_1 = arith.constant 0 : i32
    %c0_i32_2 = arith.constant 0 : i32
    return %c0_i32, %c0_i32_0, %c0_i32_1 : i32, i32, i32
  }
  func.func @transform_7(%arg0: i32) -> (i32, i32) {
    %c0_i32 = arith.constant 0 : i32
    %c0_i32_0 = arith.constant 0 : i32
    %c0_i32_1 = arith.constant 0 : i32
    return %c0_i32, %c0_i32_0 : i32, i32
  }
  func.func @transform_8(%arg0: i32) -> (i32, i32) {
    %c0_i32 = arith.constant 0 : i32
    %c0_i32_0 = arith.constant 0 : i32
    %c0_i32_1 = arith.constant 0 : i32
    return %c0_i32, %c0_i32_0 : i32, i32
  }
  func.func @transform_9(%arg0: i32) -> (i32, i32) {
    %c0_i32 = arith.constant 0 : i32
    %c0_i32_0 = arith.constant 0 : i32
    %c0_i32_1 = arith.constant 0 : i32
    return %c0_i32, %c0_i32_0 : i32, i32
  }
  func.func @transform_10(%arg0: i32) -> (i32, i32) {
    %c0_i32 = arith.constant 0 : i32
    %c0_i32_0 = arith.constant 0 : i32
    %c0_i32_1 = arith.constant 0 : i32
    return %c0_i32, %c0_i32_0 : i32, i32
  }
  func.func @transform_11(%arg0: i32) -> (i32, i32) {
    %c0_i32 = arith.constant 0 : i32
    %c0_i32_0 = arith.constant 0 : i32
    %c0_i32_1 = arith.constant 0 : i32
    return %c0_i32, %c0_i32_0 : i32, i32
  }
  func.func @transform_12(%arg0: i32) -> (i32, i32) {
    %c0_i32 = arith.constant 0 : i32
    %c0_i32_0 = arith.constant 0 : i32
    %c0_i32_1 = arith.constant 0 : i32
    return %c0_i32, %c0_i32_0 : i32, i32
  }
  func.func @transform_13(%arg0: i32) -> (i32, i32) {
    %c0_i32 = arith.constant 0 : i32
    %c0_i32_0 = arith.constant 0 : i32
    %c0_i32_1 = arith.constant 0 : i32
    return %c0_i32, %c0_i32_0 : i32, i32
  }
  func.func @transform_14(%arg0: i32) -> (i32, i32, i32) {
    %c0_i32 = arith.constant 0 : i32
    %c0_i32_0 = arith.constant 0 : i32
    %c0_i32_1 = arith.constant 0 : i32
    return %arg0, %c0_i32, %c0_i32_0 : i32, i32, i32
  }
}

</mosaic_0001>

<llo_original>
// kernel: _lambda_.1
$region0: #{_lambda_.1}
  #allocation0 [shape = 'u32[]', space=smem, size = 0x4, offset = 0x4, fixed_abs, tag = 'smem constant byte address 0x4 - core index']
  #allocation1 [shape = 'u32[144,128]{1,0:T(1,128)}', space=vmem, size = 0x12000, scoped, tag = 'internal scratch']
  %s0 = inlined_call_operand.hbm [shape: f32[2,16,256], index: 0, kind: input, shape index: {}]
  %s1 = inlined_call_operand.hbm [shape: bf16[256,128], index: 1, kind: input, shape index: {}]
  %s2 = inlined_call_operand.hbm [shape: f32[1,128], index: 2, kind: input, shape index: {}]
  %s3 = inlined_call_operand.hbm [shape: bf16[2,128,128], index: 3, kind: input, shape index: {}]
  %s4 = inlined_call_operand.hbm [shape: f32[2,1,128], index: 4, kind: input, shape index: {}]
  %s5 = inlined_call_operand.hbm [shape: bf16[2,384,128], index: 5, kind: input, shape index: {}]
  %s6 = inlined_call_operand.hbm [shape: f32[2,1,128], index: 6, kind: input, shape index: {}]
  %s7 = inlined_call_operand.hbm [shape: bf16[128,128], index: 7, kind: input, shape index: {}]
  %s8 = inlined_call_operand.hbm [shape: f32[1,128], index: 8, kind: input, shape index: {}]
  %s9 = inlined_call_operand.hbm [shape: bf16[256,128], index: 9, kind: input, shape index: {}]
  %s10 = inlined_call_operand.hbm [shape: f32[1,128], index: 10, kind: input, shape index: {}]
  %s11 = inlined_call_operand.hbm [shape: bf16[128,256], index: 11, kind: input, shape index: {}]
  %s12 = inlined_call_operand.hbm [shape: bf16[128,256], index: 12, kind: input, shape index: {}]
  %s13 = inlined_call_operand.hbm [shape: f32[1,256], index: 13, kind: input, shape index: {}]
  %s14 = inlined_call_operand.hbm [shape: bf16[2,16,256], index: 14, kind: output, shape index: {}]
  %s15 = sld [smem:[#allocation0]]
  $region122: #{_lambda_.1} parent=0
    _
  %s17 = ssub.s32 1, %s15
  %s18 = scalar_select 0, %s17, %s15
  $region1: #{_lambda_.1} parent=0
    #allocation2 [shape = 'u8[32768]{0}', space=vmem, size = 0x8000, scoped, tag = 'input window, operand 0, single buffered']
    #allocation3 [shape = 's32[1]{0}', space=sflag, size = 0x4, scoped, tag = 'scoped memory for _lambda_.1']
    #allocation4 [shape = 's32[1]{0}', space=sflag, size = 0x4, scoped, tag = 'scoped memory for _lambda_.1']
    #allocation5 [shape = 'u8[65536]{0}', space=vmem, size = 0x10000, scoped, tag = 'input window, operand 1, single buffered']
    #allocation6 [shape = 's32[1]{0}', space=sflag, size = 0x4, scoped, tag = 'scoped memory for _lambda_.1']
    #allocation7 [shape = 'u8[512]{0}', space=vmem, size = 0x400, scoped, tag = 'input window, operand 2, single buffered']
    #allocation8 [shape = 'u8[65536]{0}', space=vmem, size = 0x10000, scoped, tag = 'input window, operand 3, single buffered']
    #allocation9 [shape = 's32[1]{0}', space=sflag, size = 0x4, scoped, tag = 'scoped memory for _lambda_.1']
    #allocation10 [shape = 'u8[1024]{0}', space=vmem, size = 0x400, scoped, tag = 'input window, operand 4, single buffered']
    #allocation11 [shape = 'u8[196608]{0}', space=vmem, size = 0x30000, scoped, tag = 'input window, operand 5, single buffered']
    #allocation12 [shape = 's32[1]{0}', space=sflag, size = 0x4, scoped, tag = 'scoped memory for _lambda_.1']
    #allocation13 [shape = 'u8[1024]{0}', space=vmem, size = 0x400, scoped, tag = 'input window, operand 6, single buffered']
    #allocation14 [shape = 'u8[32768]{0}', space=vmem, size = 0x8000, scoped, tag = 'input window, operand 7, single buffered']
    #allocation15 [shape = 's32[1]{0}', space=sflag, size = 0x4, scoped, tag = 'scoped memory for _lambda_.1']
    #allocation16 [shape = 'u8[512]{0}', space=vmem, size = 0x400, scoped, tag = 'input window, operand 8, single buffered']
    #allocation17 [shape = 'u8[65536]{0}', space=vmem, size = 0x10000, scoped, tag = 'input window, operand 9, single buffered']
    #allocation18 [shape = 's32[1]{0}', space=sflag, size = 0x4, scoped, tag = 'scoped memory for _lambda_.1']
    #allocation19 [shape = 'u8[512]{0}', space=vmem, size = 0x400, scoped, tag = 'input window, operand 10, single buffered']
    #allocation20 [shape = 'u8[65536]{0}', space=vmem, size = 0x10000, scoped, tag = 'input window, operand 11, single buffered']
    #allocation21 [shape = 's32[1]{0}', space=sflag, size = 0x4, scoped, tag = 'scoped memory for _lambda_.1']
    #allocation22 [shape = 'u8[65536]{0}', space=vmem, size = 0x10000, scoped, tag = 'input window, operand 12, single buffered']
    #allocation23 [shape = 'u8[1024]{0}', space=vmem, size = 0x400, scoped, tag = 'input window, operand 13, single buffered']
    #allocation24 [shape = 's32[1]{0}', space=sflag, size = 0x4, scoped, tag = 'scoped memory for _lambda_.1']
    #allocation25 [shape = 'u8[16384]{0}', space=vmem, size = 0x4000, scoped, tag = 'output window, operand 0, single buffered']
    %19 = vsyncpa [#allocation3], 0
    %20 = vsyncpa [#allocation6], 0
    %21 = vsyncpa [#allocation9], 0
    %22 = vsyncpa [#allocation12], 0
    %23 = vsyncpa [#allocation15], 0
    %24 = vsyncpa [#allocation18], 0
    %25 = vsyncpa [#allocation21], 0
    %26 = vsyncpa [#allocation24], 0
    %27 = vsyncpa [#allocation4], 0
    // Predicated region
    $region2: #{_lambda_.1} parent=1 // pred_check
      _
    $region3: #{_lambda_.1} parent=1 // pred_check_branch
      %29 = sbr.rel (0) target = $region5
    $region4: #{_lambda_.1} parent=1 // pred_region
      %s31 = ssub.s32 1024, 1024
      %32 = vsyncadd [#allocation3], %s31
      %s33 = sshll.u32 [#allocation2], 4
      %s34 = int_to_ptr.vmem [resolvable:$true] %s33
      %39 = dma.hbm_to_vmem [thread:$0]  %s0, 1024, %s34, [#allocation3], 256, 256, 16
    $region5: #{_lambda_.1} parent=1 // pred_fallthru
      _
    // Predicated region
    $region6: #{_lambda_.1} parent=1 // pred_check
      _
    $region7: #{_lambda_.1} parent=1 // pred_check_branch
      %41 = sbr.rel (0) target = $region9
    $region8: #{_lambda_.1} parent=1 // pred_region
      %s43 = ssub.s32 2048, 2048
      %44 = vsyncadd [#allocation6], %s43
      %s45 = sshll.u32 [#allocation5], 4
      %s46 = int_to_ptr.vmem [resolvable:$true] %s45
      %51 = dma.hbm_to_vmem [thread:$0]  %s1, 2048, %s46, [#allocation6], 64, 64, 4
    $region9: #{_lambda_.1} parent=1 // pred_fallthru
      _
    // Predicated region
    $region10: #{_lambda_.1} parent=1 // pred_check
      _
    $region11: #{_lambda_.1} parent=1 // pred_check_branch
      %53 = sbr.rel (0) target = $region13
    $region12: #{_lambda_.1} parent=1 // pred_region
      %s55 = ssub.s32 16, 16
      %56 = vsyncadd [#allocation6], %s55
      %s58 = sshll.u32 [#allocation7], 4
      %s59 = int_to_ptr.vmem [resolvable:$true] %s58
      %61 = dma.hbm_to_vmem [thread:$0]  %s2, 16, %s59, [#allocation6]
    $region13: #{_lambda_.1} parent=1 // pred_fallthru
      _
    // Predicated region
    $region14: #{_lambda_.1} parent=1 // pred_check
      _
    $region15: #{_lambda_.1} parent=1 // pred_check_branch
      %63 = sbr.rel (0) target = $region17
    $region16: #{_lambda_.1} parent=1 // pred_region
      %s65 = ssub.s32 2048, 2048
      %66 = vsyncadd [#allocation9], %s65
      %s67 = sshll.u32 [#allocation8], 4
      %s68 = int_to_ptr.vmem [resolvable:$true] %s67
      %73 = dma.hbm_to_vmem [thread:$0]  %s3, 2048, %s68, [#allocation9], 64, 64, 4
    $region17: #{_lambda_.1} parent=1 // pred_fallthru
      _
    // Predicated region
    $region18: #{_lambda_.1} parent=1 // pred_check
      _
    $region19: #{_lambda_.1} parent=1 // pred_check_branch
      %75 = sbr.rel (0) target = $region21
    $region20: #{_lambda_.1} parent=1 // pred_region
      %s77 = ssub.s32 32, 32
      %78 = vsyncadd [#allocation9], %s77
      %s79 = sshll.u32 [#allocation10], 4
      %s80 = int_to_ptr.vmem [resolvable:$true] %s79
      %85 = dma.hbm_to_vmem [thread:$0]  %s4, 32, %s80, [#allocation9], 16, 16, 1
    $region21: #{_lambda_.1} parent=1 // pred_fallthru
      _
    // Predicated region
    $region22: #{_lambda_.1} parent=1 // pred_check
      _
    $region23: #{_lambda_.1} parent=1 // pred_check_branch
      %87 = sbr.rel (0) target = $region25
    $region24: #{_lambda_.1} parent=1 // pred_region
      %s89 = ssub.s32 6144, 6144
      %90 = vsyncadd [#allocation12], %s89
      %s91 = sshll.u32 [#allocation11], 4
      %s92 = int_to_ptr.vmem [resolvable:$true] %s91
      %97 = dma.hbm_to_vmem [thread:$0]  %s5, 6144, %s92, [#allocation12], 64, 64, 4
    $region25: #{_lambda_.1} parent=1 // pred_fallthru
      _
    // Predicated region
    $region26: #{_lambda_.1} parent=1 // pred_check
      _
    $region27: #{_lambda_.1} parent=1 // pred_check_branch
      %99 = sbr.rel (0) target = $region29
    $region28: #{_lambda_.1} parent=1 // pred_region
      %s101 = ssub.s32 32, 32
      %102 = vsyncadd [#allocation12], %s101
      %s103 = sshll.u32 [#allocation13], 4
      %s104 = int_to_ptr.vmem [resolvable:$true] %s103
      %109 = dma.hbm_to_vmem [thread:$0]  %s6, 32, %s104, [#allocation12], 16, 16, 1
    $region29: #{_lambda_.1} parent=1 // pred_fallthru
      _
    // Predicated region
    $region30: #{_lambda_.1} parent=1 // pred_check
      _
    $region31: #{_lambda_.1} parent=1 // pred_check_branch
      %111 = sbr.rel (0) target = $region33
    $region32: #{_lambda_.1} parent=1 // pred_region
      %s113 = ssub.s32 1024, 1024
      %114 = vsyncadd [#allocation15], %s113
      %s115 = sshll.u32 [#allocation14], 4
      %s116 = int_to_ptr.vmem [resolvable:$true] %s115
      %121 = dma.hbm_to_vmem [thread:$0]  %s7, 1024, %s116, [#allocation15], 64, 64, 4
    $region33: #{_lambda_.1} parent=1 // pred_fallthru
      _
    // Predicated region
    $region34: #{_lambda_.1} parent=1 // pred_check
      _
    $region35: #{_lambda_.1} parent=1 // pred_check_branch
      %123 = sbr.rel (0) target = $region37
    $region36: #{_lambda_.1} parent=1 // pred_region
      %s125 = ssub.s32 16, 16
      %126 = vsyncadd [#allocation15], %s125
      %s128 = sshll.u32 [#allocation16], 4
      %s129 = int_to_ptr.vmem [resolvable:$true] %s128
      %131 = dma.hbm_to_vmem [thread:$0]  %s8, 16, %s129, [#allocation15]
    $region37: #{_lambda_.1} parent=1 // pred_fallthru
      _
    // Predicated region
    $region38: #{_lambda_.1} parent=1 // pred_check
      _
    $region39: #{_lambda_.1} parent=1 // pred_check_branch
      %133 = sbr.rel (0) target = $region41
    $region40: #{_lambda_.1} parent=1 // pred_region
      %s135 = ssub.s32 2048, 2048
      %136 = vsyncadd [#allocation18], %s135
      %s137 = sshll.u32 [#allocation17], 4
      %s138 = int_to_ptr.vmem [resolvable:$true] %s137
      %143 = dma.hbm_to_vmem [thread:$0]  %s9, 2048, %s138, [#allocation18], 64, 64, 4
    $region41: #{_lambda_.1} parent=1 // pred_fallthru
      _
    // Predicated region
    $region42: #{_lambda_.1} parent=1 // pred_check
      _
    $region43: #{_lambda_.1} parent=1 // pred_check_branch
      %145 = sbr.rel (0) target = $region45
    $region44: #{_lambda_.1} parent=1 // pred_region
      %s147 = ssub.s32 16, 16
      %148 = vsyncadd [#allocation18], %s147
      %s150 = sshll.u32 [#allocation19], 4
      %s151 = int_to_ptr.vmem [resolvable:$true] %s150
      %153 = dma.hbm_to_vmem [thread:$0]  %s10, 16, %s151, [#allocation18]
    $region45: #{_lambda_.1} parent=1 // pred_fallthru
      _
    // Predicated region
    $region46: #{_lambda_.1} parent=1 // pred_check
      _
    $region47: #{_lambda_.1} parent=1 // pred_check_branch
      %155 = sbr.rel (0) target = $region49
    $region48: #{_lambda_.1} parent=1 // pred_region
      %s157 = ssub.s32 2048, 2048
      %158 = vsyncadd [#allocation21], %s157
      %s159 = sshll.u32 [#allocation20], 4
      %s160 = int_to_ptr.vmem [resolvable:$true] %s159
      %165 = dma.hbm_to_vmem [thread:$0]  %s11, 2048, %s160, [#allocation21], 128, 128, 8
    $region49: #{_lambda_.1} parent=1 // pred_fallthru
      _
    // Predicated region
    $region50: #{_lambda_.1} parent=1 // pred_check
      _
    $region51: #{_lambda_.1} parent=1 // pred_check_branch
      %167 = sbr.rel (0) target = $region53
    $region52: #{_lambda_.1} parent=1 // pred_region
      %s169 = ssub.s32 2048, 2048
      %170 = vsyncadd [#allocation21], %s169
      %s171 = sshll.u32 [#allocation22], 4
      %s172 = int_to_ptr.vmem [resolvable:$true] %s171
      %177 = dma.hbm_to_vmem [thread:$0]  %s12, 2048, %s172, [#allocation21], 128, 128, 8
    $region53: #{_lambda_.1} parent=1 // pred_fallthru
      _
    // Predicated region
    $region54: #{_lambda_.1} parent=1 // pred_check
      _
    $region55: #{_lambda_.1} parent=1 // pred_check_branch
      %179 = sbr.rel (0) target = $region57
    $region56: #{_lambda_.1} parent=1 // pred_region
      %s181 = ssub.s32 32, 32
      %182 = vsyncadd [#allocation24], %s181
      %s184 = sshll.u32 [#allocation23], 4
      %s185 = int_to_ptr.vmem [resolvable:$true] %s184
      %187 = dma.hbm_to_vmem [thread:$0]  %s13, 32, %s185, [#allocation24]
    $region57: #{_lambda_.1} parent=1 // pred_fallthru
      _
    // Predicated region
    $region58: #{_lambda_.1} parent=1 // pred_check
      _
    $region59: #{_lambda_.1} parent=1 // pred_check_branch
      %189 = sbr.rel (0) target = $region61
    $region60: #{_lambda_.1} parent=1 // pred_region
      %190 = dma.done [#allocation3], 1024
    $region61: #{_lambda_.1} parent=1 // pred_fallthru
      _
    // Predicated region
    $region62: #{_lambda_.1} parent=1 // pred_check
      _
    $region63: #{_lambda_.1} parent=1 // pred_check_branch
      %192 = sbr.rel (0) target = $region65
    $region64: #{_lambda_.1} parent=1 // pred_region
      %193 = dma.done [#allocation6], 2048
    $region65: #{_lambda_.1} parent=1 // pred_fallthru
      _
    // Predicated region
    $region66: #{_lambda_.1} parent=1 // pred_check
      _
    $region67: #{_lambda_.1} parent=1 // pred_check_branch
      %195 = sbr.rel (0) target = $region69
    $region68: #{_lambda_.1} parent=1 // pred_region
      %196 = dma.done [#allocation6], 16
    $region69: #{_lambda_.1} parent=1 // pred_fallthru
      _
    // Predicated region
    $region70: #{_lambda_.1} parent=1 // pred_check
      _
    $region71: #{_lambda_.1} parent=1 // pred_check_branch
      %198 = sbr.rel (0) target = $region73
    $region72: #{_lambda_.1} parent=1 // pred_region
      %199 = dma.done [#allocation9], 2048
    $region73: #{_lambda_.1} parent=1 // pred_fallthru
      _
    // Predicated region
    $region74: #{_lambda_.1} parent=1 // pred_check
      _
    $region75: #{_lambda_.1} parent=1 // pred_check_branch
      %201 = sbr.rel (0) target = $region77
    $region76: #{_lambda_.1} parent=1 // pred_region
      %202 = dma.done [#allocation9], 32
    $region77: #{_lambda_.1} parent=1 // pred_fallthru
      _
    // Predicated region
    $region78: #{_lambda_.1} parent=1 // pred_check
      _
    $region79: #{_lambda_.1} parent=1 // pred_check_branch
      %204 = sbr.rel (0) target = $region81
    $region80: #{_lambda_.1} parent=1 // pred_region
      %205 = dma.done [#allocation12], 6144
    $region81: #{_lambda_.1} parent=1 // pred_fallthru
      _
    // Predicated region
    $region82: #{_lambda_.1} parent=1 // pred_check
      _
    $region83: #{_lambda_.1} parent=1 // pred_check_branch
      %207 = sbr.rel (0) target = $region85
    $region84: #{_lambda_.1} parent=1 // pred_region
      %208 = dma.done [#allocation12], 32
    $region85: #{_lambda_.1} parent=1 // pred_fallthru
      _
    // Predicated region
    $region86: #{_lambda_.1} parent=1 // pred_check
      _
    $region87: #{_lambda_.1} parent=1 // pred_check_branch
      %210 = sbr.rel (0) target = $region89
    $region88: #{_lambda_.1} parent=1 // pred_region
      %211 = dma.done [#allocation15], 1024
    $region89: #{_lambda_.1} parent=1 // pred_fallthru
      _
    // Predicated region
    $region90: #{_lambda_.1} parent=1 // pred_check
      _
    $region91: #{_lambda_.1} parent=1 // pred_check_branch
      %213 = sbr.rel (0) target = $region93
    $region92: #{_lambda_.1} parent=1 // pred_region
      %214 = dma.done [#allocation15], 16
    $region93: #{_lambda_.1} parent=1 // pred_fallthru
      _
    // Predicated region
    $region94: #{_lambda_.1} parent=1 // pred_check
      _
    $region95: #{_lambda_.1} parent=1 // pred_check_branch
      %216 = sbr.rel (0) target = $region97
    $region96: #{_lambda_.1} parent=1 // pred_region
      %217 = dma.done [#allocation18], 2048
    $region97: #{_lambda_.1} parent=1 // pred_fallthru
      _
    // Predicated region
    $region98: #{_lambda_.1} parent=1 // pred_check
      _
    $region99: #{_lambda_.1} parent=1 // pred_check_branch
      %219 = sbr.rel (0) target = $region101
    $region100: #{_lambda_.1} parent=1 // pred_region
      %220 = dma.done [#allocation18], 16
    $region101: #{_lambda_.1} parent=1 // pred_fallthru
      _
    // Predicated region
    $region102: #{_lambda_.1} parent=1 // pred_check
      _
    $region103: #{_lambda_.1} parent=1 // pred_check_branch
      %222 = sbr.rel (0) target = $region105
    $region104: #{_lambda_.1} parent=1 // pred_region
      %223 = dma.done [#allocation21], 2048
    $region105: #{_lambda_.1} parent=1 // pred_fallthru
      _
    // Predicated region
    $region106: #{_lambda_.1} parent=1 // pred_check
      _
    $region107: #{_lambda_.1} parent=1 // pred_check_branch
      %225 = sbr.rel (0) target = $region109
    $region108: #{_lambda_.1} parent=1 // pred_region
      %226 = dma.done [#allocation21], 2048
    $region109: #{_lambda_.1} parent=1 // pred_fallthru
      _
    // Predicated region
    $region110: #{_lambda_.1} parent=1 // pred_check
      _
    $region111: #{_lambda_.1} parent=1 // pred_check_branch
      %228 = sbr.rel (0) target = $region113
    $region112: #{_lambda_.1} parent=1 // pred_region
      %229 = dma.done [#allocation24], 32
    $region113: #{_lambda_.1} parent=1 // pred_fallthru
      _
    %v231 = vld [vmem:[#allocation2] sm:$0xff]
    %v232 = vld [vmem:[#allocation2 + $0x8] sm:$0xff]
    %v233 = vld [vmem:[#allocation2 + $0x10] sm:$0xff]
    %v234 = vld [vmem:[#allocation2 + $0x18] sm:$0xff]
    %v235 = vpack.c.bf16 %v233, %v231
    %v236 = vpack.c.bf16 %v234, %v232
    %s237 = scalar_lea.vmem [#allocation2], 32
    %v238 = vld [vmem:[%s237] sm:$0xff]
    %v239 = vld [vmem:[%s237 + $0x8] sm:$0xff]
    %v240 = vld [vmem:[%s237 + $0x10] sm:$0xff]
    %v241 = vld [vmem:[%s237 + $0x18] sm:$0xff]
    %v242 = vpack.c.bf16 %v240, %v238
    %v243 = vpack.c.bf16 %v241, %v239
    %v245 = vshrl.u32 %v235, 16
    %v247 = vrot.slane %v245, 7
    %v248 = vshll.u32 %v235, 16
    %v250 = vor.u32 %v247, %v248
    %v252 = vshrl.u32 %v236, 16
    %v254 = vrot.slane %v252, 7
    %v255 = vshll.u32 %v236, 16
    %v257 = vor.u32 %v254, %v255
    %v263 = vshrl.u32 %v242, 16
    %v265 = vrot.slane %v263, 3
    %v266 = vshll.u32 %v242, 16
    %v268 = vrot.slane %v266, 4
    %v269 = vor.u32 %v265, %v268
    %v271 = vshrl.u32 %v243, 16
    %v273 = vrot.slane %v271, 3
    %v274 = vshll.u32 %v243, 16
    %v276 = vrot.slane %v274, 4
    %v277 = vor.u32 %v273, %v276
    %vm280 = vcmask 1040384
    %vm281 = vsmask.f32 256
    %vm282 = vmand %vm280, %vm281
    %v283 = vsel %vm282, 0, %v250
    %v284 = vsel %vm282, 0, %v257
    %v285 = vsel %vm282, %v247, 0
    %v286 = vsel %vm282, %v254, 0
    %vm287 = vcmask 1043456
    %v290 = vsel %vm287, %v285, 0
    %v293 = vsel %vm287, %v286, 0
    %vm295 = vcmask 1044480
    %vm296 = vsmask.f32 4352
    %vm297 = vmand %vm295, %vm296
    %v298 = vsel %vm297, %v290, %v269
    %v299 = vsel %vm297, %v293, %v277
    %v300 = vsel %vm297, %v269, 0
    %v301 = vsel %vm297, %v277, 0
    %v302 = vlaneseq
    %v303 = vshrl.u32 %v302, 7
    %v304 = vadd.s32 %v303, 8
    %v305 = vadd.s32 %v303, 16
    %v306 = vadd.s32 %v303, 24
    %v307 = vadd.s32 %v303, 32
    %v308 = vadd.s32 %v303, 40
    %vm309 = vcmp.ge.s32.totalorder %v303, 1
    %vm310 = vcmp.ge.s32.totalorder %v304, 1
    %vm311 = vcmp.ge.s32.totalorder %v305, 1
    %vm312 = vcmp.ge.s32.totalorder %v306, 1
    %vm313 = vcmp.ge.s32.totalorder %v307, 1
    %vm314 = vcmp.ge.s32.totalorder %v308, 1
    %vm315 = vcmp.lt.s32.totalorder %v303, 17
    %vm316 = vcmp.lt.s32.totalorder %v304, 17
    %vm317 = vcmp.lt.s32.totalorder %v305, 17
    %vm318 = vcmp.lt.s32.totalorder %v306, 17
    %vm319 = vcmp.lt.s32.totalorder %v307, 17
    %vm320 = vcmp.lt.s32.totalorder %v308, 17
    %vm321 = vmand %vm309, %vm315
    %vm322 = vmand %vm310, %vm316
    %vm323 = vmand %vm311, %vm317
    %vm324 = vmand %vm312, %vm318
    %vm325 = vmand %vm313, %vm319
    %vm326 = vmand %vm314, %vm320
    %vm327 = vcmp.ge.s32.totalorder %v303, 25
    %vm328 = vcmp.ge.s32.totalorder %v304, 25
    %vm329 = vcmp.ge.s32.totalorder %v305, 25
    %vm330 = vcmp.ge.s32.totalorder %v306, 25
    %vm331 = vcmp.ge.s32.totalorder %v307, 25
    %vm332 = vcmp.ge.s32.totalorder %v308, 25
    %vm333 = vcmp.lt.s32.totalorder %v303, 41
    %vm334 = vcmp.lt.s32.totalorder %v304, 41
    %vm335 = vcmp.lt.s32.totalorder %v305, 41
    %vm336 = vcmp.lt.s32.totalorder %v306, 41
    %vm337 = vcmp.lt.s32.totalorder %v307, 41
    %vm338 = vcmp.lt.s32.totalorder %v308, 41
    %vm339 = vmand %vm327, %vm333
    %vm340 = vmand %vm328, %vm334
    %vm341 = vmand %vm329, %vm335
    %vm342 = vmand %vm330, %vm336
    %vm343 = vmand %vm331, %vm337
    %vm344 = vmand %vm332, %vm338
    %vm345 = vmor %vm321, %vm339
    %vm346 = vmor %vm322, %vm340
    %vm347 = vmor %vm323, %vm341
    %vm348 = vmor %vm324, %vm342
    %vm349 = vmor %vm325, %vm343
    %vm350 = vmor %vm326, %vm344
    %v351 = vld [vmem:[#allocation5] sm:$0xf]
    %v352 = vld [vmem:[#allocation5 + $0x4] sm:$0xf]
    %v353 = vld [vmem:[#allocation5 + $0x8] sm:$0xf]
    %v354 = vld [vmem:[#allocation5 + $0xc] sm:$0xf]
    %v355 = vld [vmem:[#allocation5 + $0x10] sm:$0xf]
    %v356 = vld [vmem:[#allocation5 + $0x14] sm:$0xf]
    %v357 = vld [vmem:[#allocation5 + $0x18] sm:$0xf]
    %v358 = vld [vmem:[#allocation5 + $0x1c] sm:$0xf]
    %v359 = vld [vmem:[#allocation5 + $0x20] sm:$0xf]
    %v360 = vld [vmem:[#allocation5 + $0x24] sm:$0xf]
    %v361 = vld [vmem:[#allocation5 + $0x28] sm:$0xf]
    %v362 = vld [vmem:[#allocation5 + $0x2c] sm:$0xf]
    %v363 = vld [vmem:[#allocation5 + $0x30] sm:$0xf]
    %v364 = vld [vmem:[#allocation5 + $0x34] sm:$0xf]
    %v365 = vld [vmem:[#allocation5 + $0x38] sm:$0xf]
    %v366 = vld [vmem:[#allocation5 + $0x3c] sm:$0xf]
    %v367 = vld [vmem:[#allocation5 + $0x40] sm:$0xf]
    %v368 = vld [vmem:[#allocation5 + $0x44] sm:$0xf]
    %v369 = vld [vmem:[#allocation5 + $0x48] sm:$0xf]
    %v370 = vld [vmem:[#allocation5 + $0x4c] sm:$0xf]
    %v371 = vld [vmem:[#allocation5 + $0x50] sm:$0xf]
    %v372 = vld [vmem:[#allocation5 + $0x54] sm:$0xf]
    %v373 = vld [vmem:[#allocation5 + $0x58] sm:$0xf]
    %v374 = vld [vmem:[#allocation5 + $0x5c] sm:$0xf]
    %v375 = vld [vmem:[#allocation5 + $0x60] sm:$0xf]
    %v376 = vld [vmem:[#allocation5 + $0x64] sm:$0xf]
    %v377 = vld [vmem:[#allocation5 + $0x68] sm:$0xf]
    %v378 = vld [vmem:[#allocation5 + $0x6c] sm:$0xf]
    %v379 = vld [vmem:[#allocation5 + $0x70] sm:$0xf]
    %v380 = vld [vmem:[#allocation5 + $0x74] sm:$0xf]
    %v381 = vld [vmem:[#allocation5 + $0x78] sm:$0xf]
    %v382 = vld [vmem:[#allocation5 + $0x7c] sm:$0xf]
    %v383 = vld [vmem:[#allocation7] sm:$0x1]
    %v385 = vlaneseq
    %v386 = vshrl.u32 %v385, 7
    %v387 = vsub.s32 0, %v386
    %v388 = vrot.slane %v383, %v387
    %v422 = vunpack.c.l.b16 %v351
    %v423 = vunpack.c.l.b16 %v352
    %v424 = vunpack.c.l.b16 %v353
    %v425 = vunpack.c.l.b16 %v354
    %v426 = vunpack.c.l.b16 %v355
    %v427 = vunpack.c.l.b16 %v356
    %v428 = vunpack.c.l.b16 %v357
    %v429 = vunpack.c.l.b16 %v358
    %v430 = vunpack.c.l.b16 %v359
    %v431 = vunpack.c.l.b16 %v360
    %v432 = vunpack.c.l.b16 %v361
    %v433 = vunpack.c.l.b16 %v362
    %v434 = vunpack.c.l.b16 %v363
    %v435 = vunpack.c.l.b16 %v364
    %v436 = vunpack.c.l.b16 %v365
    %v437 = vunpack.c.l.b16 %v366
    %v438 = vunpack.c.l.b16 %v367
    %v439 = vunpack.c.l.b16 %v368
    %v440 = vunpack.c.l.b16 %v369
    %v441 = vunpack.c.l.b16 %v370
    %v442 = vunpack.c.l.b16 %v371
    %v443 = vunpack.c.l.b16 %v372
    %v444 = vunpack.c.l.b16 %v373
    %v445 = vunpack.c.l.b16 %v374
    %v446 = vunpack.c.l.b16 %v375
    %v447 = vunpack.c.l.b16 %v376
    %v448 = vunpack.c.l.b16 %v377
    %v449 = vunpack.c.l.b16 %v378
    %v450 = vunpack.c.l.b16 %v379
    %v451 = vunpack.c.l.b16 %v380
    %v452 = vunpack.c.l.b16 %v381
    %v453 = vunpack.c.l.b16 %v382
    %v454 = vpack.c.b16 %v423, %v422
    %v455 = vpack.c.b16 %v425, %v424
    %v456 = vpack.c.b16 %v427, %v426
    %v457 = vpack.c.b16 %v429, %v428
    %v458 = vpack.c.b16 %v431, %v430
    %v459 = vpack.c.b16 %v433, %v432
    %v460 = vpack.c.b16 %v435, %v434
    %v461 = vpack.c.b16 %v437, %v436
    %v462 = vpack.c.b16 %v439, %v438
    %v463 = vpack.c.b16 %v441, %v440
    %v464 = vpack.c.b16 %v443, %v442
    %v465 = vpack.c.b16 %v445, %v444
    %v466 = vpack.c.b16 %v447, %v446
    %v467 = vpack.c.b16 %v449, %v448
    %v468 = vpack.c.b16 %v451, %v450
    %v469 = vpack.c.b16 %v453, %v452
    %486 = vmatprep.subr.bf16.mxu0 0
    %487 = vmatpush1.bf16.msra.mxu0 %v454
    %488 = vmatprep.subr.bf16.mxu0 0
    %489 = vmatpush1.bf16.msra.mxu0 %v455
    %490 = vmatprep.subr.bf16.mxu0 0
    %491 = vmatpush1.bf16.msra.mxu0 %v456
    %492 = vmatprep.subr.bf16.mxu0 0
    %493 = vmatpush1.bf16.msra.mxu0 %v457
    %494 = vmatprep.subr.bf16.mxu0 0
    %495 = vmatpush1.bf16.msra.mxu0 %v458
    %496 = vmatprep.subr.bf16.mxu0 0
    %497 = vmatpush1.bf16.msra.mxu0 %v459
    %498 = vmatprep.subr.bf16.mxu0 0
    %499 = vmatpush1.bf16.msra.mxu0 %v460
    %500 = vmatprep.subr.bf16.mxu0 0
    %501 = vmatpush1.bf16.msra.mxu0 %v461
    %502 = vmatprep.subr.bf16.mxu0 0
    %503 = vmatpush1.bf16.msra.mxu0 %v462
    %504 = vmatprep.subr.bf16.mxu0 0
    %505 = vmatpush1.bf16.msra.mxu0 %v463
    %506 = vmatprep.subr.bf16.mxu0 0
    %507 = vmatpush1.bf16.msra.mxu0 %v464
    %508 = vmatprep.subr.bf16.mxu0 0
    %509 = vmatpush1.bf16.msra.mxu0 %v465
    %510 = vmatprep.subr.bf16.mxu0 0
    %511 = vmatpush1.bf16.msra.mxu0 %v466
    %512 = vmatprep.subr.bf16.mxu0 0
    %513 = vmatpush1.bf16.msra.mxu0 %v467
    %514 = vmatprep.subr.bf16.mxu0 0
    %515 = vmatpush1.bf16.msra.mxu0 %v468
    %516 = vmatprep.subr.bf16.mxu0 0
    %517 = vmatpush1.bf16.msra.mxu0 %v469
    %518 = vmatprep.mubr.bf16.mxu0 %v284
    %519 = vmatmul.mubr.bf16.gmra.mrb[0].mxu0 %v283
    %v520 = vpop.f32.mrb[0].mxu0
    %v521 = vadd.f32 %v388, %v520
    %v522 = vpop.f32.mrb[0].mxu0
    %v523 = vpop.f32.mrb[0].mxu0
    %v524 = vadd.f32 %v388, %v523
    %v525 = vpop.f32.mrb[0].mxu0
    %526 = vmatprep.mubr.bf16.mxu0 %v299
    %527 = vmatmul.mubr.bf16.gmra.mrb[0].mxu0 %v298
    %v528 = vpop.f32.mrb[0].mxu0
    %v529 = vadd.f32 %v388, %v528
    %v530 = vpop.f32.mrb[0].mxu0
    %v531 = vpop.f32.mrb[0].mxu0
    %v532 = vadd.f32 %v388, %v531
    %v533 = vpop.f32.mrb[0].mxu0
    %534 = vmatprep.mubr.bf16.mxu0 %v301
    %535 = vmatmul.mubr.bf16.gmra.mrb[0].mxu0 %v300
    %v536 = vpop.f32.mrb[0].mxu0
    %v537 = vadd.f32 %v388, %v536
    %v538 = vpop.f32.mrb[0].mxu0
    %v539 = vpop.f32.mrb[0].mxu0
    %v540 = vadd.f32 %v388, %v539
    %v541 = vpop.f32.mrb[0].mxu0
    %542 = vdwg.mxu0
    %v543 = vmul.f32 %v521, 0.1
    %v544 = vmul.f32 %v524, 0.1
    %v545 = vmul.f32 %v529, 0.1
    %v546 = vmul.f32 %v532, 0.1
    %v547 = vmul.f32 %v537, 0.1
    %v548 = vmul.f32 %v540, 0.1
    %v549 = vmax.f32 %v521, %v543
    %v550 = vmax.f32 %v524, %v544
    %v551 = vmax.f32 %v529, %v545
    %v552 = vmax.f32 %v532, %v546
    %v553 = vmax.f32 %v537, %v547
    %v554 = vmax.f32 %v540, %v548
    %v555 = vsel %vm345, %v549, 0.0
    %v556 = vsel %vm346, %v550, 0.0
    %v557 = vsel %vm347, %v551, 0.0
    %v558 = vsel %vm348, %v552, 0.0
    %v559 = vsel %vm349, %v553, 0.0
    %v560 = vsel %vm350, %v554, 0.0
    %v561 = vpack.c.bf16 %v556, %v555
    %v562 = vpack.c.bf16 %v558, %v557
    %v563 = vpack.c.bf16 %v560, %v559
    %v564 = vld [vmem:[#allocation8] sm:$0xf]
    %v565 = vld [vmem:[#allocation8 + $0x4] sm:$0xf]
    %v566 = vld [vmem:[#allocation8 + $0x8] sm:$0xf]
    %v567 = vld [vmem:[#allocation8 + $0xc] sm:$0xf]
    %v568 = vld [vmem:[#allocation8 + $0x10] sm:$0xf]
    %v569 = vld [vmem:[#allocation8 + $0x14] sm:$0xf]
    %v570 = vld [vmem:[#allocation8 + $0x18] sm:$0xf]
    %v571 = vld [vmem:[#allocation8 + $0x1c] sm:$0xf]
    %v572 = vld [vmem:[#allocation8 + $0x20] sm:$0xf]
    %v573 = vld [vmem:[#allocation8 + $0x24] sm:$0xf]
    %v574 = vld [vmem:[#allocation8 + $0x28] sm:$0xf]
    %v575 = vld [vmem:[#allocation8 + $0x2c] sm:$0xf]
    %v576 = vld [vmem:[#allocation8 + $0x30] sm:$0xf]
    %v577 = vld [vmem:[#allocation8 + $0x34] sm:$0xf]
    %v578 = vld [vmem:[#allocation8 + $0x38] sm:$0xf]
    %v579 = vld [vmem:[#allocation8 + $0x3c] sm:$0xf]
    %v580 = vld [vmem:[#allocation10] sm:$0x1]
    %v582 = vlaneseq
    %v583 = vshrl.u32 %v582, 7
    %v584 = vsub.s32 0, %v583
    %v585 = vrot.slane %v580, %v584
    %v603 = vunpack.c.l.b16 %v564
    %v604 = vunpack.c.l.b16 %v565
    %v605 = vunpack.c.l.b16 %v566
    %v606 = vunpack.c.l.b16 %v567
    %v607 = vunpack.c.l.b16 %v568
    %v608 = vunpack.c.l.b16 %v569
    %v609 = vunpack.c.l.b16 %v570
    %v610 = vunpack.c.l.b16 %v571
    %v611 = vunpack.c.l.b16 %v572
    %v612 = vunpack.c.l.b16 %v573
    %v613 = vunpack.c.l.b16 %v574
    %v614 = vunpack.c.l.b16 %v575
    %v615 = vunpack.c.l.b16 %v576
    %v616 = vunpack.c.l.b16 %v577
    %v617 = vunpack.c.l.b16 %v578
    %v618 = vunpack.c.l.b16 %v579
    %v619 = vpack.c.b16 %v604, %v603
    %v620 = vpack.c.b16 %v606, %v605
    %v621 = vpack.c.b16 %v608, %v607
    %v622 = vpack.c.b16 %v610, %v609
    %v623 = vpack.c.b16 %v612, %v611
    %v624 = vpack.c.b16 %v614, %v613
    %v625 = vpack.c.b16 %v616, %v615
    %v626 = vpack.c.b16 %v618, %v617
    %635 = vmatprep.subr.bf16.mxu0 0
    %636 = vmatpush1.bf16.msra.mxu0 %v619
    %637 = vmatprep.subr.bf16.mxu0 0
    %638 = vmatpush1.bf16.msra.mxu0 %v620
    %639 = vmatprep.subr.bf16.mxu0 0
    %640 = vmatpush1.bf16.msra.mxu0 %v621
    %641 = vmatprep.subr.bf16.mxu0 0
    %642 = vmatpush1.bf16.msra.mxu0 %v622
    %643 = vmatprep.subr.bf16.mxu0 0
    %644 = vmatpush1.bf16.msra.mxu0 %v623
    %645 = vmatprep.subr.bf16.mxu0 0
    %646 = vmatpush1.bf16.msra.mxu0 %v624
    %647 = vmatprep.subr.bf16.mxu0 0
    %648 = vmatpush1.bf16.msra.mxu0 %v625
    %649 = vmatprep.subr.bf16.mxu0 0
    %650 = vmatpush1.bf16.msra.mxu0 %v626
    %651 = vmatprep.subr.bf16.mxu0 0
    %652 = vmatpush1.bf16.msra.mxu0 0
    %653 = vmatprep.subr.bf16.mxu0 0
    %654 = vmatpush1.bf16.msra.mxu0 0
    %655 = vmatprep.subr.bf16.mxu0 0
    %656 = vmatpush1.bf16.msra.mxu0 0
    %657 = vmatprep.subr.bf16.mxu0 0
    %658 = vmatpush1.bf16.msra.mxu0 0
    %659 = vmatprep.subr.bf16.mxu0 0
    %660 = vmatpush1.bf16.msra.mxu0 0
    %661 = vmatprep.subr.bf16.mxu0 0
    %662 = vmatpush1.bf16.msra.mxu0 0
    %663 = vmatprep.subr.bf16.mxu0 0
    %664 = vmatpush1.bf16.msra.mxu0 0
    %665 = vmatprep.subr.bf16.mxu0 0
    %666 = vmatpush1.bf16.msra.mxu0 0
    %667 = vmatprep.mubr.bf16.mxu0 0
    %668 = vmatmul.mubr.bf16.gmra.mrb[0].mxu0 %v561
    %v669 = vpop.f32.mrb[0].mxu0
    %v670 = vadd.f32 %v585, %v669
    %v671 = vpop.f32.mrb[0].mxu0
    %v672 = vpop.f32.mrb[0].mxu0
    %v673 = vadd.f32 %v585, %v672
    %v674 = vpop.f32.mrb[0].mxu0
    %675 = vmatprep.mubr.bf16.mxu0 0
    %676 = vmatmul.mubr.bf16.gmra.mrb[0].mxu0 %v562
    %v677 = vpop.f32.mrb[0].mxu0
    %v678 = vadd.f32 %v585, %v677
    %v679 = vpop.f32.mrb[0].mxu0
    %v680 = vpop.f32.mrb[0].mxu0
    %v681 = vadd.f32 %v585, %v680
    %v682 = vpop.f32.mrb[0].mxu0
    %683 = vmatprep.mubr.bf16.mxu0 0
    %684 = vmatmul.mubr.bf16.gmra.mrb[0].mxu0 %v563
    %v685 = vpop.f32.mrb[0].mxu0
    %v686 = vadd.f32 %v585, %v685
    %v687 = vpop.f32.mrb[0].mxu0
    %v688 = vpop.f32.mrb[0].mxu0
    %v689 = vadd.f32 %v585, %v688
    %v690 = vpop.f32.mrb[0].mxu0
    %691 = vdwg.mxu0
    %v692 = vmul.f32 %v670, 0.1
    %v693 = vmul.f32 %v673, 0.1
    %v694 = vmul.f32 %v678, 0.1
    %v695 = vmul.f32 %v681, 0.1
    %v696 = vmul.f32 %v686, 0.1
    %v697 = vmul.f32 %v689, 0.1
    %v698 = vmax.f32 %v670, %v692
    %v699 = vmax.f32 %v673, %v693
    %v700 = vmax.f32 %v678, %v694
    %v701 = vmax.f32 %v681, %v695
    %v702 = vmax.f32 %v686, %v696
    %v703 = vmax.f32 %v689, %v697
    %v704 = vsel %vm345, %v698, 0.0
    %v705 = vsel %vm346, %v699, 0.0
    %v706 = vsel %vm347, %v700, 0.0
    %v707 = vsel %vm348, %v701, 0.0
    %v708 = vsel %vm349, %v702, 0.0
    %v709 = vsel %vm350, %v703, 0.0
    %v710 = vpack.c.bf16 %v705, %v704
    %v711 = vpack.c.bf16 %v707, %v706
    %v712 = vpack.c.bf16 %v709, %v708
    %v714 = vshrl.u32 %v710, 16
    %v716 = vrot.slane %v714, 7
    %v717 = vshll.u32 %v710, 16
    %v719 = vor.u32 %v716, %v717
    %v721 = vshrl.u32 %v711, 16
    %v723 = vrot.slane %v721, 7
    %v724 = vshll.u32 %v711, 16
    %v726 = vor.u32 %v723, %v724
    %v727 = vsel %vm281, %v716, %v726
    %v729 = vshrl.u32 %v712, 16
    %v731 = vrot.slane %v729, 7
    %v732 = vshll.u32 %v712, 16
    %v734 = vor.u32 %v731, %v732
    %v735 = vsel %vm281, %v723, %v734
    %v739 = vsel %vm282, 0, %v719
    %vm740 = vsmask.f32 7424
    %v741 = vrot.slane %v717, 1
    %v742 = vor.u32 %v714, %v741
    %v743 = vrot.slane %v724, 1
    %v744 = vsel %vm740, %v742, %v743
    %v745 = vor.u32 %v721, %v743
    %v746 = vrot.slane %v732, 1
    %v747 = vsel %vm740, %v745, %v746
    %v748 = vor.u32 %v729, %v746
    %vm752 = vcmask 1047552
    %vm753 = vmand %vm752, %vm740
    %v754 = vsel %vm753, %v748, 0
    %v755 = vld [vmem:[#allocation11] sm:$0xf]
    %v756 = vld [vmem:[#allocation11 + $0x4] sm:$0xf]
    %v757 = vld [vmem:[#allocation11 + $0x8] sm:$0xf]
    %v758 = vld [vmem:[#allocation11 + $0xc] sm:$0xf]
    %v759 = vld [vmem:[#allocation11 + $0x10] sm:$0xf]
    %v760 = vld [vmem:[#allocation11 + $0x14] sm:$0xf]
    %v761 = vld [vmem:[#allocation11 + $0x18] sm:$0xf]
    %v762 = vld [vmem:[#allocation11 + $0x1c] sm:$0xf]
    %v763 = vld [vmem:[#allocation11 + $0x20] sm:$0xf]
    %v764 = vld [vmem:[#allocation11 + $0x24] sm:$0xf]
    %v765 = vld [vmem:[#allocation11 + $0x28] sm:$0xf]
    %v766 = vld [vmem:[#allocation11 + $0x2c] sm:$0xf]
    %v767 = vld [vmem:[#allocation11 + $0x30] sm:$0xf]
    %v768 = vld [vmem:[#allocation11 + $0x34] sm:$0xf]
    %v769 = vld [vmem:[#allocation11 + $0x38] sm:$0xf]
    %v770 = vld [vmem:[#allocation11 + $0x3c] sm:$0xf]
    %v771 = vld [vmem:[#allocation11 + $0x40] sm:$0xf]
    %v772 = vld [vmem:[#allocation11 + $0x44] sm:$0xf]
    %v773 = vld [vmem:[#allocation11 + $0x48] sm:$0xf]
    %v774 = vld [vmem:[#allocation11 + $0x4c] sm:$0xf]
    %v775 = vld [vmem:[#allocation11 + $0x50] sm:$0xf]
    %v776 = vld [vmem:[#allocation11 + $0x54] sm:$0xf]
    %v777 = vld [vmem:[#allocation11 + $0x58] sm:$0xf]
    %v778 = vld [vmem:[#allocation11 + $0x5c] sm:$0xf]
    %v779 = vld [vmem:[#allocation11 + $0x60] sm:$0xf]
    %v780 = vld [vmem:[#allocation11 + $0x64] sm:$0xf]
    %v781 = vld [vmem:[#allocation11 + $0x68] sm:$0xf]
    %v782 = vld [vmem:[#allocation11 + $0x6c] sm:$0xf]
    %v783 = vld [vmem:[#allocation11 + $0x70] sm:$0xf]
    %v784 = vld [vmem:[#allocation11 + $0x74] sm:$0xf]
    %v785 = vld [vmem:[#allocation11 + $0x78] sm:$0xf]
    %v786 = vld [vmem:[#allocation11 + $0x7c] sm:$0xf]
    %v787 = vld [vmem:[#allocation11 + $0x80] sm:$0xf]
    %v788 = vld [vmem:[#allocation11 + $0x84] sm:$0xf]
    %v789 = vld [vmem:[#allocation11 + $0x88] sm:$0xf]
    %v790 = vld [vmem:[#allocation11 + $0x8c] sm:$0xf]
    %v791 = vld [vmem:[#allocation11 + $0x90] sm:$0xf]
    %v792 = vld [vmem:[#allocation11 + $0x94] sm:$0xf]
    %v793 = vld [vmem:[#allocation11 + $0x98] sm:$0xf]
    %v794 = vld [vmem:[#allocation11 + $0x9c] sm:$0xf]
    %v795 = vld [vmem:[#allocation11 + $0xa0] sm:$0xf]
    %v796 = vld [vmem:[#allocation11 + $0xa4] sm:$0xf]
    %v797 = vld [vmem:[#allocation11 + $0xa8] sm:$0xf]
    %v798 = vld [vmem:[#allocation11 + $0xac] sm:$0xf]
    %v799 = vld [vmem:[#allocation11 + $0xb0] sm:$0xf]
    %v800 = vld [vmem:[#allocation11 + $0xb4] sm:$0xf]
    %v801 = vld [vmem:[#allocation11 + $0xb8] sm:$0xf]
    %v802 = vld [vmem:[#allocation11 + $0xbc] sm:$0xf]
    %v803 = vld [vmem:[#allocation13] sm:$0x1]
    %v805 = vlaneseq
    %v806 = vshrl.u32 %v805, 7
    %v807 = vsub.s32 0, %v806
    %v808 = vrot.slane %v803, %v807
    %v858 = vunpack.c.l.b16 %v755
    %v859 = vunpack.c.l.b16 %v756
    %v860 = vunpack.c.l.b16 %v757
    %v861 = vunpack.c.l.b16 %v758
    %v862 = vunpack.c.l.b16 %v759
    %v863 = vunpack.c.l.b16 %v760
    %v864 = vunpack.c.l.b16 %v761
    %v865 = vunpack.c.l.b16 %v762
    %v866 = vunpack.c.l.b16 %v763
    %v867 = vunpack.c.l.b16 %v764
    %v868 = vunpack.c.l.b16 %v765
    %v869 = vunpack.c.l.b16 %v766
    %v870 = vunpack.c.l.b16 %v767
    %v871 = vunpack.c.l.b16 %v768
    %v872 = vunpack.c.l.b16 %v769
    %v873 = vunpack.c.l.b16 %v770
    %v874 = vunpack.c.l.b16 %v771
    %v875 = vunpack.c.l.b16 %v772
    %v876 = vunpack.c.l.b16 %v773
    %v877 = vunpack.c.l.b16 %v774
    %v878 = vunpack.c.l.b16 %v775
    %v879 = vunpack.c.l.b16 %v776
    %v880 = vunpack.c.l.b16 %v777
    %v881 = vunpack.c.l.b16 %v778
    %v882 = vunpack.c.l.b16 %v779
    %v883 = vunpack.c.l.b16 %v780
    %v884 = vunpack.c.l.b16 %v781
    %v885 = vunpack.c.l.b16 %v782
    %v886 = vunpack.c.l.b16 %v783
    %v887 = vunpack.c.l.b16 %v784
    %v888 = vunpack.c.l.b16 %v785
    %v889 = vunpack.c.l.b16 %v786
    %v890 = vunpack.c.l.b16 %v787
    %v891 = vunpack.c.l.b16 %v788
    %v892 = vunpack.c.l.b16 %v789
    %v893 = vunpack.c.l.b16 %v790
    %v894 = vunpack.c.l.b16 %v791
    %v895 = vunpack.c.l.b16 %v792
    %v896 = vunpack.c.l.b16 %v793
    %v897 = vunpack.c.l.b16 %v794
    %v898 = vunpack.c.l.b16 %v795
    %v899 = vunpack.c.l.b16 %v796
    %v900 = vunpack.c.l.b16 %v797
    %v901 = vunpack.c.l.b16 %v798
    %v902 = vunpack.c.l.b16 %v799
    %v903 = vunpack.c.l.b16 %v800
    %v904 = vunpack.c.l.b16 %v801
    %v905 = vunpack.c.l.b16 %v802
    %v906 = vpack.c.b16 %v859, %v858
    %v907 = vpack.c.b16 %v861, %v860
    %v908 = vpack.c.b16 %v863, %v862
    %v909 = vpack.c.b16 %v865, %v864
    %v910 = vpack.c.b16 %v867, %v866
    %v911 = vpack.c.b16 %v869, %v868
    %v912 = vpack.c.b16 %v871, %v870
    %v913 = vpack.c.b16 %v873, %v872
    %v914 = vpack.c.b16 %v875, %v874
    %v915 = vpack.c.b16 %v877, %v876
    %v916 = vpack.c.b16 %v879, %v878
    %v917 = vpack.c.b16 %v881, %v880
    %v918 = vpack.c.b16 %v883, %v882
    %v919 = vpack.c.b16 %v885, %v884
    %v920 = vpack.c.b16 %v887, %v886
    %v921 = vpack.c.b16 %v889, %v888
    %v922 = vpack.c.b16 %v891, %v890
    %v923 = vpack.c.b16 %v893, %v892
    %v924 = vpack.c.b16 %v895, %v894
    %v925 = vpack.c.b16 %v897, %v896
    %v926 = vpack.c.b16 %v899, %v898
    %v927 = vpack.c.b16 %v901, %v900
    %v928 = vpack.c.b16 %v903, %v902
    %v929 = vpack.c.b16 %v905, %v904
    %954 = vmatprep.subr.bf16.mxu0 0
    %955 = vmatpush1.bf16.msra.mxu0 %v906
    %956 = vmatprep.subr.bf16.mxu0 0
    %957 = vmatpush1.bf16.msra.mxu0 %v907
    %958 = vmatprep.subr.bf16.mxu0 0
    %959 = vmatpush1.bf16.msra.mxu0 %v908
    %960 = vmatprep.subr.bf16.mxu0 0
    %961 = vmatpush1.bf16.msra.mxu0 %v909
    %962 = vmatprep.subr.bf16.mxu0 0
    %963 = vmatpush1.bf16.msra.mxu0 %v910
    %964 = vmatprep.subr.bf16.mxu0 0
    %965 = vmatpush1.bf16.msra.mxu0 %v911
    %966 = vmatprep.subr.bf16.mxu0 0
    %967 = vmatpush1.bf16.msra.mxu0 %v912
    %968 = vmatprep.subr.bf16.mxu0 0
    %969 = vmatpush1.bf16.msra.mxu0 %v913
    %970 = vmatprep.subr.bf16.mxu0 0
    %971 = vmatpush1.bf16.msra.mxu0 %v914
    %972 = vmatprep.subr.bf16.mxu0 0
    %973 = vmatpush1.bf16.msra.mxu0 %v915
    %974 = vmatprep.subr.bf16.mxu0 0
    %975 = vmatpush1.bf16.msra.mxu0 %v916
    %976 = vmatprep.subr.bf16.mxu0 0
    %977 = vmatpush1.bf16.msra.mxu0 %v917
    %978 = vmatprep.subr.bf16.mxu0 0
    %979 = vmatpush1.bf16.msra.mxu0 %v918
    %980 = vmatprep.subr.bf16.mxu0 0
    %981 = vmatpush1.bf16.msra.mxu0 %v919
    %982 = vmatprep.subr.bf16.mxu0 0
    %983 = vmatpush1.bf16.msra.mxu0 %v920
    %984 = vmatprep.subr.bf16.mxu0 0
    %985 = vmatpush1.bf16.msra.mxu0 %v921
    %986 = vmatprep.mubr.bf16.mxu0 %v710
    %987 = vmatmul.mubr.bf16.gmra.mrb[0].mxu0 %v739
    %v988 = vpop.f32.mrb[0].mxu0
    %v989 = vadd.f32 %v808, %v988
    %v990 = vpop.f32.mrb[0].mxu0
    %v991 = vpop.f32.mrb[0].mxu0
    %v992 = vadd.f32 %v808, %v991
    %v993 = vpop.f32.mrb[0].mxu0
    %994 = vmatprep.mubr.bf16.mxu0 %v711
    %995 = vmatmul.mubr.bf16.gmra.mrb[0].mxu0 %v727
    %v996 = vpop.f32.mrb[0].mxu0
    %v997 = vadd.f32 %v808, %v996
    %v998 = vpop.f32.mrb[0].mxu0
    %v999 = vpop.f32.mrb[0].mxu0
    %v1000 = vadd.f32 %v808, %v999
    %v1001 = vpop.f32.mrb[0].mxu0
    %1002 = vmatprep.mubr.bf16.mxu0 %v712
    %1003 = vmatmul.mubr.bf16.gmra.mrb[0].mxu0 %v735
    %v1004 = vpop.f32.mrb[0].mxu0
    %v1005 = vadd.f32 %v808, %v1004
    %v1006 = vpop.f32.mrb[0].mxu0
    %v1007 = vpop.f32.mrb[0].mxu0
    %v1008 = vadd.f32 %v808, %v1007
    %v1009 = vpop.f32.mrb[0].mxu0
    %1010 = vdwg.mxu0
    %1011 = vmatprep.subr.bf16.mxu0 0
    %1012 = vmatpush1.bf16.msra.mxu0 %v922
    %1013 = vmatprep.subr.bf16.mxu0 0
    %1014 = vmatpush1.bf16.msra.mxu0 %v923
    %1015 = vmatprep.subr.bf16.mxu0 0
    %1016 = vmatpush1.bf16.msra.mxu0 %v924
    %1017 = vmatprep.subr.bf16.mxu0 0
    %1018 = vmatpush1.bf16.msra.mxu0 %v925
    %1019 = vmatprep.subr.bf16.mxu0 0
    %1020 = vmatpush1.bf16.msra.mxu0 %v926
    %1021 = vmatprep.subr.bf16.mxu0 0
    %1022 = vmatpush1.bf16.msra.mxu0 %v927
    %1023 = vmatprep.subr.bf16.mxu0 0
    %1024 = vmatpush1.bf16.msra.mxu0 %v928
    %1025 = vmatprep.subr.bf16.mxu0 0
    %1026 = vmatpush1.bf16.msra.mxu0 %v929
    %1027 = vmatprep.subr.bf16.mxu0 0
    %1028 = vmatpush1.bf16.msra.mxu0 0
    %1029 = vmatprep.subr.bf16.mxu0 0
    %1030 = vmatpush1.bf16.msra.mxu0 0
    %1031 = vmatprep.subr.bf16.mxu0 0
    %1032 = vmatpush1.bf16.msra.mxu0 0
    %1033 = vmatprep.subr.bf16.mxu0 0
    %1034 = vmatpush1.bf16.msra.mxu0 0
    %1035 = vmatprep.subr.bf16.mxu0 0
    %1036 = vmatpush1.bf16.msra.mxu0 0
    %1037 = vmatprep.subr.bf16.mxu0 0
    %1038 = vmatpush1.bf16.msra.mxu0 0
    %1039 = vmatprep.subr.bf16.mxu0 0
    %1040 = vmatpush1.bf16.msra.mxu0 0
    %1041 = vmatprep.subr.bf16.mxu0 0
    %1042 = vmatpush1.bf16.msra.mxu0 0
    %1043 = vmatprep.mubr.bf16.mxu0 0
    %1044 = vmatmul.mubr.bf16.gmra.mrb[0].mxu0 %v744
    %v1045 = vpop.f32.mrb[0].mxu0
    %v1046 = vadd.f32 %v989, %v1045
    %v1047 = vpop.f32.mrb[0].mxu0
    %v1048 = vpop.f32.mrb[0].mxu0
    %v1049 = vadd.f32 %v992, %v1048
    %v1050 = vpop.f32.mrb[0].mxu0
    %1051 = vmatprep.mubr.bf16.mxu0 0
    %1052 = vmatmul.mubr.bf16.gmra.mrb[0].mxu0 %v747
    %v1053 = vpop.f32.mrb[0].mxu0
    %v1054 = vadd.f32 %v997, %v1053
    %v1055 = vpop.f32.mrb[0].mxu0
    %v1056 = vpop.f32.mrb[0].mxu0
    %v1057 = vadd.f32 %v1000, %v1056
    %v1058 = vpop.f32.mrb[0].mxu0
    %1059 = vmatprep.mubr.bf16.mxu0 0
    %1060 = vmatmul.mubr.bf16.gmra.mrb[0].mxu0 %v754
    %v1061 = vpop.f32.mrb[0].mxu0
    %v1062 = vadd.f32 %v1005, %v1061
    %v1063 = vpop.f32.mrb[0].mxu0
    %v1064 = vpop.f32.mrb[0].mxu0
    %v1065 = vadd.f32 %v1008, %v1064
    %v1066 = vpop.f32.mrb[0].mxu0
    %1067 = vdwg.mxu0
    %v1068 = vmul.f32 %v1046, 0.1
    %v1069 = vmul.f32 %v1049, 0.1
    %v1070 = vmul.f32 %v1054, 0.1
    %v1071 = vmul.f32 %v1057, 0.1
    %v1072 = vmul.f32 %v1062, 0.1
    %v1073 = vmul.f32 %v1065, 0.1
    %v1074 = vmax.f32 %v1046, %v1068
    %v1075 = vmax.f32 %v1049, %v1069
    %v1076 = vmax.f32 %v1054, %v1070
    %v1077 = vmax.f32 %v1057, %v1071
    %v1078 = vmax.f32 %v1062, %v1072
    %v1079 = vmax.f32 %v1065, %v1073
    %v1080 = vsel %vm345, %v1074, 0.0
    %v1081 = vsel %vm346, %v1075, 0.0
    %v1082 = vsel %vm347, %v1076, 0.0
    %v1083 = vsel %vm348, %v1077, 0.0
    %v1084 = vsel %vm349, %v1078, 0.0
    %v1085 = vsel %vm350, %v1079, 0.0
    %v1086 = vunpack.c.l.bf16 %v561
    %v1087 = vunpack.c.h.bf16 %v561
    %v1088 = vunpack.c.l.bf16 %v562
    %v1089 = vunpack.c.h.bf16 %v562
    %v1090 = vunpack.c.l.bf16 %v563
    %v1091 = vunpack.c.h.bf16 %v563
    %v1092 = vadd.f32 %v1086, %v1080
    %v1093 = vadd.f32 %v1087, %v1081
    %v1094 = vadd.f32 %v1088, %v1082
    %v1095 = vadd.f32 %v1089, %v1083
    %v1096 = vadd.f32 %v1090, %v1084
    %v1097 = vadd.f32 %v1091, %v1085
    %v1098 = vpack.c.bf16 %v1093, %v1092
    %v1099 = vpack.c.bf16 %v1095, %v1094
    %v1100 = vpack.c.bf16 %v1097, %v1096
    %s1101 = scalar_lea.vmem [#allocation8], 64
    %v1102 = vld [vmem:[%s1101] sm:$0xf]
    %v1103 = vld [vmem:[%s1101 + $0x4] sm:$0xf]
    %v1104 = vld [vmem:[%s1101 + $0x8] sm:$0xf]
    %v1105 = vld [vmem:[%s1101 + $0xc] sm:$0xf]
    %v1106 = vld [vmem:[%s1101 + $0x10] sm:$0xf]
    %v1107 = vld [vmem:[%s1101 + $0x14] sm:$0xf]
    %v1108 = vld [vmem:[%s1101 + $0x18] sm:$0xf]
    %v1109 = vld [vmem:[%s1101 + $0x1c] sm:$0xf]
    %v1110 = vld [vmem:[%s1101 + $0x20] sm:$0xf]
    %v1111 = vld [vmem:[%s1101 + $0x24] sm:$0xf]
    %v1112 = vld [vmem:[%s1101 + $0x28] sm:$0xf]
    %v1113 = vld [vmem:[%s1101 + $0x2c] sm:$0xf]
    %v1114 = vld [vmem:[%s1101 + $0x30] sm:$0xf]
    %v1115 = vld [vmem:[%s1101 + $0x34] sm:$0xf]
    %v1116 = vld [vmem:[%s1101 + $0x38] sm:$0xf]
    %v1117 = vld [vmem:[%s1101 + $0x3c] sm:$0xf]
    %s1118 = scalar_lea.vmem [#allocation10], 1
    %v1119 = vld [vmem:[%s1118] sm:$0x1]
    %v1121 = vlaneseq
    %v1122 = vshrl.u32 %v1121, 7
    %v1123 = vsub.s32 0, %v1122
    %v1124 = vrot.slane %v1119, %v1123
    %v1142 = vunpack.c.l.b16 %v1102
    %v1143 = vunpack.c.l.b16 %v1103
    %v1144 = vunpack.c.l.b16 %v1104
    %v1145 = vunpack.c.l.b16 %v1105
    %v1146 = vunpack.c.l.b16 %v1106
    %v1147 = vunpack.c.l.b16 %v1107
    %v1148 = vunpack.c.l.b16 %v1108
    %v1149 = vunpack.c.l.b16 %v1109
    %v1150 = vunpack.c.l.b16 %v1110
    %v1151 = vunpack.c.l.b16 %v1111
    %v1152 = vunpack.c.l.b16 %v1112
    %v1153 = vunpack.c.l.b16 %v1113
    %v1154 = vunpack.c.l.b16 %v1114
    %v1155 = vunpack.c.l.b16 %v1115
    %v1156 = vunpack.c.l.b16 %v1116
    %v1157 = vunpack.c.l.b16 %v1117
    %v1158 = vpack.c.b16 %v1143, %v1142
    %v1159 = vpack.c.b16 %v1145, %v1144
    %v1160 = vpack.c.b16 %v1147, %v1146
    %v1161 = vpack.c.b16 %v1149, %v1148
    %v1162 = vpack.c.b16 %v1151, %v1150
    %v1163 = vpack.c.b16 %v1153, %v1152
    %v1164 = vpack.c.b16 %v1155, %v1154
    %v1165 = vpack.c.b16 %v1157, %v1156
    %1174 = vmatprep.subr.bf16.mxu0 0
    %1175 = vmatpush1.bf16.msra.mxu0 %v1158
    %1176 = vmatprep.subr.bf16.mxu0 0
    %1177 = vmatpush1.bf16.msra.mxu0 %v1159
    %1178 = vmatprep.subr.bf16.mxu0 0
    %1179 = vmatpush1.bf16.msra.mxu0 %v1160
    %1180 = vmatprep.subr.bf16.mxu0 0
    %1181 = vmatpush1.bf16.msra.mxu0 %v1161
    %1182 = vmatprep.subr.bf16.mxu0 0
    %1183 = vmatpush1.bf16.msra.mxu0 %v1162
    %1184 = vmatprep.subr.bf16.mxu0 0
    %1185 = vmatpush1.bf16.msra.mxu0 %v1163
    %1186 = vmatprep.subr.bf16.mxu0 0
    %1187 = vmatpush1.bf16.msra.mxu0 %v1164
    %1188 = vmatprep.subr.bf16.mxu0 0
    %1189 = vmatpush1.bf16.msra.mxu0 %v1165
    %1190 = vmatprep.subr.bf16.mxu0 0
    %1191 = vmatpush1.bf16.msra.mxu0 0
    %1192 = vmatprep.subr.bf16.mxu0 0
    %1193 = vmatpush1.bf16.msra.mxu0 0
    %1194 = vmatprep.subr.bf16.mxu0 0
    %1195 = vmatpush1.bf16.msra.mxu0 0
    %1196 = vmatprep.subr.bf16.mxu0 0
    %1197 = vmatpush1.bf16.msra.mxu0 0
    %1198 = vmatprep.subr.bf16.mxu0 0
    %1199 = vmatpush1.bf16.msra.mxu0 0
    %1200 = vmatprep.subr.bf16.mxu0 0
    %1201 = vmatpush1.bf16.msra.mxu0 0
    %1202 = vmatprep.subr.bf16.mxu0 0
    %1203 = vmatpush1.bf16.msra.mxu0 0
    %1204 = vmatprep.subr.bf16.mxu0 0
    %1205 = vmatpush1.bf16.msra.mxu0 0
    %1206 = vmatprep.mubr.bf16.mxu0 0
    %1207 = vmatmul.mubr.bf16.gmra.mrb[0].mxu0 %v1098
    %v1208 = vpop.f32.mrb[0].mxu0
    %v1209 = vadd.f32 %v1124, %v1208
    %v1210 = vpop.f32.mrb[0].mxu0
    %v1211 = vpop.f32.mrb[0].mxu0
    %v1212 = vadd.f32 %v1124, %v1211
    %v1213 = vpop.f32.mrb[0].mxu0
    %1214 = vmatprep.mubr.bf16.mxu0 0
    %1215 = vmatmul.mubr.bf16.gmra.mrb[0].mxu0 %v1099
    %v1216 = vpop.f32.mrb[0].mxu0
    %v1217 = vadd.f32 %v1124, %v1216
    %v1218 = vpop.f32.mrb[0].mxu0
    %v1219 = vpop.f32.mrb[0].mxu0
    %v1220 = vadd.f32 %v1124, %v1219
    %v1221 = vpop.f32.mrb[0].mxu0
    %1222 = vmatprep.mubr.bf16.mxu0 0
    %1223 = vmatmul.mubr.bf16.gmra.mrb[0].mxu0 %v1100
    %v1224 = vpop.f32.mrb[0].mxu0
    %v1225 = vadd.f32 %v1124, %v1224
    %v1226 = vpop.f32.mrb[0].mxu0
    %v1227 = vpop.f32.mrb[0].mxu0
    %v1228 = vadd.f32 %v1124, %v1227
    %v1229 = vpop.f32.mrb[0].mxu0
    %1230 = vdwg.mxu0
    %v1231 = vmul.f32 %v1209, 0.1
    %v1232 = vmul.f32 %v1212, 0.1
    %v1233 = vmul.f32 %v1217, 0.1
    %v1234 = vmul.f32 %v1220, 0.1
    %v1235 = vmul.f32 %v1225, 0.1
    %v1236 = vmul.f32 %v1228, 0.1
    %v1237 = vmax.f32 %v1209, %v1231
    %v1238 = vmax.f32 %v1212, %v1232
    %v1239 = vmax.f32 %v1217, %v1233
    %v1240 = vmax.f32 %v1220, %v1234
    %v1241 = vmax.f32 %v1225, %v1235
    %v1242 = vmax.f32 %v1228, %v1236
    %v1243 = vsel %vm345, %v1237, 0.0
    %v1244 = vsel %vm346, %v1238, 0.0
    %v1245 = vsel %vm347, %v1239, 0.0
    %v1246 = vsel %vm348, %v1240, 0.0
    %v1247 = vsel %vm349, %v1241, 0.0
    %v1248 = vsel %vm350, %v1242, 0.0
    %v1249 = vpack.c.bf16 %v1244, %v1243
    %v1250 = vpack.c.bf16 %v1246, %v1245
    %v1251 = vpack.c.bf16 %v1248, %v1247
    %v1253 = vshrl.u32 %v1249, 16
    %v1255 = vrot.slane %v1253, 7
    %v1256 = vshll.u32 %v1249, 16
    %v1258 = vor.u32 %v1255, %v1256
    %v1260 = vshrl.u32 %v1250, 16
    %v1262 = vrot.slane %v1260, 7
    %v1263 = vshll.u32 %v1250, 16
    %v1265 = vor.u32 %v1262, %v1263
    %v1266 = vsel %vm281, %v1255, %v1265
    %v1268 = vshrl.u32 %v1251, 16
    %v1270 = vrot.slane %v1268, 7
    %v1271 = vshll.u32 %v1251, 16
    %v1273 = vor.u32 %v1270, %v1271
    %v1274 = vsel %vm281, %v1262, %v1273
    %v1278 = vsel %vm282, 0, %v1258
    %v1279 = vrot.slane %v1256, 1
    %v1280 = vor.u32 %v1253, %v1279
    %v1281 = vrot.slane %v1263, 1
    %v1282 = vsel %vm740, %v1280, %v1281
    %v1283 = vor.u32 %v1260, %v1281
    %v1284 = vrot.slane %v1271, 1
    %v1285 = vsel %vm740, %v1283, %v1284
    %v1286 = vor.u32 %v1268, %v1284
    %v1290 = vsel %vm753, %v1286, 0
    %s1291 = scalar_lea.vmem [#allocation11], 192
    %v1292 = vld [vmem:[%s1291] sm:$0xf]
    %v1293 = vld [vmem:[%s1291 + $0x4] sm:$0xf]
    %v1294 = vld [vmem:[%s1291 + $0x8] sm:$0xf]
    %v1295 = vld [vmem:[%s1291 + $0xc] sm:$0xf]
    %v1296 = vld [vmem:[%s1291 + $0x10] sm:$0xf]
    %v1297 = vld [vmem:[%s1291 + $0x14] sm:$0xf]
    %v1298 = vld [vmem:[%s1291 + $0x18] sm:$0xf]
    %v1299 = vld [vmem:[%s1291 + $0x1c] sm:$0xf]
    %v1300 = vld [vmem:[%s1291 + $0x20] sm:$0xf]
    %v1301 = vld [vmem:[%s1291 + $0x24] sm:$0xf]
    %v1302 = vld [vmem:[%s1291 + $0x28] sm:$0xf]
    %v1303 = vld [vmem:[%s1291 + $0x2c] sm:$0xf]
    %v1304 = vld [vmem:[%s1291 + $0x30] sm:$0xf]
    %v1305 = vld [vmem:[%s1291 + $0x34] sm:$0xf]
    %v1306 = vld [vmem:[%s1291 + $0x38] sm:$0xf]
    %v1307 = vld [vmem:[%s1291 + $0x3c] sm:$0xf]
    %v1308 = vld [vmem:[%s1291 + $0x40] sm:$0xf]
    %v1309 = vld [vmem:[%s1291 + $0x44] sm:$0xf]
    %v1310 = vld [vmem:[%s1291 + $0x48] sm:$0xf]
    %v1311 = vld [vmem:[%s1291 + $0x4c] sm:$0xf]
    %v1312 = vld [vmem:[%s1291 + $0x50] sm:$0xf]
    %v1313 = vld [vmem:[%s1291 + $0x54] sm:$0xf]
    %v1314 = vld [vmem:[%s1291 + $0x58] sm:$0xf]
    %v1315 = vld [vmem:[%s1291 + $0x5c] sm:$0xf]
    %v1316 = vld [vmem:[%s1291 + $0x60] sm:$0xf]
    %v1317 = vld [vmem:[%s1291 + $0x64] sm:$0xf]
    %v1318 = vld [vmem:[%s1291 + $0x68] sm:$0xf]
    %v1319 = vld [vmem:[%s1291 + $0x6c] sm:$0xf]
    %v1320 = vld [vmem:[%s1291 + $0x70] sm:$0xf]
    %v1321 = vld [vmem:[%s1291 + $0x74] sm:$0xf]
    %v1322 = vld [vmem:[%s1291 + $0x78] sm:$0xf]
    %v1323 = vld [vmem:[%s1291 + $0x7c] sm:$0xf]
    %v1324 = vld [vmem:[%s1291 + $0x80] sm:$0xf]
    %v1325 = vld [vmem:[%s1291 + $0x84] sm:$0xf]
    %v1326 = vld [vmem:[%s1291 + $0x88] sm:$0xf]
    %v1327 = vld [vmem:[%s1291 + $0x8c] sm:$0xf]
    %v1328 = vld [vmem:[%s1291 + $0x90] sm:$0xf]
    %v1329 = vld [vmem:[%s1291 + $0x94] sm:$0xf]
    %v1330 = vld [vmem:[%s1291 + $0x98] sm:$0xf]
    %v1331 = vld [vmem:[%s1291 + $0x9c] sm:$0xf]
    %v1332 = vld [vmem:[%s1291 + $0xa0] sm:$0xf]
    %v1333 = vld [vmem:[%s1291 + $0xa4] sm:$0xf]
    %v1334 = vld [vmem:[%s1291 + $0xa8] sm:$0xf]
    %v1335 = vld [vmem:[%s1291 + $0xac] sm:$0xf]
    %v1336 = vld [vmem:[%s1291 + $0xb0] sm:$0xf]
    %v1337 = vld [vmem:[%s1291 + $0xb4] sm:$0xf]
    %v1338 = vld [vmem:[%s1291 + $0xb8] sm:$0xf]
    %v1339 = vld [vmem:[%s1291 + $0xbc] sm:$0xf]
    %s1340 = scalar_lea.vmem [#allocation13], 1
    %v1341 = vld [vmem:[%s1340] sm:$0x1]
    %v1343 = vlaneseq
    %v1344 = vshrl.u32 %v1343, 7
    %v1345 = vsub.s32 0, %v1344
    %v1346 = vrot.slane %v1341, %v1345
    %v1396 = vunpack.c.l.b16 %v1292
    %v1397 = vunpack.c.l.b16 %v1293
    %v1398 = vunpack.c.l.b16 %v1294
    %v1399 = vunpack.c.l.b16 %v1295
    %v1400 = vunpack.c.l.b16 %v1296
    %v1401 = vunpack.c.l.b16 %v1297
    %v1402 = vunpack.c.l.b16 %v1298
    %v1403 = vunpack.c.l.b16 %v1299
    %v1404 = vunpack.c.l.b16 %v1300
    %v1405 = vunpack.c.l.b16 %v1301
    %v1406 = vunpack.c.l.b16 %v1302
    %v1407 = vunpack.c.l.b16 %v1303
    %v1408 = vunpack.c.l.b16 %v1304
    %v1409 = vunpack.c.l.b16 %v1305
    %v1410 = vunpack.c.l.b16 %v1306
    %v1411 = vunpack.c.l.b16 %v1307
    %v1412 = vunpack.c.l.b16 %v1308
    %v1413 = vunpack.c.l.b16 %v1309
    %v1414 = vunpack.c.l.b16 %v1310
    %v1415 = vunpack.c.l.b16 %v1311
    %v1416 = vunpack.c.l.b16 %v1312
    %v1417 = vunpack.c.l.b16 %v1313
    %v1418 = vunpack.c.l.b16 %v1314
    %v1419 = vunpack.c.l.b16 %v1315
    %v1420 = vunpack.c.l.b16 %v1316
    %v1421 = vunpack.c.l.b16 %v1317
    %v1422 = vunpack.c.l.b16 %v1318
    %v1423 = vunpack.c.l.b16 %v1319
    %v1424 = vunpack.c.l.b16 %v1320
    %v1425 = vunpack.c.l.b16 %v1321
    %v1426 = vunpack.c.l.b16 %v1322
    %v1427 = vunpack.c.l.b16 %v1323
    %v1428 = vunpack.c.l.b16 %v1324
    %v1429 = vunpack.c.l.b16 %v1325
    %v1430 = vunpack.c.l.b16 %v1326
    %v1431 = vunpack.c.l.b16 %v1327
    %v1432 = vunpack.c.l.b16 %v1328
    %v1433 = vunpack.c.l.b16 %v1329
    %v1434 = vunpack.c.l.b16 %v1330
    %v1435 = vunpack.c.l.b16 %v1331
    %v1436 = vunpack.c.l.b16 %v1332
    %v1437 = vunpack.c.l.b16 %v1333
    %v1438 = vunpack.c.l.b16 %v1334
    %v1439 = vunpack.c.l.b16 %v1335
    %v1440 = vunpack.c.l.b16 %v1336
    %v1441 = vunpack.c.l.b16 %v1337
    %v1442 = vunpack.c.l.b16 %v1338
    %v1443 = vunpack.c.l.b16 %v1339
    %v1444 = vpack.c.b16 %v1397, %v1396
    %v1445 = vpack.c.b16 %v1399, %v1398
    %v1446 = vpack.c.b16 %v1401, %v1400
    %v1447 = vpack.c.b16 %v1403, %v1402
    %v1448 = vpack.c.b16 %v1405, %v1404
    %v1449 = vpack.c.b16 %v1407, %v1406
    %v1450 = vpack.c.b16 %v1409, %v1408
    %v1451 = vpack.c.b16 %v1411, %v1410
    %v1452 = vpack.c.b16 %v1413, %v1412
    %v1453 = vpack.c.b16 %v1415, %v1414
    %v1454 = vpack.c.b16 %v1417, %v1416
    %v1455 = vpack.c.b16 %v1419, %v1418
    %v1456 = vpack.c.b16 %v1421, %v1420
    %v1457 = vpack.c.b16 %v1423, %v1422
    %v1458 = vpack.c.b16 %v1425, %v1424
    %v1459 = vpack.c.b16 %v1427, %v1426
    %v1460 = vpack.c.b16 %v1429, %v1428
    %v1461 = vpack.c.b16 %v1431, %v1430
    %v1462 = vpack.c.b16 %v1433, %v1432
    %v1463 = vpack.c.b16 %v1435, %v1434
    %v1464 = vpack.c.b16 %v1437, %v1436
    %v1465 = vpack.c.b16 %v1439, %v1438
    %v1466 = vpack.c.b16 %v1441, %v1440
    %v1467 = vpack.c.b16 %v1443, %v1442
    %1492 = vmatprep.subr.bf16.mxu0 0
    %1493 = vmatpush1.bf16.msra.mxu0 %v1444
    %1494 = vmatprep.subr.bf16.mxu0 0
    %1495 = vmatpush1.bf16.msra.mxu0 %v1445
    %1496 = vmatprep.subr.bf16.mxu0 0
    %1497 = vmatpush1.bf16.msra.mxu0 %v1446
    %1498 = vmatprep.subr.bf16.mxu0 0
    %1499 = vmatpush1.bf16.msra.mxu0 %v1447
    %1500 = vmatprep.subr.bf16.mxu0 0
    %1501 = vmatpush1.bf16.msra.mxu0 %v1448
    %1502 = vmatprep.subr.bf16.mxu0 0
    %1503 = vmatpush1.bf16.msra.mxu0 %v1449
    %1504 = vmatprep.subr.bf16.mxu0 0
    %1505 = vmatpush1.bf16.msra.mxu0 %v1450
    %1506 = vmatprep.subr.bf16.mxu0 0
    %1507 = vmatpush1.bf16.msra.mxu0 %v1451
    %1508 = vmatprep.subr.bf16.mxu0 0
    %1509 = vmatpush1.bf16.msra.mxu0 %v1452
    %1510 = vmatprep.subr.bf16.mxu0 0
    %1511 = vmatpush1.bf16.msra.mxu0 %v1453
    %1512 = vmatprep.subr.bf16.mxu0 0
    %1513 = vmatpush1.bf16.msra.mxu0 %v1454
    %1514 = vmatprep.subr.bf16.mxu0 0
    %1515 = vmatpush1.bf16.msra.mxu0 %v1455
    %1516 = vmatprep.subr.bf16.mxu0 0
    %1517 = vmatpush1.bf16.msra.mxu0 %v1456
    %1518 = vmatprep.subr.bf16.mxu0 0
    %1519 = vmatpush1.bf16.msra.mxu0 %v1457
    %1520 = vmatprep.subr.bf16.mxu0 0
    %1521 = vmatpush1.bf16.msra.mxu0 %v1458
    %1522 = vmatprep.subr.bf16.mxu0 0
    %1523 = vmatpush1.bf16.msra.mxu0 %v1459
    %1524 = vmatprep.mubr.bf16.mxu0 %v1249
    %1525 = vmatmul.mubr.bf16.gmra.mrb[0].mxu0 %v1278
    %v1526 = vpop.f32.mrb[0].mxu0
    %v1527 = vadd.f32 %v1346, %v1526
    %v1528 = vpop.f32.mrb[0].mxu0
    %v1529 = vpop.f32.mrb[0].mxu0
    %v1530 = vadd.f32 %v1346, %v1529
    %v1531 = vpop.f32.mrb[0].mxu0
    %1532 = vmatprep.mubr.bf16.mxu0 %v1250
    %1533 = vmatmul.mubr.bf16.gmra.mrb[0].mxu0 %v1266
    %v1534 = vpop.f32.mrb[0].mxu0
    %v1535 = vadd.f32 %v1346, %v1534
    %v1536 = vpop.f32.mrb[0].mxu0
    %v1537 = vpop.f32.mrb[0].mxu0
    %v1538 = vadd.f32 %v1346, %v1537
    %v1539 = vpop.f32.mrb[0].mxu0
    %1540 = vmatprep.mubr.bf16.mxu0 %v1251
    %1541 = vmatmul.mubr.bf16.gmra.mrb[0].mxu0 %v1274
    %v1542 = vpop.f32.mrb[0].mxu0
    %v1543 = vadd.f32 %v1346, %v1542
    %v1544 = vpop.f32.mrb[0].mxu0
    %v1545 = vpop.f32.mrb[0].mxu0
    %v1546 = vadd.f32 %v1346, %v1545
    %v1547 = vpop.f32.mrb[0].mxu0
    %1548 = vdwg.mxu0
    %1549 = vmatprep.subr.bf16.mxu0 0
    %1550 = vmatpush1.bf16.msra.mxu0 %v1460
    %1551 = vmatprep.subr.bf16.mxu0 0
    %1552 = vmatpush1.bf16.msra.mxu0 %v1461
    %1553 = vmatprep.subr.bf16.mxu0 0
    %1554 = vmatpush1.bf16.msra.mxu0 %v1462
    %1555 = vmatprep.subr.bf16.mxu0 0
    %1556 = vmatpush1.bf16.msra.mxu0 %v1463
    %1557 = vmatprep.subr.bf16.mxu0 0
    %1558 = vmatpush1.bf16.msra.mxu0 %v1464
    %1559 = vmatprep.subr.bf16.mxu0 0
    %1560 = vmatpush1.bf16.msra.mxu0 %v1465
    %1561 = vmatprep.subr.bf16.mxu0 0
    %1562 = vmatpush1.bf16.msra.mxu0 %v1466
    %1563 = vmatprep.subr.bf16.mxu0 0
    %1564 = vmatpush1.bf16.msra.mxu0 %v1467
    %1565 = vmatprep.subr.bf16.mxu0 0
    %1566 = vmatpush1.bf16.msra.mxu0 0
    %1567 = vmatprep.subr.bf16.mxu0 0
    %1568 = vmatpush1.bf16.msra.mxu0 0
    %1569 = vmatprep.subr.bf16.mxu0 0
    %1570 = vmatpush1.bf16.msra.mxu0 0
    %1571 = vmatprep.subr.bf16.mxu0 0
    %1572 = vmatpush1.bf16.msra.mxu0 0
    %1573 = vmatprep.subr.bf16.mxu0 0
    %1574 = vmatpush1.bf16.msra.mxu0 0
    %1575 = vmatprep.subr.bf16.mxu0 0
    %1576 = vmatpush1.bf16.msra.mxu0 0
    %1577 = vmatprep.subr.bf16.mxu0 0
    %1578 = vmatpush1.bf16.msra.mxu0 0
    %1579 = vmatprep.subr.bf16.mxu0 0
    %1580 = vmatpush1.bf16.msra.mxu0 0
    %1581 = vmatprep.mubr.bf16.mxu0 0
    %1582 = vmatmul.mubr.bf16.gmra.mrb[0].mxu0 %v1282
    %v1583 = vpop.f32.mrb[0].mxu0
    %v1584 = vadd.f32 %v1527, %v1583
    %v1585 = vpop.f32.mrb[0].mxu0
    %v1586 = vpop.f32.mrb[0].mxu0
    %v1587 = vadd.f32 %v1530, %v1586
    %v1588 = vpop.f32.mrb[0].mxu0
    %1589 = vmatprep.mubr.bf16.mxu0 0
    %1590 = vmatmul.mubr.bf16.gmra.mrb[0].mxu0 %v1285
    %v1591 = vpop.f32.mrb[0].mxu0
    %v1592 = vadd.f32 %v1535, %v1591
    %v1593 = vpop.f32.mrb[0].mxu0
    %v1594 = vpop.f32.mrb[0].mxu0
    %v1595 = vadd.f32 %v1538, %v1594
    %v1596 = vpop.f32.mrb[0].mxu0
    %1597 = vmatprep.mubr.bf16.mxu0 0
    %1598 = vmatmul.mubr.bf16.gmra.mrb[0].mxu0 %v1290
    %v1599 = vpop.f32.mrb[0].mxu0
    %v1600 = vadd.f32 %v1543, %v1599
    %v1601 = vpop.f32.mrb[0].mxu0
    %v1602 = vpop.f32.mrb[0].mxu0
    %v1603 = vadd.f32 %v1546, %v1602
    %v1604 = vpop.f32.mrb[0].mxu0
    %1605 = vdwg.mxu0
    %v1606 = vmul.f32 %v1584, 0.1
    %v1607 = vmul.f32 %v1587, 0.1
    %v1608 = vmul.f32 %v1592, 0.1
    %v1609 = vmul.f32 %v1595, 0.1
    %v1610 = vmul.f32 %v1600, 0.1
    %v1611 = vmul.f32 %v1603, 0.1
    %v1612 = vmax.f32 %v1584, %v1606
    %v1613 = vmax.f32 %v1587, %v1607
    %v1614 = vmax.f32 %v1592, %v1608
    %v1615 = vmax.f32 %v1595, %v1609
    %v1616 = vmax.f32 %v1600, %v1610
    %v1617 = vmax.f32 %v1603, %v1611
    %v1618 = vsel %vm345, %v1612, 0.0
    %v1619 = vsel %vm346, %v1613, 0.0
    %v1620 = vsel %vm347, %v1614, 0.0
    %v1621 = vsel %vm348, %v1615, 0.0
    %v1622 = vsel %vm349, %v1616, 0.0
    %v1623 = vsel %vm350, %v1617, 0.0
    %v1624 = vunpack.c.l.bf16 %v1098
    %v1625 = vunpack.c.h.bf16 %v1098
    %v1626 = vunpack.c.l.bf16 %v1099
    %v1627 = vunpack.c.h.bf16 %v1099
    %v1628 = vunpack.c.l.bf16 %v1100
    %v1629 = vunpack.c.h.bf16 %v1100
    %v1630 = vadd.f32 %v1624, %v1618
    %v1631 = vadd.f32 %v1625, %v1619
    %v1632 = vadd.f32 %v1626, %v1620
    %v1633 = vadd.f32 %v1627, %v1621
    %v1634 = vadd.f32 %v1628, %v1622
    %v1635 = vadd.f32 %v1629, %v1623
    %v1636 = vpack.c.bf16 %v1631, %v1630
    %v1637 = vpack.c.bf16 %v1633, %v1632
    %v1638 = vpack.c.bf16 %v1635, %v1634
    %v1639 = vld [vmem:[#allocation14] sm:$0xf]
    %v1640 = vld [vmem:[#allocation14 + $0x4] sm:$0xf]
    %v1641 = vld [vmem:[#allocation14 + $0x8] sm:$0xf]
    %v1642 = vld [vmem:[#allocation14 + $0xc] sm:$0xf]
    %v1643 = vld [vmem:[#allocation14 + $0x10] sm:$0xf]
    %v1644 = vld [vmem:[#allocation14 + $0x14] sm:$0xf]
    %v1645 = vld [vmem:[#allocation14 + $0x18] sm:$0xf]
    %v1646 = vld [vmem:[#allocation14 + $0x1c] sm:$0xf]
    %v1647 = vld [vmem:[#allocation14 + $0x20] sm:$0xf]
    %v1648 = vld [vmem:[#allocation14 + $0x24] sm:$0xf]
    %v1649 = vld [vmem:[#allocation14 + $0x28] sm:$0xf]
    %v1650 = vld [vmem:[#allocation14 + $0x2c] sm:$0xf]
    %v1651 = vld [vmem:[#allocation14 + $0x30] sm:$0xf]
    %v1652 = vld [vmem:[#allocation14 + $0x34] sm:$0xf]
    %v1653 = vld [vmem:[#allocation14 + $0x38] sm:$0xf]
    %v1654 = vld [vmem:[#allocation14 + $0x3c] sm:$0xf]
    %v1655 = vld [vmem:[#allocation16] sm:$0x1]
    %v1657 = vlaneseq
    %v1658 = vshrl.u32 %v1657, 7
    %v1659 = vsub.s32 0, %v1658
    %v1660 = vrot.slane %v1655, %v1659
    %v1678 = vunpack.c.l.b16 %v1639
    %v1679 = vunpack.c.l.b16 %v1640
    %v1680 = vunpack.c.l.b16 %v1641
    %v1681 = vunpack.c.l.b16 %v1642
    %v1682 = vunpack.c.l.b16 %v1643
    %v1683 = vunpack.c.l.b16 %v1644
    %v1684 = vunpack.c.l.b16 %v1645
    %v1685 = vunpack.c.l.b16 %v1646
    %v1686 = vunpack.c.l.b16 %v1647
    %v1687 = vunpack.c.l.b16 %v1648
    %v1688 = vunpack.c.l.b16 %v1649
    %v1689 = vunpack.c.l.b16 %v1650
    %v1690 = vunpack.c.l.b16 %v1651
    %v1691 = vunpack.c.l.b16 %v1652
    %v1692 = vunpack.c.l.b16 %v1653
    %v1693 = vunpack.c.l.b16 %v1654
    %v1694 = vpack.c.b16 %v1679, %v1678
    %v1695 = vpack.c.b16 %v1681, %v1680
    %v1696 = vpack.c.b16 %v1683, %v1682
    %v1697 = vpack.c.b16 %v1685, %v1684
    %v1698 = vpack.c.b16 %v1687, %v1686
    %v1699 = vpack.c.b16 %v1689, %v1688
    %v1700 = vpack.c.b16 %v1691, %v1690
    %v1701 = vpack.c.b16 %v1693, %v1692
    %1710 = vmatprep.subr.bf16.mxu0 0
    %1711 = vmatpush1.bf16.msra.mxu0 %v1694
    %1712 = vmatprep.subr.bf16.mxu0 0
    %1713 = vmatpush1.bf16.msra.mxu0 %v1695
    %1714 = vmatprep.subr.bf16.mxu0 0
    %1715 = vmatpush1.bf16.msra.mxu0 %v1696
    %1716 = vmatprep.subr.bf16.mxu0 0
    %1717 = vmatpush1.bf16.msra.mxu0 %v1697
    %1718 = vmatprep.subr.bf16.mxu0 0
    %1719 = vmatpush1.bf16.msra.mxu0 %v1698
    %1720 = vmatprep.subr.bf16.mxu0 0
    %1721 = vmatpush1.bf16.msra.mxu0 %v1699
    %1722 = vmatprep.subr.bf16.mxu0 0
    %1723 = vmatpush1.bf16.msra.mxu0 %v1700
    %1724 = vmatprep.subr.bf16.mxu0 0
    %1725 = vmatpush1.bf16.msra.mxu0 %v1701
    %1726 = vmatprep.subr.bf16.mxu0 0
    %1727 = vmatpush1.bf16.msra.mxu0 0
    %1728 = vmatprep.subr.bf16.mxu0 0
    %1729 = vmatpush1.bf16.msra.mxu0 0
    %1730 = vmatprep.subr.bf16.mxu0 0
    %1731 = vmatpush1.bf16.msra.mxu0 0
    %1732 = vmatprep.subr.bf16.mxu0 0
    %1733 = vmatpush1.bf16.msra.mxu0 0
    %1734 = vmatprep.subr.bf16.mxu0 0
    %1735 = vmatpush1.bf16.msra.mxu0 0
    %1736 = vmatprep.subr.bf16.mxu0 0
    %1737 = vmatpush1.bf16.msra.mxu0 0
    %1738 = vmatprep.subr.bf16.mxu0 0
    %1739 = vmatpush1.bf16.msra.mxu0 0
    %1740 = vmatprep.subr.bf16.mxu0 0
    %1741 = vmatpush1.bf16.msra.mxu0 0
    %1742 = vmatprep.mubr.bf16.mxu0 0
    %1743 = vmatmul.mubr.bf16.gmra.mrb[0].mxu0 %v1636
    %v1744 = vpop.f32.mrb[0].mxu0
    %v1745 = vadd.f32 %v1660, %v1744
    %v1746 = vpop.f32.mrb[0].mxu0
    %v1747 = vpop.f32.mrb[0].mxu0
    %v1748 = vadd.f32 %v1660, %v1747
    %v1749 = vpop.f32.mrb[0].mxu0
    %1750 = vmatprep.mubr.bf16.mxu0 0
    %1751 = vmatmul.mubr.bf16.gmra.mrb[0].mxu0 %v1637
    %v1752 = vpop.f32.mrb[0].mxu0
    %v1753 = vadd.f32 %v1660, %v1752
    %v1754 = vpop.f32.mrb[0].mxu0
    %v1755 = vpop.f32.mrb[0].mxu0
    %v1756 = vadd.f32 %v1660, %v1755
    %v1757 = vpop.f32.mrb[0].mxu0
    %1758 = vmatprep.mubr.bf16.mxu0 0
    %1759 = vmatmul.mubr.bf16.gmra.mrb[0].mxu0 %v1638
    %v1760 = vpop.f32.mrb[0].mxu0
    %v1761 = vadd.f32 %v1660, %v1760
    %v1762 = vpop.f32.mrb[0].mxu0
    %v1763 = vpop.f32.mrb[0].mxu0
    %v1764 = vadd.f32 %v1660, %v1763
    %v1765 = vpop.f32.mrb[0].mxu0
    %1766 = vdwg.mxu0
    %v1767 = vmul.f32 %v1745, 0.1
    %v1768 = vmul.f32 %v1748, 0.1
    %v1769 = vmul.f32 %v1753, 0.1
    %v1770 = vmul.f32 %v1756, 0.1
    %v1771 = vmul.f32 %v1761, 0.1
    %v1772 = vmul.f32 %v1764, 0.1
    %v1773 = vmax.f32 %v1745, %v1767
    %v1774 = vmax.f32 %v1748, %v1768
    %v1775 = vmax.f32 %v1753, %v1769
    %v1776 = vmax.f32 %v1756, %v1770
    %v1777 = vmax.f32 %v1761, %v1771
    %v1778 = vmax.f32 %v1764, %v1772
    %v1779 = vpack.c.bf16 %v1774, %v1773
    %v1780 = vpack.c.bf16 %v1776, %v1775
    %v1781 = vpack.c.bf16 %v1778, %v1777
    %v1782 = vld [vmem:[#allocation17] sm:$0xf]
    %v1783 = vld [vmem:[#allocation17 + $0x4] sm:$0xf]
    %v1784 = vld [vmem:[#allocation17 + $0x8] sm:$0xf]
    %v1785 = vld [vmem:[#allocation17 + $0xc] sm:$0xf]
    %v1786 = vld [vmem:[#allocation17 + $0x10] sm:$0xf]
    %v1787 = vld [vmem:[#allocation17 + $0x14] sm:$0xf]
    %v1788 = vld [vmem:[#allocation17 + $0x18] sm:$0xf]
    %v1789 = vld [vmem:[#allocation17 + $0x1c] sm:$0xf]
    %v1790 = vld [vmem:[#allocation17 + $0x20] sm:$0xf]
    %v1791 = vld [vmem:[#allocation17 + $0x24] sm:$0xf]
    %v1792 = vld [vmem:[#allocation17 + $0x28] sm:$0xf]
    %v1793 = vld [vmem:[#allocation17 + $0x2c] sm:$0xf]
    %v1794 = vld [vmem:[#allocation17 + $0x30] sm:$0xf]
    %v1795 = vld [vmem:[#allocation17 + $0x34] sm:$0xf]
    %v1796 = vld [vmem:[#allocation17 + $0x38] sm:$0xf]
    %v1797 = vld [vmem:[#allocation17 + $0x3c] sm:$0xf]
    %v1798 = vld [vmem:[#allocation17 + $0x40] sm:$0xf]
    %v1799 = vld [vmem:[#allocation17 + $0x44] sm:$0xf]
    %v1800 = vld [vmem:[#allocation17 + $0x48] sm:$0xf]
    %v1801 = vld [vmem:[#allocation17 + $0x4c] sm:$0xf]
    %v1802 = vld [vmem:[#allocation17 + $0x50] sm:$0xf]
    %v1803 = vld [vmem:[#allocation17 + $0x54] sm:$0xf]
    %v1804 = vld [vmem:[#allocation17 + $0x58] sm:$0xf]
    %v1805 = vld [vmem:[#allocation17 + $0x5c] sm:$0xf]
    %v1806 = vld [vmem:[#allocation17 + $0x60] sm:$0xf]
    %v1807 = vld [vmem:[#allocation17 + $0x64] sm:$0xf]
    %v1808 = vld [vmem:[#allocation17 + $0x68] sm:$0xf]
    %v1809 = vld [vmem:[#allocation17 + $0x6c] sm:$0xf]
    %v1810 = vld [vmem:[#allocation17 + $0x70] sm:$0xf]
    %v1811 = vld [vmem:[#allocation17 + $0x74] sm:$0xf]
    %v1812 = vld [vmem:[#allocation17 + $0x78] sm:$0xf]
    %v1813 = vld [vmem:[#allocation17 + $0x7c] sm:$0xf]
    %v1814 = vld [vmem:[#allocation19] sm:$0x1]
    %v1816 = vlaneseq
    %v1817 = vshrl.u32 %v1816, 7
    %v1818 = vsub.s32 0, %v1817
    %v1819 = vrot.slane %v1814, %v1818
    %v1853 = vunpack.c.l.b16 %v1782
    %v1854 = vunpack.c.l.b16 %v1783
    %v1855 = vunpack.c.l.b16 %v1784
    %v1856 = vunpack.c.l.b16 %v1785
    %v1857 = vunpack.c.l.b16 %v1786
    %v1858 = vunpack.c.l.b16 %v1787
    %v1859 = vunpack.c.l.b16 %v1788
    %v1860 = vunpack.c.l.b16 %v1789
    %v1861 = vunpack.c.l.b16 %v1790
    %v1862 = vunpack.c.l.b16 %v1791
    %v1863 = vunpack.c.l.b16 %v1792
    %v1864 = vunpack.c.l.b16 %v1793
    %v1865 = vunpack.c.l.b16 %v1794
    %v1866 = vunpack.c.l.b16 %v1795
    %v1867 = vunpack.c.l.b16 %v1796
    %v1868 = vunpack.c.l.b16 %v1797
    %v1869 = vunpack.c.l.b16 %v1798
    %v1870 = vunpack.c.l.b16 %v1799
    %v1871 = vunpack.c.l.b16 %v1800
    %v1872 = vunpack.c.l.b16 %v1801
    %v1873 = vunpack.c.l.b16 %v1802
    %v1874 = vunpack.c.l.b16 %v1803
    %v1875 = vunpack.c.l.b16 %v1804
    %v1876 = vunpack.c.l.b16 %v1805
    %v1877 = vunpack.c.l.b16 %v1806
    %v1878 = vunpack.c.l.b16 %v1807
    %v1879 = vunpack.c.l.b16 %v1808
    %v1880 = vunpack.c.l.b16 %v1809
    %v1881 = vunpack.c.l.b16 %v1810
    %v1882 = vunpack.c.l.b16 %v1811
    %v1883 = vunpack.c.l.b16 %v1812
    %v1884 = vunpack.c.l.b16 %v1813
    %v1885 = vpack.c.b16 %v1854, %v1853
    %v1886 = vpack.c.b16 %v1856, %v1855
    %v1887 = vpack.c.b16 %v1858, %v1857
    %v1888 = vpack.c.b16 %v1860, %v1859
    %v1889 = vpack.c.b16 %v1862, %v1861
    %v1890 = vpack.c.b16 %v1864, %v1863
    %v1891 = vpack.c.b16 %v1866, %v1865
    %v1892 = vpack.c.b16 %v1868, %v1867
    %v1893 = vpack.c.b16 %v1870, %v1869
    %v1894 = vpack.c.b16 %v1872, %v1871
    %v1895 = vpack.c.b16 %v1874, %v1873
    %v1896 = vpack.c.b16 %v1876, %v1875
    %v1897 = vpack.c.b16 %v1878, %v1877
    %v1898 = vpack.c.b16 %v1880, %v1879
    %v1899 = vpack.c.b16 %v1882, %v1881
    %v1900 = vpack.c.b16 %v1884, %v1883
    %1917 = vmatprep.subr.bf16.mxu0 0
    %1918 = vmatpush1.bf16.msra.mxu0 %v1885
    %1919 = vmatprep.subr.bf16.mxu0 0
    %1920 = vmatpush1.bf16.msra.mxu0 %v1886
    %1921 = vmatprep.subr.bf16.mxu0 0
    %1922 = vmatpush1.bf16.msra.mxu0 %v1887
    %1923 = vmatprep.subr.bf16.mxu0 0
    %1924 = vmatpush1.bf16.msra.mxu0 %v1888
    %1925 = vmatprep.subr.bf16.mxu0 0
    %1926 = vmatpush1.bf16.msra.mxu0 %v1889
    %1927 = vmatprep.subr.bf16.mxu0 0
    %1928 = vmatpush1.bf16.msra.mxu0 %v1890
    %1929 = vmatprep.subr.bf16.mxu0 0
    %1930 = vmatpush1.bf16.msra.mxu0 %v1891
    %1931 = vmatprep.subr.bf16.mxu0 0
    %1932 = vmatpush1.bf16.msra.mxu0 %v1892
    %1933 = vmatprep.subr.bf16.mxu0 0
    %1934 = vmatpush1.bf16.msra.mxu0 %v1893
    %1935 = vmatprep.subr.bf16.mxu0 0
    %1936 = vmatpush1.bf16.msra.mxu0 %v1894
    %1937 = vmatprep.subr.bf16.mxu0 0
    %1938 = vmatpush1.bf16.msra.mxu0 %v1895
    %1939 = vmatprep.subr.bf16.mxu0 0
    %1940 = vmatpush1.bf16.msra.mxu0 %v1896
    %1941 = vmatprep.subr.bf16.mxu0 0
    %1942 = vmatpush1.bf16.msra.mxu0 %v1897
    %1943 = vmatprep.subr.bf16.mxu0 0
    %1944 = vmatpush1.bf16.msra.mxu0 %v1898
    %1945 = vmatprep.subr.bf16.mxu0 0
    %1946 = vmatpush1.bf16.msra.mxu0 %v1899
    %1947 = vmatprep.subr.bf16.mxu0 0
    %1948 = vmatpush1.bf16.msra.mxu0 %v1900
    %1949 = vmatprep.mubr.bf16.mxu0 %v284
    %1950 = vmatmul.mubr.bf16.gmra.mrb[0].mxu0 %v283
    %v1951 = vpop.f32.mrb[0].mxu0
    %v1952 = vadd.f32 %v1819, %v1951
    %v1953 = vpop.f32.mrb[0].mxu0
    %v1954 = vpop.f32.mrb[0].mxu0
    %v1955 = vadd.f32 %v1819, %v1954
    %v1956 = vpop.f32.mrb[0].mxu0
    %1957 = vmatprep.mubr.bf16.mxu0 %v299
    %1958 = vmatmul.mubr.bf16.gmra.mrb[0].mxu0 %v298
    %v1959 = vpop.f32.mrb[0].mxu0
    %v1960 = vadd.f32 %v1819, %v1959
    %v1961 = vpop.f32.mrb[0].mxu0
    %v1962 = vpop.f32.mrb[0].mxu0
    %v1963 = vadd.f32 %v1819, %v1962
    %v1964 = vpop.f32.mrb[0].mxu0
    %1965 = vmatprep.mubr.bf16.mxu0 %v301
    %1966 = vmatmul.mubr.bf16.gmra.mrb[0].mxu0 %v300
    %v1967 = vpop.f32.mrb[0].mxu0
    %v1968 = vadd.f32 %v1819, %v1967
    %v1969 = vpop.f32.mrb[0].mxu0
    %v1970 = vpop.f32.mrb[0].mxu0
    %v1971 = vadd.f32 %v1819, %v1970
    %v1972 = vpop.f32.mrb[0].mxu0
    %1973 = vdwg.mxu0
    %v1974 = vmul.f32 %v1952, 0.1
    %v1975 = vmul.f32 %v1955, 0.1
    %v1976 = vmul.f32 %v1960, 0.1
    %v1977 = vmul.f32 %v1963, 0.1
    %v1978 = vmul.f32 %v1968, 0.1
    %v1979 = vmul.f32 %v1971, 0.1
    %v1980 = vmax.f32 %v1952, %v1974
    %v1981 = vmax.f32 %v1955, %v1975
    %v1982 = vmax.f32 %v1960, %v1976
    %v1983 = vmax.f32 %v1963, %v1977
    %v1984 = vmax.f32 %v1968, %v1978
    %v1985 = vmax.f32 %v1971, %v1979
    %v1986 = vpack.c.bf16 %v1981, %v1980
    %v1987 = vpack.c.bf16 %v1983, %v1982
    %v1988 = vpack.c.bf16 %v1985, %v1984
    %v1989 = vld [vmem:[#allocation20] sm:$0xff]
    %v1990 = vld [vmem:[#allocation20 + $0x8] sm:$0xff]
    %v1991 = vld [vmem:[#allocation20 + $0x10] sm:$0xff]
    %v1992 = vld [vmem:[#allocation20 + $0x18] sm:$0xff]
    %v1993 = vld [vmem:[#allocation20 + $0x20] sm:$0xff]
    %v1994 = vld [vmem:[#allocation20 + $0x28] sm:$0xff]
    %v1995 = vld [vmem:[#allocation20 + $0x30] sm:$0xff]
    %v1996 = vld [vmem:[#allocation20 + $0x38] sm:$0xff]
    %v1997 = vld [vmem:[#allocation20 + $0x40] sm:$0xff]
    %v1998 = vld [vmem:[#allocation20 + $0x48] sm:$0xff]
    %v1999 = vld [vmem:[#allocation20 + $0x50] sm:$0xff]
    %v2000 = vld [vmem:[#allocation20 + $0x58] sm:$0xff]
    %v2001 = vld [vmem:[#allocation20 + $0x60] sm:$0xff]
    %v2002 = vld [vmem:[#allocation20 + $0x68] sm:$0xff]
    %v2003 = vld [vmem:[#allocation20 + $0x70] sm:$0xff]
    %v2004 = vld [vmem:[#allocation20 + $0x78] sm:$0xff]
    %v2005 = vld [vmem:[#allocation22] sm:$0xff]
    %v2006 = vld [vmem:[#allocation22 + $0x8] sm:$0xff]
    %v2007 = vld [vmem:[#allocation22 + $0x10] sm:$0xff]
    %v2008 = vld [vmem:[#allocation22 + $0x18] sm:$0xff]
    %v2009 = vld [vmem:[#allocation22 + $0x20] sm:$0xff]
    %v2010 = vld [vmem:[#allocation22 + $0x28] sm:$0xff]
    %v2011 = vld [vmem:[#allocation22 + $0x30] sm:$0xff]
    %v2012 = vld [vmem:[#allocation22 + $0x38] sm:$0xff]
    %v2013 = vld [vmem:[#allocation22 + $0x40] sm:$0xff]
    %v2014 = vld [vmem:[#allocation22 + $0x48] sm:$0xff]
    %v2015 = vld [vmem:[#allocation22 + $0x50] sm:$0xff]
    %v2016 = vld [vmem:[#allocation22 + $0x58] sm:$0xff]
    %v2017 = vld [vmem:[#allocation22 + $0x60] sm:$0xff]
    %v2018 = vld [vmem:[#allocation22 + $0x68] sm:$0xff]
    %v2019 = vld [vmem:[#allocation22 + $0x70] sm:$0xff]
    %v2020 = vld [vmem:[#allocation22 + $0x78] sm:$0xff]
    %v2037 = vunpack.c.l.b16 %v2005
    %v2038 = vunpack.c.h.b16 %v2005
    %v2039 = vunpack.c.l.b16 %v2006
    %v2040 = vunpack.c.h.b16 %v2006
    %v2041 = vunpack.c.l.b16 %v2007
    %v2042 = vunpack.c.h.b16 %v2007
    %v2043 = vunpack.c.l.b16 %v2008
    %v2044 = vunpack.c.h.b16 %v2008
    %v2045 = vunpack.c.l.b16 %v2009
    %v2046 = vunpack.c.h.b16 %v2009
    %v2047 = vunpack.c.l.b16 %v2010
    %v2048 = vunpack.c.h.b16 %v2010
    %v2049 = vunpack.c.l.b16 %v2011
    %v2050 = vunpack.c.h.b16 %v2011
    %v2051 = vunpack.c.l.b16 %v2012
    %v2052 = vunpack.c.h.b16 %v2012
    %v2053 = vunpack.c.l.b16 %v2013
    %v2054 = vunpack.c.h.b16 %v2013
    %v2055 = vunpack.c.l.b16 %v2014
    %v2056 = vunpack.c.h.b16 %v2014
    %v2057 = vunpack.c.l.b16 %v2015
    %v2058 = vunpack.c.h.b16 %v2015
    %v2059 = vunpack.c.l.b16 %v2016
    %v2060 = vunpack.c.h.b16 %v2016
    %v2061 = vunpack.c.l.b16 %v2017
    %v2062 = vunpack.c.h.b16 %v2017
    %v2063 = vunpack.c.l.b16 %v2018
    %v2064 = vunpack.c.h.b16 %v2018
    %v2065 = vunpack.c.l.b16 %v2019
    %v2066 = vunpack.c.h.b16 %v2019
    %v2067 = vunpack.c.l.b16 %v2020
    %v2068 = vunpack.c.h.b16 %v2020
    %v2069 = vpack.c.b16 %v2039, %v2037
    %v2070 = vpack.c.b16 %v2040, %v2038
    %v2071 = vpack.c.b16 %v2043, %v2041
    %v2072 = vpack.c.b16 %v2044, %v2042
    %v2073 = vpack.c.b16 %v2047, %v2045
    %v2074 = vpack.c.b16 %v2048, %v2046
    %v2075 = vpack.c.b16 %v2051, %v2049
    %v2076 = vpack.c.b16 %v2052, %v2050
    %v2077 = vpack.c.b16 %v2055, %v2053
    %v2078 = vpack.c.b16 %v2056, %v2054
    %v2079 = vpack.c.b16 %v2059, %v2057
    %v2080 = vpack.c.b16 %v2060, %v2058
    %v2081 = vpack.c.b16 %v2063, %v2061
    %v2082 = vpack.c.b16 %v2064, %v2062
    %v2083 = vpack.c.b16 %v2067, %v2065
    %v2084 = vpack.c.b16 %v2068, %v2066
    %2101 = vmatprep.subr.bf16.mxu0 %v2070
    %2102 = vmatpush1.bf16.msra.mxu0 %v2069
    %2103 = vmatprep.subr.bf16.mxu0 %v2072
    %2104 = vmatpush1.bf16.msra.mxu0 %v2071
    %2105 = vmatprep.subr.bf16.mxu0 %v2074
    %2106 = vmatpush1.bf16.msra.mxu0 %v2073
    %2107 = vmatprep.subr.bf16.mxu0 %v2076
    %2108 = vmatpush1.bf16.msra.mxu0 %v2075
    %2109 = vmatprep.subr.bf16.mxu0 %v2078
    %2110 = vmatpush1.bf16.msra.mxu0 %v2077
    %2111 = vmatprep.subr.bf16.mxu0 %v2080
    %2112 = vmatpush1.bf16.msra.mxu0 %v2079
    %2113 = vmatprep.subr.bf16.mxu0 %v2082
    %2114 = vmatpush1.bf16.msra.mxu0 %v2081
    %2115 = vmatprep.subr.bf16.mxu0 %v2084
    %2116 = vmatpush1.bf16.msra.mxu0 %v2083
    %2117 = vmatprep.subr.bf16.mxu0 0
    %2118 = vmatpush1.bf16.msra.mxu0 0
    %2119 = vmatprep.subr.bf16.mxu0 0
    %2120 = vmatpush1.bf16.msra.mxu0 0
    %2121 = vmatprep.subr.bf16.mxu0 0
    %2122 = vmatpush1.bf16.msra.mxu0 0
    %2123 = vmatprep.subr.bf16.mxu0 0
    %2124 = vmatpush1.bf16.msra.mxu0 0
    %2125 = vmatprep.subr.bf16.mxu0 0
    %2126 = vmatpush1.bf16.msra.mxu0 0
    %2127 = vmatprep.subr.bf16.mxu0 0
    %2128 = vmatpush1.bf16.msra.mxu0 0
    %2129 = vmatprep.subr.bf16.mxu0 0
    %2130 = vmatpush1.bf16.msra.mxu0 0
    %2131 = vmatprep.subr.bf16.mxu0 0
    %2132 = vmatpush1.bf16.msra.mxu0 0
    %2133 = vmatprep.mubr.bf16.mxu0 0
    %2134 = vmatmul.mubr.bf16.gmra.mrb[0].mxu0 %v1986
    %v2135 = vpop.f32.mrb[0].mxu0
    %v2136 = vadd.f32 0.0, %v2135
    %v2137 = vpop.f32.mrb[0].mxu0
    %v2138 = vadd.f32 0.0, %v2137
    %v2139 = vpop.f32.mrb[0].mxu0
    %v2140 = vadd.f32 0.0, %v2139
    %v2141 = vpop.f32.mrb[0].mxu0
    %v2142 = vadd.f32 0.0, %v2141
    %2143 = vmatprep.mubr.bf16.mxu0 0
    %2144 = vmatmul.mubr.bf16.gmra.mrb[0].mxu0 %v1987
    %v2145 = vpop.f32.mrb[0].mxu0
    %v2146 = vadd.f32 0.0, %v2145
    %v2147 = vpop.f32.mrb[0].mxu0
    %v2148 = vadd.f32 0.0, %v2147
    %v2149 = vpop.f32.mrb[0].mxu0
    %v2150 = vadd.f32 0.0, %v2149
    %v2151 = vpop.f32.mrb[0].mxu0
    %v2152 = vadd.f32 0.0, %v2151
    %2153 = vmatprep.mubr.bf16.mxu0 0
    %2154 = vmatmul.mubr.bf16.gmra.mrb[0].mxu0 %v1988
    %v2155 = vpop.f32.mrb[0].mxu0
    %v2156 = vadd.f32 0.0, %v2155
    %v2157 = vpop.f32.mrb[0].mxu0
    %v2158 = vadd.f32 0.0, %v2157
    %v2159 = vpop.f32.mrb[0].mxu0
    %v2160 = vadd.f32 0.0, %v2159
    %v2161 = vpop.f32.mrb[0].mxu0
    %v2162 = vadd.f32 0.0, %v2161
    %2163 = vdwg.mxu0
    %v2180 = vunpack.c.l.b16 %v1989
    %v2181 = vunpack.c.h.b16 %v1989
    %v2182 = vunpack.c.l.b16 %v1990
    %v2183 = vunpack.c.h.b16 %v1990
    %v2184 = vunpack.c.l.b16 %v1991
    %v2185 = vunpack.c.h.b16 %v1991
    %v2186 = vunpack.c.l.b16 %v1992
    %v2187 = vunpack.c.h.b16 %v1992
    %v2188 = vunpack.c.l.b16 %v1993
    %v2189 = vunpack.c.h.b16 %v1993
    %v2190 = vunpack.c.l.b16 %v1994
    %v2191 = vunpack.c.h.b16 %v1994
    %v2192 = vunpack.c.l.b16 %v1995
    %v2193 = vunpack.c.h.b16 %v1995
    %v2194 = vunpack.c.l.b16 %v1996
    %v2195 = vunpack.c.h.b16 %v1996
    %v2196 = vunpack.c.l.b16 %v1997
    %v2197 = vunpack.c.h.b16 %v1997
    %v2198 = vunpack.c.l.b16 %v1998
    %v2199 = vunpack.c.h.b16 %v1998
    %v2200 = vunpack.c.l.b16 %v1999
    %v2201 = vunpack.c.h.b16 %v1999
    %v2202 = vunpack.c.l.b16 %v2000
    %v2203 = vunpack.c.h.b16 %v2000
    %v2204 = vunpack.c.l.b16 %v2001
    %v2205 = vunpack.c.h.b16 %v2001
    %v2206 = vunpack.c.l.b16 %v2002
    %v2207 = vunpack.c.h.b16 %v2002
    %v2208 = vunpack.c.l.b16 %v2003
    %v2209 = vunpack.c.h.b16 %v2003
    %v2210 = vunpack.c.l.b16 %v2004
    %v2211 = vunpack.c.h.b16 %v2004
    %v2212 = vpack.c.b16 %v2182, %v2180
    %v2213 = vpack.c.b16 %v2183, %v2181
    %v2214 = vpack.c.b16 %v2186, %v2184
    %v2215 = vpack.c.b16 %v2187, %v2185
    %v2216 = vpack.c.b16 %v2190, %v2188
    %v2217 = vpack.c.b16 %v2191, %v2189
    %v2218 = vpack.c.b16 %v2194, %v2192
    %v2219 = vpack.c.b16 %v2195, %v2193
    %v2220 = vpack.c.b16 %v2198, %v2196
    %v2221 = vpack.c.b16 %v2199, %v2197
    %v2222 = vpack.c.b16 %v2202, %v2200
    %v2223 = vpack.c.b16 %v2203, %v2201
    %v2224 = vpack.c.b16 %v2206, %v2204
    %v2225 = vpack.c.b16 %v2207, %v2205
    %v2226 = vpack.c.b16 %v2210, %v2208
    %v2227 = vpack.c.b16 %v2211, %v2209
    %2244 = vmatprep.subr.bf16.mxu0 %v2213
    %2245 = vmatpush1.bf16.msra.mxu0 %v2212
    %2246 = vmatprep.subr.bf16.mxu0 %v2215
    %2247 = vmatpush1.bf16.msra.mxu0 %v2214
    %2248 = vmatprep.subr.bf16.mxu0 %v2217
    %2249 = vmatpush1.bf16.msra.mxu0 %v2216
    %2250 = vmatprep.subr.bf16.mxu0 %v2219
    %2251 = vmatpush1.bf16.msra.mxu0 %v2218
    %2252 = vmatprep.subr.bf16.mxu0 %v2221
    %2253 = vmatpush1.bf16.msra.mxu0 %v2220
    %2254 = vmatprep.subr.bf16.mxu0 %v2223
    %2255 = vmatpush1.bf16.msra.mxu0 %v2222
    %2256 = vmatprep.subr.bf16.mxu0 %v2225
    %2257 = vmatpush1.bf16.msra.mxu0 %v2224
    %2258 = vmatprep.subr.bf16.mxu0 %v2227
    %2259 = vmatpush1.bf16.msra.mxu0 %v2226
    %2260 = vmatprep.subr.bf16.mxu0 0
    %2261 = vmatpush1.bf16.msra.mxu0 0
    %2262 = vmatprep.subr.bf16.mxu0 0
    %2263 = vmatpush1.bf16.msra.mxu0 0
    %2264 = vmatprep.subr.bf16.mxu0 0
    %2265 = vmatpush1.bf16.msra.mxu0 0
    %2266 = vmatprep.subr.bf16.mxu0 0
    %2267 = vmatpush1.bf16.msra.mxu0 0
    %2268 = vmatprep.subr.bf16.mxu0 0
    %2269 = vmatpush1.bf16.msra.mxu0 0
    %2270 = vmatprep.subr.bf16.mxu0 0
    %2271 = vmatpush1.bf16.msra.mxu0 0
    %2272 = vmatprep.subr.bf16.mxu0 0
    %2273 = vmatpush1.bf16.msra.mxu0 0
    %2274 = vmatprep.subr.bf16.mxu0 0
    %2275 = vmatpush1.bf16.msra.mxu0 0
    %2276 = vmatprep.mubr.bf16.mxu0 0
    %2277 = vmatmul.mubr.bf16.gmra.mrb[0].mxu0 %v1779
    %v2278 = vpop.f32.mrb[0].mxu0
    %v2279 = vadd.f32 %v2136, %v2278
    %v2280 = vpop.f32.mrb[0].mxu0
    %v2281 = vadd.f32 %v2138, %v2280
    %v2282 = vpop.f32.mrb[0].mxu0
    %v2283 = vadd.f32 %v2140, %v2282
    %v2284 = vpop.f32.mrb[0].mxu0
    %v2285 = vadd.f32 %v2142, %v2284
    %2286 = vmatprep.mubr.bf16.mxu0 0
    %2287 = vmatmul.mubr.bf16.gmra.mrb[0].mxu0 %v1780
    %v2288 = vpop.f32.mrb[0].mxu0
    %v2289 = vadd.f32 %v2146, %v2288
    %v2290 = vpop.f32.mrb[0].mxu0
    %v2291 = vadd.f32 %v2148, %v2290
    %v2292 = vpop.f32.mrb[0].mxu0
    %v2293 = vadd.f32 %v2150, %v2292
    %v2294 = vpop.f32.mrb[0].mxu0
    %v2295 = vadd.f32 %v2152, %v2294
    %2296 = vmatprep.mubr.bf16.mxu0 0
    %2297 = vmatmul.mubr.bf16.gmra.mrb[0].mxu0 %v1781
    %v2298 = vpop.f32.mrb[0].mxu0
    %v2299 = vadd.f32 %v2156, %v2298
    %v2300 = vpop.f32.mrb[0].mxu0
    %v2301 = vadd.f32 %v2158, %v2300
    %v2302 = vpop.f32.mrb[0].mxu0
    %v2303 = vadd.f32 %v2160, %v2302
    %v2304 = vpop.f32.mrb[0].mxu0
    %v2305 = vadd.f32 %v2162, %v2304
    %2306 = vdwg.mxu0
    %v2307 = vld [vmem:[#allocation23] sm:$0x3]
    %v2309 = vlaneseq
    %v2310 = vshrl.u32 %v2309, 7
    %v2311 = vsub.s32 0, %v2310
    %v2312 = vrot.slane %v2307, %v2311
    %v2313 = vlaneseq
    %v2314 = vshrl.u32 %v2313, 7
    %v2315 = vsub.s32 1, %v2314
    %v2316 = vrot.slane %v2307, %v2315
    %v2319 = vadd.f32 %v2279, %v2312
    %v2320 = vadd.f32 %v2281, %v2316
    %v2321 = vadd.f32 %v2283, %v2312
    %v2322 = vadd.f32 %v2285, %v2316
    %v2323 = vadd.f32 %v2289, %v2312
    %v2324 = vadd.f32 %v2291, %v2316
    %v2325 = vadd.f32 %v2293, %v2312
    %v2326 = vadd.f32 %v2295, %v2316
    %v2327 = vadd.f32 %v2299, %v2312
    %v2328 = vadd.f32 %v2301, %v2316
    %v2329 = vadd.f32 %v2303, %v2312
    %v2330 = vadd.f32 %v2305, %v2316
    %v2331 = vmul.f32 %v2319, 0.1
    %v2332 = vmul.f32 %v2320, 0.1
    %v2333 = vmul.f32 %v2321, 0.1
    %v2334 = vmul.f32 %v2322, 0.1
    %v2335 = vmul.f32 %v2323, 0.1
    %v2336 = vmul.f32 %v2324, 0.1
    %v2337 = vmul.f32 %v2325, 0.1
    %v2338 = vmul.f32 %v2326, 0.1
    %v2339 = vmul.f32 %v2327, 0.1
    %v2340 = vmul.f32 %v2328, 0.1
    %v2341 = vmul.f32 %v2329, 0.1
    %v2342 = vmul.f32 %v2330, 0.1
    %v2343 = vmax.f32 %v2319, %v2331
    %v2344 = vmax.f32 %v2320, %v2332
    %v2345 = vmax.f32 %v2321, %v2333
    %v2346 = vmax.f32 %v2322, %v2334
    %v2347 = vmax.f32 %v2323, %v2335
    %v2348 = vmax.f32 %v2324, %v2336
    %v2349 = vmax.f32 %v2325, %v2337
    %v2350 = vmax.f32 %v2326, %v2338
    %v2351 = vmax.f32 %v2327, %v2339
    %v2352 = vmax.f32 %v2328, %v2340
    %v2353 = vmax.f32 %v2329, %v2341
    %v2354 = vmax.f32 %v2330, %v2342
    %v2355 = vpack.c.bf16 %v2345, %v2343
    %v2356 = vpack.c.bf16 %v2346, %v2344
    %v2357 = vpack.c.bf16 %v2349, %v2347
    %v2358 = vpack.c.bf16 %v2350, %v2348
    %v2359 = vpack.c.bf16 %v2353, %v2351
    %v2360 = vpack.c.bf16 %v2354, %v2352
    %v2365 = vunpack.c.l.b16 %v2355
    %v2366 = vunpack.c.l.b16 %v2356
    %v2367 = vunpack.c.h.b16 %v2355
    %v2368 = vunpack.c.h.b16 %v2356
    %v2369 = vunpack.c.l.b16 %v2357
    %v2370 = vunpack.c.l.b16 %v2358
    %v2371 = vpack.c.b16 %v2366, %v2365
    %v2372 = vpack.c.b16 %v2368, %v2367
    %v2373 = vpack.c.b16 %v2370, %v2369
    %vm2374 = vsmask.f32 3328
    %vm2375 = vsmask.f32 7440
    %vm2376 = vmor %vm2374, %vm2375
    %v2378 = vshrl.u32 %v2371, 16
    %v2380 = vrot.slane %v2378, 4
    %v2381 = vshll.u32 %v2371, 16
    %v2383 = vrot.slane %v2381, 5
    %v2384 = vor.u32 %v2380, %v2383
    %v2385 = vrot.slane %v2384, 4
    %v2387 = vshll.u32 %v2372, 16
    %v2389 = vrot.slane %v2387, 5
    %v2390 = vsel %vm2376, %v2385, %v2389
    %v2391 = vshrl.u32 %v2372, 16
    %v2393 = vrot.slane %v2391, 4
    %v2394 = vor.u32 %v2393, %v2389
    %v2395 = vrot.slane %v2394, 4
    %v2397 = vshll.u32 %v2373, 16
    %v2399 = vrot.slane %v2397, 5
    %v2400 = vsel %vm2376, %v2395, %v2399
    %2403 = vst [vmem:[#allocation25] sm:$0xff] %v2390
    %2404 = vst [vmem:[#allocation25 + $0x8] sm:$0xff] %v2400
    %v2407 = vunpack.c.h.b16 %v2357
    %v2408 = vunpack.c.h.b16 %v2358
    %v2409 = vunpack.c.l.b16 %v2359
    %v2410 = vunpack.c.l.b16 %v2360
    %v2411 = vunpack.c.h.b16 %v2359
    %v2412 = vunpack.c.h.b16 %v2360
    %v2413 = vpack.c.b16 %v2408, %v2407
    %v2414 = vpack.c.b16 %v2410, %v2409
    %v2415 = vpack.c.b16 %v2412, %v2411
    %v2417 = vshrl.u32 %v2413, 16
    %v2419 = vrot.slane %v2417, 4
    %v2420 = vshll.u32 %v2413, 16
    %v2422 = vrot.slane %v2420, 5
    %v2423 = vor.u32 %v2419, %v2422
    %v2424 = vrot.slane %v2423, 4
    %v2426 = vshll.u32 %v2414, 16
    %v2428 = vrot.slane %v2426, 5
    %v2429 = vsel %vm2376, %v2424, %v2428
    %v2430 = vshrl.u32 %v2414, 16
    %v2432 = vrot.slane %v2430, 4
    %v2433 = vor.u32 %v2432, %v2428
    %v2434 = vrot.slane %v2433, 4
    %v2436 = vshll.u32 %v2415, 16
    %v2438 = vrot.slane %v2436, 5
    %v2439 = vsel %vm2376, %v2434, %v2438
    %s2442 = scalar_lea.vmem [#allocation25], 16
    %2443 = vst [vmem:[%s2442] sm:$0xff] %v2429
    %2444 = vst [vmem:[%s2442 + $0x8] sm:$0xff] %v2439
    // Predicated region
    $region114: #{_lambda_.1} parent=1 // pred_check
      _
    $region115: #{_lambda_.1} parent=1 // pred_check_branch
      %2446 = sbr.rel (0) target = $region117
    $region116: #{_lambda_.1} parent=1 // pred_region
      %s2448 = ssub.s32 512, 512
      %2449 = vsyncadd [#allocation4], %s2448
      %s2450 = sshll.u32 [#allocation25], 4
      %s2451 = int_to_ptr.vmem [resolvable:$true] %s2450
      %2456 = dma.vmem_to_hbm [thread:$0]  %s2451, 512, %s14, [#allocation4], 128, 128, 8
    $region117: #{_lambda_.1} parent=1 // pred_fallthru
      _
    // Predicated region
    $region118: #{_lambda_.1} parent=1 // pred_check
      _
    $region119: #{_lambda_.1} parent=1 // pred_check_branch
      %2458 = sbr.rel (0) target = $region121
    $region120: #{_lambda_.1} parent=1 // pred_region
      %2459 = dma.done [#allocation4], 512
    $region121: #{_lambda_.1} parent=1 // pred_fallthru
      _
    %2460 = vsyncpa [#allocation3], 1
    %2461 = vsyncpa [#allocation6], 1
    %2462 = vsyncpa [#allocation9], 1
    %2463 = vsyncpa [#allocation12], 1
    %2464 = vsyncpa [#allocation15], 1
    %2465 = vsyncpa [#allocation18], 1
    %2466 = vsyncpa [#allocation21], 1
    %2467 = vsyncpa [#allocation24], 1
    %2468 = vsyncpa [#allocation4], 1

// kernel: _lambda_.1
$region0: #{_lambda_.1}
  #allocation0 [shape = 'u32[]', space=smem, size = 0x4, offset = 0x4, fixed_abs, tag = 'smem constant byte address 0x4 - core index']
  #allocation1 [shape = 'u32[144,128]{1,0:T(1,128)}', space=vmem, size = 0x12000, scoped, tag = 'internal scratch']
  %s0 = inlined_call_operand.hbm [shape: f32[2,16,256], index: 0, kind: input, shape index: {}]
  %s1 = inlined_call_operand.hbm [shape: bf16[256,128], index: 1, kind: input, shape index: {}]
  %s2 = inlined_call_operand.hbm [shape: f32[1,128], index: 2, kind: input, shape index: {}]
  %s3 = inlined_call_operand.hbm [shape: bf16[2,128,128], index: 3, kind: input, shape index: {}]
  %s4 = inlined_call_operand.hbm [shape: f32[2,1,128], index: 4, kind: input, shape index: {}]
  %s5 = inlined_call_operand.hbm [shape: bf16[2,384,128], index: 5, kind: input, shape index: {}]
  %s6 = inlined_call_operand.hbm [shape: f32[2,1,128], index: 6, kind: input, shape index: {}]
  %s7 = inlined_call_operand.hbm [shape: bf16[128,128], index: 7, kind: input, shape index: {}]
  %s8 = inlined_call_operand.hbm [shape: f32[1,128], index: 8, kind: input, shape index: {}]
  %s9 = inlined_call_operand.hbm [shape: bf16[256,128], index: 9, kind: input, shape index: {}]
  %s10 = inlined_call_operand.hbm [shape: f32[1,128], index: 10, kind: input, shape index: {}]
  %s11 = inlined_call_operand.hbm [shape: bf16[128,256], index: 11, kind: input, shape index: {}]
  %s12 = inlined_call_operand.hbm [shape: bf16[128,256], index: 12, kind: input, shape index: {}]
  %s13 = inlined_call_operand.hbm [shape: f32[1,256], index: 13, kind: input, shape index: {}]
  %s14 = inlined_call_operand.hbm [shape: bf16[2,16,256], index: 14, kind: output, shape index: {}]
  %s15 = sld [smem:[#allocation0]]
  $region122: #{_lambda_.1} parent=0
    _
  %s17 = ssub.s32 1, %s15
  %s18 = scalar_select 0, %s17, %s15
  $region1: #{_lambda_.1} parent=0
    #allocation2 [shape = 'u8[32768]{0}', space=vmem, size = 0x8000, scoped, tag = 'input window, operand 0, single buffered']
    #allocation3 [shape = 's32[1]{0}', space=sflag, size = 0x4, scoped, tag = 'scoped memory for _lambda_.1']
    #allocation4 [shape = 's32[1]{0}', space=sflag, size = 0x4, scoped, tag = 'scoped memory for _lambda_.1']
    #allocation5 [shape = 'u8[65536]{0}', space=vmem, size = 0x10000, scoped, tag = 'input window, operand 1, single buffered']
    #allocation6 [shape = 's32[1]{0}', space=sflag, size = 0x4, scoped, tag = 'scoped memory for _lambda_.1']
    #allocation7 [shape = 'u8[512]{0}', space=vmem, size = 0x400, scoped, tag = 'input window, operand 2, single buffered']
    #allocation8 [shape = 'u8[65536]{0}', space=vmem, size = 0x10000, scoped, tag = 'input window, operand 3, single buffered']
    #allocation9 [shape = 's32[1]{0}', space=sflag, size = 0x4, scoped, tag = 'scoped memory for _lambda_.1']
    #allocation10 [shape = 'u8[1024]{0}', space=vmem, size = 0x400, scoped, tag = 'input window, operand 4, single buffered']
    #allocation11 [shape = 'u8[196608]{0}', space=vmem, size = 0x30000, scoped, tag = 'input window, operand 5, single buffered']
    #allocation12 [shape = 's32[1]{0}', space=sflag, size = 0x4, scoped, tag = 'scoped memory for _lambda_.1']
    #allocation13 [shape = 'u8[1024]{0}', space=vmem, size = 0x400, scoped, tag = 'input window, operand 6, single buffered']
    #allocation14 [shape = 'u8[32768]{0}', space=vmem, size = 0x8000, scoped, tag = 'input window, operand 7, single buffered']
    #allocation15 [shape = 's32[1]{0}', space=sflag, size = 0x4, scoped, tag = 'scoped memory for _lambda_.1']
    #allocation16 [shape = 'u8[512]{0}', space=vmem, size = 0x400, scoped, tag = 'input window, operand 8, single buffered']
    #allocation17 [shape = 'u8[65536]{0}', space=vmem, size = 0x10000, scoped, tag = 'input window, operand 9, single buffered']
    #allocation18 [shape = 's32[1]{0}', space=sflag, size = 0x4, scoped, tag = 'scoped memory for _lambda_.1']
    #allocation19 [shape = 'u8[512]{0}', space=vmem, size = 0x400, scoped, tag = 'input window, operand 10, single buffered']
    #allocation20 [shape = 'u8[65536]{0}', space=vmem, size = 0x10000, scoped, tag = 'input window, operand 11, single buffered']
    #allocation21 [shape = 's32[1]{0}', space=sflag, size = 0x4, scoped, tag = 'scoped memory for _lambda_.1']
    #allocation22 [shape = 'u8[65536]{0}', space=vmem, size = 0x10000, scoped, tag = 'input window, operand 12, single buffered']
    #allocation23 [shape = 'u8[1024]{0}', space=vmem, size = 0x400, scoped, tag = 'input window, operand 13, single buffered']
    #allocation24 [shape = 's32[1]{0}', space=sflag, size = 0x4, scoped, tag = 'scoped memory for _lambda_.1']
    #allocation25 [shape = 'u8[16384]{0}', space=vmem, size = 0x4000, scoped, tag = 'output window, operand 0, single buffered']
    %19 = vsyncpa [#allocation3], 0
    %20 = vsyncpa [#allocation6], 0
    %21 = vsyncpa [#allocation9], 0
    %22 = vsyncpa [#allocation12], 0
    %23 = vsyncpa [#allocation15], 0
    %24 = vsyncpa [#allocation18], 0
    %25 = vsyncpa [#allocation21], 0
    %26 = vsyncpa [#allocation24], 0
    %27 = vsyncpa [#allocation4], 0
    // Predicated region
    $region2: #{_lambda_.1} parent=1 // pred_check
      _
    $region3: #{_lambda_.1} parent=1 // pred_check_branch
      %29 = sbr.rel (0) target = $region5
    $region4: #{_lambda_.1} parent=1 // pred_region
      %s31 = ssub.s32 1024, 1024
      %32 = vsyncadd [#allocation3], %s31
      %s33 = sshll.u32 [#allocation2], 4
      %s34 = int_to_ptr.vmem [resolvable:$true] %s33
      %39 = dma.hbm_to_vmem [thread:$0]  %s0, 1024, %s34, [#allocation3], 256, 256, 16
    $region5: #{_lambda_.1} parent=1 // pred_fallthru
      _
    // Predicated region
    $region6: #{_lambda_.1} parent=1 // pred_check
      _
    $region7: #{_lambda_.1} parent=1 // pred_check_branch
      %41 = sbr.rel (0) target = $region9
    $region8: #{_lambda_.1} parent=1 // pred_region
      %s43 = ssub.s32 2048, 2048
      %44 = vsyncadd [#allocation6], %s43
      %s45 = sshll.u32 [#allocation5], 4
      %s46 = int_to_ptr.vmem [resolvable:$true] %s45
      %51 = dma.hbm_to_vmem [thread:$0]  %s1, 2048, %s46, [#allocation6], 64, 64, 4
    $region9: #{_lambda_.1} parent=1 // pred_fallthru
      _
    // Predicated region
    $region10: #{_lambda_.1} parent=1 // pred_check
      _
    $region11: #{_lambda_.1} parent=1 // pred_check_branch
      %53 = sbr.rel (0) target = $region13
    $region12: #{_lambda_.1} parent=1 // pred_region
      %s55 = ssub.s32 16, 16
      %56 = vsyncadd [#allocation6], %s55
      %s58 = sshll.u32 [#allocation7], 4
      %s59 = int_to_ptr.vmem [resolvable:$true] %s58
      %61 = dma.hbm_to_vmem [thread:$0]  %s2, 16, %s59, [#allocation6]
    $region13: #{_lambda_.1} parent=1 // pred_fallthru
      _
    // Predicated region
    $region14: #{_lambda_.1} parent=1 // pred_check
      _
    $region15: #{_lambda_.1} parent=1 // pred_check_branch
      %63 = sbr.rel (0) target = $region17
    $region16: #{_lambda_.1} parent=1 // pred_region
      %s65 = ssub.s32 2048, 2048
      %66 = vsyncadd [#allocation9], %s65
      %s67 = sshll.u32 [#allocation8], 4
      %s68 = int_to_ptr.vmem [resolvable:$true] %s67
      %73 = dma.hbm_to_vmem [thread:$0]  %s3, 2048, %s68, [#allocation9], 64, 64, 4
    $region17: #{_lambda_.1} parent=1 // pred_fallthru
      _
    // Predicated region
    $region18: #{_lambda_.1} parent=1 // pred_check
      _
    $region19: #{_lambda_.1} parent=1 // pred_check_branch
      %75 = sbr.rel (0) target = $region21
    $region20: #{_lambda_.1} parent=1 // pred_region
      %s77 = ssub.s32 32, 32
      %78 = vsyncadd [#allocation9], %s77
      %s79 = sshll.u32 [#allocation10], 4
      %s80 = int_to_ptr.vmem [resolvable:$true] %s79
      %85 = dma.hbm_to_vmem [thread:$0]  %s4, 32, %s80, [#allocation9], 16, 16, 1
    $region21: #{_lambda_.1} parent=1 // pred_fallthru
      _
    // Predicated region
    $region22: #{_lambda_.1} parent=1 // pred_check
      _
    $region23: #{_lambda_.1} parent=1 // pred_check_branch
      %87 = sbr.rel (0) target = $region25
    $region24: #{_lambda_.1} parent=1 // pred_region
      %s89 = ssub.s32 6144, 6144
      %90 = vsyncadd [#allocation12], %s89
      %s91 = sshll.u32 [#allocation11], 4
      %s92 = int_to_ptr.vmem [resolvable:$true] %s91
      %97 = dma.hbm_to_vmem [thread:$0]  %s5, 6144, %s92, [#allocation12], 64, 64, 4
    $region25: #{_lambda_.1} parent=1 // pred_fallthru
      _
    // Predicated region
    $region26: #{_lambda_.1} parent=1 // pred_check
      _
    $region27: #{_lambda_.1} parent=1 // pred_check_branch
      %99 = sbr.rel (0) target = $region29
    $region28: #{_lambda_.1} parent=1 // pred_region
      %s101 = ssub.s32 32, 32
      %102 = vsyncadd [#allocation12], %s101
      %s103 = sshll.u32 [#allocation13], 4
      %s104 = int_to_ptr.vmem [resolvable:$true] %s103
      %109 = dma.hbm_to_vmem [thread:$0]  %s6, 32, %s104, [#allocation12], 16, 16, 1
    $region29: #{_lambda_.1} parent=1 // pred_fallthru
      _
    // Predicated region
    $region30: #{_lambda_.1} parent=1 // pred_check
      _
    $region31: #{_lambda_.1} parent=1 // pred_check_branch
      %111 = sbr.rel (0) target = $region33
    $region32: #{_lambda_.1} parent=1 // pred_region
      %s113 = ssub.s32 1024, 1024
      %114 = vsyncadd [#allocation15], %s113
      %s115 = sshll.u32 [#allocation14], 4
      %s116 = int_to_ptr.vmem [resolvable:$true] %s115
      %121 = dma.hbm_to_vmem [thread:$0]  %s7, 1024, %s116, [#allocation15], 64, 64, 4
    $region33: #{_lambda_.1} parent=1 // pred_fallthru
      _
    // Predicated region
    $region34: #{_lambda_.1} parent=1 // pred_check
      _
    $region35: #{_lambda_.1} parent=1 // pred_check_branch
      %123 = sbr.rel (0) target = $region37
    $region36: #{_lambda_.1} parent=1 // pred_region
      %s125 = ssub.s32 16, 16
      %126 = vsyncadd [#allocation15], %s125
      %s128 = sshll.u32 [#allocation16], 4
      %s129 = int_to_ptr.vmem [resolvable:$true] %s128
      %131 = dma.hbm_to_vmem [thread:$0]  %s8, 16, %s129, [#allocation15]
    $region37: #{_lambda_.1} parent=1 // pred_fallthru
      _
    // Predicated region
    $region38: #{_lambda_.1} parent=1 // pred_check
      _
    $region39: #{_lambda_.1} parent=1 // pred_check_branch
      %133 = sbr.rel (0) target = $region41
    $region40: #{_lambda_.1} parent=1 // pred_region
      %s135 = ssub.s32 2048, 2048
      %136 = vsyncadd [#allocation18], %s135
      %s137 = sshll.u32 [#allocation17], 4
      %s138 = int_to_ptr.vmem [resolvable:$true] %s137
      %143 = dma.hbm_to_vmem [thread:$0]  %s9, 2048, %s138, [#allocation18], 64, 64, 4
    $region41: #{_lambda_.1} parent=1 // pred_fallthru
      _
    // Predicated region
    $region42: #{_lambda_.1} parent=1 // pred_check
      _
    $region43: #{_lambda_.1} parent=1 // pred_check_branch
      %145 = sbr.rel (0) target = $region45
    $region44: #{_lambda_.1} parent=1 // pred_region
      %s147 = ssub.s32 16, 16
      %148 = vsyncadd [#allocation18], %s147
      %s150 = sshll.u32 [#allocation19], 4
      %s151 = int_to_ptr.vmem [resolvable:$true] %s150
      %153 = dma.hbm_to_vmem [thread:$0]  %s10, 16, %s151, [#allocation18]
    $region45: #{_lambda_.1} parent=1 // pred_fallthru
      _
    // Predicated region
    $region46: #{_lambda_.1} parent=1 // pred_check
      _
    $region47: #{_lambda_.1} parent=1 // pred_check_branch
      %155 = sbr.rel (0) target = $region49
    $region48: #{_lambda_.1} parent=1 // pred_region
      %s157 = ssub.s32 2048, 2048
      %158 = vsyncadd [#allocation21], %s157
      %s159 = sshll.u32 [#allocation20], 4
      %s160 = int_to_ptr.vmem [resolvable:$true] %s159
      %165 = dma.hbm_to_vmem [thread:$0]  %s11, 2048, %s160, [#allocation21], 128, 128, 8
    $region49: #{_lambda_.1} parent=1 // pred_fallthru
      _
    // Predicated region
    $region50: #{_lambda_.1} parent=1 // pred_check
      _
    $region51: #{_lambda_.1} parent=1 // pred_check_branch
      %167 = sbr.rel (0) target = $region53
    $region52: #{_lambda_.1} parent=1 // pred_region
      %s169 = ssub.s32 2048, 2048
      %170 = vsyncadd [#allocation21], %s169
      %s171 = sshll.u32 [#allocation22], 4
      %s172 = int_to_ptr.vmem [resolvable:$true] %s171
      %177 = dma.hbm_to_vmem [thread:$0]  %s12, 2048, %s172, [#allocation21], 128, 128, 8
    $region53: #{_lambda_.1} parent=1 // pred_fallthru
      _
    // Predicated region
    $region54: #{_lambda_.1} parent=1 // pred_check
      _
    $region55: #{_lambda_.1} parent=1 // pred_check_branch
      %179 = sbr.rel (0) target = $region57
    $region56: #{_lambda_.1} parent=1 // pred_region
      %s181 = ssub.s32 32, 32
      %182 = vsyncadd [#allocation24], %s181
      %s184 = sshll.u32 [#allocation23], 4
      %s185 = int_to_ptr.vmem [resolvable:$true] %s184
      %187 = dma.hbm_to_vmem [thread:$0]  %s13, 32, %s185, [#allocation24]
    $region57: #{_lambda_.1} parent=1 // pred_fallthru
      _
    // Predicated region
    $region58: #{_lambda_.1} parent=1 // pred_check
      _
    $region59: #{_lambda_.1} parent=1 // pred_check_branch
      %189 = sbr.rel (0) target = $region61
    $region60: #{_lambda_.1} parent=1 // pred_region
      %190 = dma.done [#allocation3], 1024
    $region61: #{_lambda_.1} parent=1 // pred_fallthru
      _
    // Predicated region
    $region62: #{_lambda_.1} parent=1 // pred_check
      _
    $region63: #{_lambda_.1} parent=1 // pred_check_branch
      %192 = sbr.rel (0) target = $region65
    $region64: #{_lambda_.1} parent=1 // pred_region
      %193 = dma.done [#allocation6], 2048
    $region65: #{_lambda_.1} parent=1 // pred_fallthru
      _
    // Predicated region
    $region66: #{_lambda_.1} parent=1 // pred_check
      _
    $region67: #{_lambda_.1} parent=1 // pred_check_branch
      %195 = sbr.rel (0) target = $region69
    $region68: #{_lambda_.1} parent=1 // pred_region
      %196 = dma.done [#allocation6], 16
    $region69: #{_lambda_.1} parent=1 // pred_fallthru
      _
    // Predicated region
    $region70: #{_lambda_.1} parent=1 // pred_check
      _
    $region71: #{_lambda_.1} parent=1 // pred_check_branch
      %198 = sbr.rel (0) target = $region73
    $region72: #{_lambda_.1} parent=1 // pred_region
      %199 = dma.done [#allocation9], 2048
    $region73: #{_lambda_.1} parent=1 // pred_fallthru
      _
    // Predicated region
    $region74: #{_lambda_.1} parent=1 // pred_check
      _
    $region75: #{_lambda_.1} parent=1 // pred_check_branch
      %201 = sbr.rel (0) target = $region77
    $region76: #{_lambda_.1} parent=1 // pred_region
      %202 = dma.done [#allocation9], 32
    $region77: #{_lambda_.1} parent=1 // pred_fallthru
      _
    // Predicated region
    $region78: #{_lambda_.1} parent=1 // pred_check
      _
    $region79: #{_lambda_.1} parent=1 // pred_check_branch
      %204 = sbr.rel (0) target = $region81
    $region80: #{_lambda_.1} parent=1 // pred_region
      %205 = dma.done [#allocation12], 6144
    $region81: #{_lambda_.1} parent=1 // pred_fallthru
      _
    // Predicated region
    $region82: #{_lambda_.1} parent=1 // pred_check
      _
    $region83: #{_lambda_.1} parent=1 // pred_check_branch
      %207 = sbr.rel (0) target = $region85
    $region84: #{_lambda_.1} parent=1 // pred_region
      %208 = dma.done [#allocation12], 32
    $region85: #{_lambda_.1} parent=1 // pred_fallthru
      _
    // Predicated region
    $region86: #{_lambda_.1} parent=1 // pred_check
      _
    $region87: #{_lambda_.1} parent=1 // pred_check_branch
      %210 = sbr.rel (0) target = $region89
    $region88: #{_lambda_.1} parent=1 // pred_region
      %211 = dma.done [#allocation15], 1024
    $region89: #{_lambda_.1} parent=1 // pred_fallthru
      _
    // Predicated region
    $region90: #{_lambda_.1} parent=1 // pred_check
      _
    $region91: #{_lambda_.1} parent=1 // pred_check_branch
      %213 = sbr.rel (0) target = $region93
    $region92: #{_lambda_.1} parent=1 // pred_region
      %214 = dma.done [#allocation15], 16
    $region93: #{_lambda_.1} parent=1 // pred_fallthru
      _
    // Predicated region
    $region94: #{_lambda_.1} parent=1 // pred_check
      _
    $region95: #{_lambda_.1} parent=1 // pred_check_branch
      %216 = sbr.rel (0) target = $region97
    $region96: #{_lambda_.1} parent=1 // pred_region
      %217 = dma.done [#allocation18], 2048
    $region97: #{_lambda_.1} parent=1 // pred_fallthru
      _
    // Predicated region
    $region98: #{_lambda_.1} parent=1 // pred_check
      _
    $region99: #{_lambda_.1} parent=1 // pred_check_branch
      %219 = sbr.rel (0) target = $region101
    $region100: #{_lambda_.1} parent=1 // pred_region
      %220 = dma.done [#allocation18], 16
    $region101: #{_lambda_.1} parent=1 // pred_fallthru
      _
    // Predicated region
    $region102: #{_lambda_.1} parent=1 // pred_check
      _
    $region103: #{_lambda_.1} parent=1 // pred_check_branch
      %222 = sbr.rel (0) target = $region105
    $region104: #{_lambda_.1} parent=1 // pred_region
      %223 = dma.done [#allocation21], 2048
    $region105: #{_lambda_.1} parent=1 // pred_fallthru
      _
    // Predicated region
    $region106: #{_lambda_.1} parent=1 // pred_check
      _
    $region107: #{_lambda_.1} parent=1 // pred_check_branch
      %225 = sbr.rel (0) target = $region109
    $region108: #{_lambda_.1} parent=1 // pred_region
      %226 = dma.done [#allocation21], 2048
    $region109: #{_lambda_.1} parent=1 // pred_fallthru
      _
    // Predicated region
    $region110: #{_lambda_.1} parent=1 // pred_check
      _
    $region111: #{_lambda_.1} parent=1 // pred_check_branch
      %228 = sbr.rel (0) target = $region113
    $region112: #{_lambda_.1} parent=1 // pred_region
      %229 = dma.done [#allocation24], 32
    $region113: #{_lambda_.1} parent=1 // pred_fallthru
      _
    %v231 = vld [vmem:[#allocation2] sm:$0xff]
    %v232 = vld [vmem:[#allocation2 + $0x8] sm:$0xff]
    %v233 = vld [vmem:[#allocation2 + $0x10] sm:$0xff]
    %v234 = vld [vmem:[#allocation2 + $0x18] sm:$0xff]
    %v235 = vpack.c.bf16 %v233, %v231
    %v236 = vpack.c.bf16 %v234, %v232
    %s237 = scalar_lea.vmem [#allocation2], 32
    %v238 = vld [vmem:[%s237] sm:$0xff]
    %v239 = vld [vmem:[%s237 + $0x8] sm:$0xff]
    %v240 = vld [vmem:[%s237 + $0x10] sm:$0xff]
    %v241 = vld [vmem:[%s237 + $0x18] sm:$0xff]
    %v242 = vpack.c.bf16 %v240, %v238
    %v243 = vpack.c.bf16 %v241, %v239
    %v245 = vshrl.u32 %v235, 16
    %v247 = vrot.slane %v245, 7
    %v248 = vshll.u32 %v235, 16
    %v250 = vor.u32 %v247, %v248
    %v252 = vshrl.u32 %v236, 16
    %v254 = vrot.slane %v252, 7
    %v255 = vshll.u32 %v236, 16
    %v257 = vor.u32 %v254, %v255
    %v263 = vshrl.u32 %v242, 16
    %v265 = vrot.slane %v263, 3
    %v266 = vshll.u32 %v242, 16
    %v268 = vrot.slane %v266, 4
    %v269 = vor.u32 %v265, %v268
    %v271 = vshrl.u32 %v243, 16
    %v273 = vrot.slane %v271, 3
    %v274 = vshll.u32 %v243, 16
    %v276 = vrot.slane %v274, 4
    %v277 = vor.u32 %v273, %v276
    %vm280 = vcmask 1040384
    %vm281 = vsmask.f32 256
    %vm282 = vmand %vm280, %vm281
    %v283 = vsel %vm282, 0, %v250
    %v284 = vsel %vm282, 0, %v257
    %v285 = vsel %vm282, %v247, 0
    %v286 = vsel %vm282, %v254, 0
    %vm287 = vcmask 1043456
    %v290 = vsel %vm287, %v285, 0
    %v293 = vsel %vm287, %v286, 0
    %vm295 = vcmask 1044480
    %vm296 = vsmask.f32 4352
    %vm297 = vmand %vm295, %vm296
    %v298 = vsel %vm297, %v290, %v269
    %v299 = vsel %vm297, %v293, %v277
    %v300 = vsel %vm297, %v269, 0
    %v301 = vsel %vm297, %v277, 0
    %v302 = vlaneseq
    %v303 = vshrl.u32 %v302, 7
    %v304 = vadd.s32 %v303, 8
    %v305 = vadd.s32 %v303, 16
    %v306 = vadd.s32 %v303, 24
    %v307 = vadd.s32 %v303, 32
    %v308 = vadd.s32 %v303, 40
    %vm309 = vcmp.ge.s32.totalorder %v303, 1
    %vm310 = vcmp.ge.s32.totalorder %v304, 1
    %vm311 = vcmp.ge.s32.totalorder %v305, 1
    %vm312 = vcmp.ge.s32.totalorder %v306, 1
    %vm313 = vcmp.ge.s32.totalorder %v307, 1
    %vm314 = vcmp.ge.s32.totalorder %v308, 1
    %vm315 = vcmp.lt.s32.totalorder %v303, 17
    %vm316 = vcmp.lt.s32.totalorder %v304, 17
    %vm317 = vcmp.lt.s32.totalorder %v305, 17
    %vm318 = vcmp.lt.s32.totalorder %v306, 17
    %vm319 = vcmp.lt.s32.totalorder %v307, 17
    %vm320 = vcmp.lt.s32.totalorder %v308, 17
    %vm321 = vmand %vm309, %vm315
    %vm322 = vmand %vm310, %vm316
    %vm323 = vmand %vm311, %vm317
    %vm324 = vmand %vm312, %vm318
    %vm325 = vmand %vm313, %vm319
    %vm326 = vmand %vm314, %vm320
    %vm327 = vcmp.ge.s32.totalorder %v303, 25
    %vm328 = vcmp.ge.s32.totalorder %v304, 25
    %vm329 = vcmp.ge.s32.totalorder %v305, 25
    %vm330 = vcmp.ge.s32.totalorder %v306, 25
    %vm331 = vcmp.ge.s32.totalorder %v307, 25
    %vm332 = vcmp.ge.s32.totalorder %v308, 25
    %vm333 = vcmp.lt.s32.totalorder %v303, 41
    %vm334 = vcmp.lt.s32.totalorder %v304, 41
    %vm335 = vcmp.lt.s32.totalorder %v305, 41
    %vm336 = vcmp.lt.s32.totalorder %v306, 41
    %vm337 = vcmp.lt.s32.totalorder %v307, 41
    %vm338 = vcmp.lt.s32.totalorder %v308, 41
    %vm339 = vmand %vm327, %vm333
    %vm340 = vmand %vm328, %vm334
    %vm341 = vmand %vm329, %vm335
    %vm342 = vmand %vm330, %vm336
    %vm343 = vmand %vm331, %vm337
    %vm344 = vmand %vm332, %vm338
    %vm345 = vmor %vm321, %vm339
    %vm346 = vmor %vm322, %vm340
    %vm347 = vmor %vm323, %vm341
    %vm348 = vmor %vm324, %vm342
    %vm349 = vmor %vm325, %vm343
    %vm350 = vmor %vm326, %vm344
    %v351 = vld [vmem:[#allocation5] sm:$0xf]
    %v352 = vld [vmem:[#allocation5 + $0x4] sm:$0xf]
    %v353 = vld [vmem:[#allocation5 + $0x8] sm:$0xf]
    %v354 = vld [vmem:[#allocation5 + $0xc] sm:$0xf]
    %v355 = vld [vmem:[#allocation5 + $0x10] sm:$0xf]
    %v356 = vld [vmem:[#allocation5 + $0x14] sm:$0xf]
    %v357 = vld [vmem:[#allocation5 + $0x18] sm:$0xf]
    %v358 = vld [vmem:[#allocation5 + $0x1c] sm:$0xf]
    %v359 = vld [vmem:[#allocation5 + $0x20] sm:$0xf]
    %v360 = vld [vmem:[#allocation5 + $0x24] sm:$0xf]
    %v361 = vld [vmem:[#allocation5 + $0x28] sm:$0xf]
    %v362 = vld [vmem:[#allocation5 + $0x2c] sm:$0xf]
    %v363 = vld [vmem:[#allocation5 + $0x30] sm:$0xf]
    %v364 = vld [vmem:[#allocation5 + $0x34] sm:$0xf]
    %v365 = vld [vmem:[#allocation5 + $0x38] sm:$0xf]
    %v366 = vld [vmem:[#allocation5 + $0x3c] sm:$0xf]
    %v367 = vld [vmem:[#allocation5 + $0x40] sm:$0xf]
    %v368 = vld [vmem:[#allocation5 + $0x44] sm:$0xf]
    %v369 = vld [vmem:[#allocation5 + $0x48] sm:$0xf]
    %v370 = vld [vmem:[#allocation5 + $0x4c] sm:$0xf]
    %v371 = vld [vmem:[#allocation5 + $0x50] sm:$0xf]
    %v372 = vld [vmem:[#allocation5 + $0x54] sm:$0xf]
    %v373 = vld [vmem:[#allocation5 + $0x58] sm:$0xf]
    %v374 = vld [vmem:[#allocation5 + $0x5c] sm:$0xf]
    %v375 = vld [vmem:[#allocation5 + $0x60] sm:$0xf]
    %v376 = vld [vmem:[#allocation5 + $0x64] sm:$0xf]
    %v377 = vld [vmem:[#allocation5 + $0x68] sm:$0xf]
    %v378 = vld [vmem:[#allocation5 + $0x6c] sm:$0xf]
    %v379 = vld [vmem:[#allocation5 + $0x70] sm:$0xf]
    %v380 = vld [vmem:[#allocation5 + $0x74] sm:$0xf]
    %v381 = vld [vmem:[#allocation5 + $0x78] sm:$0xf]
    %v382 = vld [vmem:[#allocation5 + $0x7c] sm:$0xf]
    %v383 = vld [vmem:[#allocation7] sm:$0x1]
    %v385 = vlaneseq
    %v386 = vshrl.u32 %v385, 7
    %v387 = vsub.s32 0, %v386
    %v388 = vrot.slane %v383, %v387
    %v422 = vunpack.c.l.b16 %v351
    %v423 = vunpack.c.l.b16 %v352
    %v424 = vunpack.c.l.b16 %v353
    %v425 = vunpack.c.l.b16 %v354
    %v426 = vunpack.c.l.b16 %v355
    %v427 = vunpack.c.l.b16 %v356
    %v428 = vunpack.c.l.b16 %v357
    %v429 = vunpack.c.l.b16 %v358
    %v430 = vunpack.c.l.b16 %v359
    %v431 = vunpack.c.l.b16 %v360
    %v432 = vunpack.c.l.b16 %v361
    %v433 = vunpack.c.l.b16 %v362
    %v434 = vunpack.c.l.b16 %v363
    %v435 = vunpack.c.l.b16 %v364
    %v436 = vunpack.c.l.b16 %v365
    %v437 = vunpack.c.l.b16 %v366
    %v438 = vunpack.c.l.b16 %v367
    %v439 = vunpack.c.l.b16 %v368
    %v440 = vunpack.c.l.b16 %v369
    %v441 = vunpack.c.l.b16 %v370
    %v442 = vunpack.c.l.b16 %v371
    %v443 = vunpack.c.l.b16 %v372
    %v444 = vunpack.c.l.b16 %v373
    %v445 = vunpack.c.l.b16 %v374
    %v446 = vunpack.c.l.b16 %v375
    %v447 = vunpack.c.l.b16 %v376
    %v448 = vunpack.c.l.b16 %v377
    %v449 = vunpack.c.l.b16 %v378
    %v450 = vunpack.c.l.b16 %v379
    %v451 = vunpack.c.l.b16 %v380
    %v452 = vunpack.c.l.b16 %v381
    %v453 = vunpack.c.l.b16 %v382
    %v454 = vpack.c.b16 %v423, %v422
    %v455 = vpack.c.b16 %v425, %v424
    %v456 = vpack.c.b16 %v427, %v426
    %v457 = vpack.c.b16 %v429, %v428
    %v458 = vpack.c.b16 %v431, %v430
    %v459 = vpack.c.b16 %v433, %v432
    %v460 = vpack.c.b16 %v435, %v434
    %v461 = vpack.c.b16 %v437, %v436
    %v462 = vpack.c.b16 %v439, %v438
    %v463 = vpack.c.b16 %v441, %v440
    %v464 = vpack.c.b16 %v443, %v442
    %v465 = vpack.c.b16 %v445, %v444
    %v466 = vpack.c.b16 %v447, %v446
    %v467 = vpack.c.b16 %v449, %v448
    %v468 = vpack.c.b16 %v451, %v450
    %v469 = vpack.c.b16 %v453, %v452
    %486 = vmatprep.subr.bf16.mxu0 0
    %487 = vmatpush1.bf16.msra.mxu0 %v454
    %488 = vmatprep.subr.bf16.mxu0 0
    %489 = vmatpush1.bf16.msra.mxu0 %v455
    %490 = vmatprep.subr.bf16.mxu0 0
    %491 = vmatpush1.bf16.msra.mxu0 %v456
    %492 = vmatprep.subr.bf16.mxu0 0
    %493 = vmatpush1.bf16.msra.mxu0 %v457
    %494 = vmatprep.subr.bf16.mxu0 0
    %495 = vmatpush1.bf16.msra.mxu0 %v458
    %496 = vmatprep.subr.bf16.mxu0 0
    %497 = vmatpush1.bf16.msra.mxu0 %v459
    %498 = vmatprep.subr.bf16.mxu0 0
    %499 = vmatpush1.bf16.msra.mxu0 %v460
    %500 = vmatprep.subr.bf16.mxu0 0
    %501 = vmatpush1.bf16.msra.mxu0 %v461
    %502 = vmatprep.subr.bf16.mxu0 0
    %503 = vmatpush1.bf16.msra.mxu0 %v462
    %504 = vmatprep.subr.bf16.mxu0 0
    %505 = vmatpush1.bf16.msra.mxu0 %v463
    %506 = vmatprep.subr.bf16.mxu0 0
    %507 = vmatpush1.bf16.msra.mxu0 %v464
    %508 = vmatprep.subr.bf16.mxu0 0
    %509 = vmatpush1.bf16.msra.mxu0 %v465
    %510 = vmatprep.subr.bf16.mxu0 0
    %511 = vmatpush1.bf16.msra.mxu0 %v466
    %512 = vmatprep.subr.bf16.mxu0 0
    %513 = vmatpush1.bf16.msra.mxu0 %v467
    %514 = vmatprep.subr.bf16.mxu0 0
    %515 = vmatpush1.bf16.msra.mxu0 %v468
    %516 = vmatprep.subr.bf16.mxu0 0
    %517 = vmatpush1.bf16.msra.mxu0 %v469
    %518 = vmatprep.mubr.bf16.mxu0 %v284
    %519 = vmatmul.mubr.bf16.gmra.mrb[0].mxu0 %v283
    %v520 = vpop.f32.mrb[0].mxu0
    %v521 = vadd.f32 %v388, %v520
    %v522 = vpop.f32.mrb[0].mxu0
    %v523 = vpop.f32.mrb[0].mxu0
    %v524 = vadd.f32 %v388, %v523
    %v525 = vpop.f32.mrb[0].mxu0
    %526 = vmatprep.mubr.bf16.mxu0 %v299
    %527 = vmatmul.mubr.bf16.gmra.mrb[0].mxu0 %v298
    %v528 = vpop.f32.mrb[0].mxu0
    %v529 = vadd.f32 %v388, %v528
    %v530 = vpop.f32.mrb[0].mxu0
    %v531 = vpop.f32.mrb[0].mxu0
    %v532 = vadd.f32 %v388, %v531
    %v533 = vpop.f32.mrb[0].mxu0
    %534 = vmatprep.mubr.bf16.mxu0 %v301
    %535 = vmatmul.mubr.bf16.gmra.mrb[0].mxu0 %v300
    %v536 = vpop.f32.mrb[0].mxu0
    %v537 = vadd.f32 %v388, %v536
    %v538 = vpop.f32.mrb[0].mxu0
    %v539 = vpop.f32.mrb[0].mxu0
    %v540 = vadd.f32 %v388, %v539
    %v541 = vpop.f32.mrb[0].mxu0
    %542 = vdwg.mxu0
    %v543 = vmul.f32 %v521, 0.1
    %v544 = vmul.f32 %v524, 0.1
    %v545 = vmul.f32 %v529, 0.1
    %v546 = vmul.f32 %v532, 0.1
    %v547 = vmul.f32 %v537, 0.1
    %v548 = vmul.f32 %v540, 0.1
    %v549 = vmax.f32 %v521, %v543
    %v550 = vmax.f32 %v524, %v544
    %v551 = vmax.f32 %v529, %v545
    %v552 = vmax.f32 %v532, %v546
    %v553 = vmax.f32 %v537, %v547
    %v554 = vmax.f32 %v540, %v548
    %v555 = vsel %vm345, %v549, 0.0
    %v556 = vsel %vm346, %v550, 0.0
    %v557 = vsel %vm347, %v551, 0.0
    %v558 = vsel %vm348, %v552, 0.0
    %v559 = vsel %vm349, %v553, 0.0
    %v560 = vsel %vm350, %v554, 0.0
    %v561 = vpack.c.bf16 %v556, %v555
    %v562 = vpack.c.bf16 %v558, %v557
    %v563 = vpack.c.bf16 %v560, %v559
    %v564 = vld [vmem:[#allocation8] sm:$0xf]
    %v565 = vld [vmem:[#allocation8 + $0x4] sm:$0xf]
    %v566 = vld [vmem:[#allocation8 + $0x8] sm:$0xf]
    %v567 = vld [vmem:[#allocation8 + $0xc] sm:$0xf]
    %v568 = vld [vmem:[#allocation8 + $0x10] sm:$0xf]
    %v569 = vld [vmem:[#allocation8 + $0x14] sm:$0xf]
    %v570 = vld [vmem:[#allocation8 + $0x18] sm:$0xf]
    %v571 = vld [vmem:[#allocation8 + $0x1c] sm:$0xf]
    %v572 = vld [vmem:[#allocation8 + $0x20] sm:$0xf]
    %v573 = vld [vmem:[#allocation8 + $0x24] sm:$0xf]
    %v574 = vld [vmem:[#allocation8 + $0x28] sm:$0xf]
    %v575 = vld [vmem:[#allocation8 + $0x2c] sm:$0xf]
    %v576 = vld [vmem:[#allocation8 + $0x30] sm:$0xf]
    %v577 = vld [vmem:[#allocation8 + $0x34] sm:$0xf]
    %v578 = vld [vmem:[#allocation8 + $0x38] sm:$0xf]
    %v579 = vld [vmem:[#allocation8 + $0x3c] sm:$0xf]
    %v580 = vld [vmem:[#allocation10] sm:$0x1]
    %v582 = vlaneseq
    %v583 = vshrl.u32 %v582, 7
    %v584 = vsub.s32 0, %v583
    %v585 = vrot.slane %v580, %v584
    %v603 = vunpack.c.l.b16 %v564
    %v604 = vunpack.c.l.b16 %v565
    %v605 = vunpack.c.l.b16 %v566
    %v606 = vunpack.c.l.b16 %v567
    %v607 = vunpack.c.l.b16 %v568
    %v608 = vunpack.c.l.b16 %v569
    %v609 = vunpack.c.l.b16 %v570
    %v610 = vunpack.c.l.b16 %v571
    %v611 = vunpack.c.l.b16 %v572
    %v612 = vunpack.c.l.b16 %v573
    %v613 = vunpack.c.l.b16 %v574
    %v614 = vunpack.c.l.b16 %v575
    %v615 = vunpack.c.l.b16 %v576
    %v616 = vunpack.c.l.b16 %v577
    %v617 = vunpack.c.l.b16 %v578
    %v618 = vunpack.c.l.b16 %v579
    %v619 = vpack.c.b16 %v604, %v603
    %v620 = vpack.c.b16 %v606, %v605
    %v621 = vpack.c.b16 %v608, %v607
    %v622 = vpack.c.b16 %v610, %v609
    %v623 = vpack.c.b16 %v612, %v611
    %v624 = vpack.c.b16 %v614, %v613
    %v625 = vpack.c.b16 %v616, %v615
    %v626 = vpack.c.b16 %v618, %v617
    %635 = vmatprep.subr.bf16.mxu0 0
    %636 = vmatpush1.bf16.msra.mxu0 %v619
    %637 = vmatprep.subr.bf16.mxu0 0
    %638 = vmatpush1.bf16.msra.mxu0 %v620
    %639 = vmatprep.subr.bf16.mxu0 0
    %640 = vmatpush1.bf16.msra.mxu0 %v621
    %641 = vmatprep.subr.bf16.mxu0 0
    %642 = vmatpush1.bf16.msra.mxu0 %v622
    %643 = vmatprep.subr.bf16.mxu0 0
    %644 = vmatpush1.bf16.msra.mxu0 %v623
    %645 = vmatprep.subr.bf16.mxu0 0
    %646 = vmatpush1.bf16.msra.mxu0 %v624
    %647 = vmatprep.subr.bf16.mxu0 0
    %648 = vmatpush1.bf16.msra.mxu0 %v625
    %649 = vmatprep.subr.bf16.mxu0 0
    %650 = vmatpush1.bf16.msra.mxu0 %v626
    %651 = vmatprep.subr.bf16.mxu0 0
    %652 = vmatpush1.bf16.msra.mxu0 0
    %653 = vmatprep.subr.bf16.mxu0 0
    %654 = vmatpush1.bf16.msra.mxu0 0
    %655 = vmatprep.subr.bf16.mxu0 0
    %656 = vmatpush1.bf16.msra.mxu0 0
    %657 = vmatprep.subr.bf16.mxu0 0
    %658 = vmatpush1.bf16.msra.mxu0 0
    %659 = vmatprep.subr.bf16.mxu0 0
    %660 = vmatpush1.bf16.msra.mxu0 0
    %661 = vmatprep.subr.bf16.mxu0 0
    %662 = vmatpush1.bf16.msra.mxu0 0
    %663 = vmatprep.subr.bf16.mxu0 0
    %664 = vmatpush1.bf16.msra.mxu0 0
    %665 = vmatprep.subr.bf16.mxu0 0
    %666 = vmatpush1.bf16.msra.mxu0 0
    %667 = vmatprep.mubr.bf16.mxu0 0
    %668 = vmatmul.mubr.bf16.gmra.mrb[0].mxu0 %v561
    %v669 = vpop.f32.mrb[0].mxu0
    %v670 = vadd.f32 %v585, %v669
    %v671 = vpop.f32.mrb[0].mxu0
    %v672 = vpop.f32.mrb[0].mxu0
    %v673 = vadd.f32 %v585, %v672
    %v674 = vpop.f32.mrb[0].mxu0
    %675 = vmatprep.mubr.bf16.mxu0 0
    %676 = vmatmul.mubr.bf16.gmra.mrb[0].mxu0 %v562
    %v677 = vpop.f32.mrb[0].mxu0
    %v678 = vadd.f32 %v585, %v677
    %v679 = vpop.f32.mrb[0].mxu0
    %v680 = vpop.f32.mrb[0].mxu0
    %v681 = vadd.f32 %v585, %v680
    %v682 = vpop.f32.mrb[0].mxu0
    %683 = vmatprep.mubr.bf16.mxu0 0
    %684 = vmatmul.mubr.bf16.gmra.mrb[0].mxu0 %v563
    %v685 = vpop.f32.mrb[0].mxu0
    %v686 = vadd.f32 %v585, %v685
    %v687 = vpop.f32.mrb[0].mxu0
    %v688 = vpop.f32.mrb[0].mxu0
    %v689 = vadd.f32 %v585, %v688
    %v690 = vpop.f32.mrb[0].mxu0
    %691 = vdwg.mxu0
    %v692 = vmul.f32 %v670, 0.1
    %v693 = vmul.f32 %v673, 0.1
    %v694 = vmul.f32 %v678, 0.1
    %v695 = vmul.f32 %v681, 0.1
    %v696 = vmul.f32 %v686, 0.1
    %v697 = vmul.f32 %v689, 0.1
    %v698 = vmax.f32 %v670, %v692
    %v699 = vmax.f32 %v673, %v693
    %v700 = vmax.f32 %v678, %v694
    %v701 = vmax.f32 %v681, %v695
    %v702 = vmax.f32 %v686, %v696
    %v703 = vmax.f32 %v689, %v697
    %v704 = vsel %vm345, %v698, 0.0
    %v705 = vsel %vm346, %v699, 0.0
    %v706 = vsel %vm347, %v700, 0.0
    %v707 = vsel %vm348, %v701, 0.0
    %v708 = vsel %vm349, %v702, 0.0
    %v709 = vsel %vm350, %v703, 0.0
    %v710 = vpack.c.bf16 %v705, %v704
    %v711 = vpack.c.bf16 %v707, %v706
    %v712 = vpack.c.bf16 %v709, %v708
    %v714 = vshrl.u32 %v710, 16
    %v716 = vrot.slane %v714, 7
    %v717 = vshll.u32 %v710, 16
    %v719 = vor.u32 %v716, %v717
    %v721 = vshrl.u32 %v711, 16
    %v723 = vrot.slane %v721, 7
    %v724 = vshll.u32 %v711, 16
    %v726 = vor.u32 %v723, %v724
    %v727 = vsel %vm281, %v716, %v726
    %v729 = vshrl.u32 %v712, 16
    %v731 = vrot.slane %v729, 7
    %v732 = vshll.u32 %v712, 16
    %v734 = vor.u32 %v731, %v732
    %v735 = vsel %vm281, %v723, %v734
    %v739 = vsel %vm282, 0, %v719
    %vm740 = vsmask.f32 7424
    %v741 = vrot.slane %v717, 1
    %v742 = vor.u32 %v714, %v741
    %v743 = vrot.slane %v724, 1
    %v744 = vsel %vm740, %v742, %v743
    %v745 = vor.u32 %v721, %v743
    %v746 = vrot.slane %v732, 1
    %v747 = vsel %vm740, %v745, %v746
    %v748 = vor.u32 %v729, %v746
    %vm752 = vcmask 1047552
    %vm753 = vmand %vm752, %vm740
    %v754 = vsel %vm753, %v748, 0
    %v755 = vld [vmem:[#allocation11] sm:$0xf]
    %v756 = vld [vmem:[#allocation11 + $0x4] sm:$0xf]
    %v757 = vld [vmem:[#allocation11 + $0x8] sm:$0xf]
    %v758 = vld [vmem:[#allocation11 + $0xc] sm:$0xf]
    %v759 = vld [vmem:[#allocation11 + $0x10] sm:$0xf]
    %v760 = vld [vmem:[#allocation11 + $0x14] sm:$0xf]
    %v761 = vld [vmem:[#allocation11 + $0x18] sm:$0xf]
    %v762 = vld [vmem:[#allocation11 + $0x1c] sm:$0xf]
    %v763 = vld [vmem:[#allocation11 + $0x20] sm:$0xf]
    %v764 = vld [vmem:[#allocation11 + $0x24] sm:$0xf]
    %v765 = vld [vmem:[#allocation11 + $0x28] sm:$0xf]
    %v766 = vld [vmem:[#allocation11 + $0x2c] sm:$0xf]
    %v767 = vld [vmem:[#allocation11 + $0x30] sm:$0xf]
    %v768 = vld [vmem:[#allocation11 + $0x34] sm:$0xf]
    %v769 = vld [vmem:[#allocation11 + $0x38] sm:$0xf]
    %v770 = vld [vmem:[#allocation11 + $0x3c] sm:$0xf]
    %v771 = vld [vmem:[#allocation11 + $0x40] sm:$0xf]
    %v772 = vld [vmem:[#allocation11 + $0x44] sm:$0xf]
    %v773 = vld [vmem:[#allocation11 + $0x48] sm:$0xf]
    %v774 = vld [vmem:[#allocation11 + $0x4c] sm:$0xf]
    %v775 = vld [vmem:[#allocation11 + $0x50] sm:$0xf]
    %v776 = vld [vmem:[#allocation11 + $0x54] sm:$0xf]
    %v777 = vld [vmem:[#allocation11 + $0x58] sm:$0xf]
    %v778 = vld [vmem:[#allocation11 + $0x5c] sm:$0xf]
    %v779 = vld [vmem:[#allocation11 + $0x60] sm:$0xf]
    %v780 = vld [vmem:[#allocation11 + $0x64] sm:$0xf]
    %v781 = vld [vmem:[#allocation11 + $0x68] sm:$0xf]
    %v782 = vld [vmem:[#allocation11 + $0x6c] sm:$0xf]
    %v783 = vld [vmem:[#allocation11 + $0x70] sm:$0xf]
    %v784 = vld [vmem:[#allocation11 + $0x74] sm:$0xf]
    %v785 = vld [vmem:[#allocation11 + $0x78] sm:$0xf]
    %v786 = vld [vmem:[#allocation11 + $0x7c] sm:$0xf]
    %v787 = vld [vmem:[#allocation11 + $0x80] sm:$0xf]
    %v788 = vld [vmem:[#allocation11 + $0x84] sm:$0xf]
    %v789 = vld [vmem:[#allocation11 + $0x88] sm:$0xf]
    %v790 = vld [vmem:[#allocation11 + $0x8c] sm:$0xf]
    %v791 = vld [vmem:[#allocation11 + $0x90] sm:$0xf]
    %v792 = vld [vmem:[#allocation11 + $0x94] sm:$0xf]
    %v793 = vld [vmem:[#allocation11 + $0x98] sm:$0xf]
    %v794 = vld [vmem:[#allocation11 + $0x9c] sm:$0xf]
    %v795 = vld [vmem:[#allocation11 + $0xa0] sm:$0xf]
    %v796 = vld [vmem:[#allocation11 + $0xa4] sm:$0xf]
    %v797 = vld [vmem:[#allocation11 + $0xa8] sm:$0xf]
    %v798 = vld [vmem:[#allocation11 + $0xac] sm:$0xf]
    %v799 = vld [vmem:[#allocation11 + $0xb0] sm:$0xf]
    %v800 = vld [vmem:[#allocation11 + $0xb4] sm:$0xf]
    %v801 = vld [vmem:[#allocation11 + $0xb8] sm:$0xf]
    %v802 = vld [vmem:[#allocation11 + $0xbc] sm:$0xf]
    %v803 = vld [vmem:[#allocation13] sm:$0x1]
    %v805 = vlaneseq
    %v806 = vshrl.u32 %v805, 7
    %v807 = vsub.s32 0, %v806
    %v808 = vrot.slane %v803, %v807
    %v858 = vunpack.c.l.b16 %v755
    %v859 = vunpack.c.l.b16 %v756
    %v860 = vunpack.c.l.b16 %v757
    %v861 = vunpack.c.l.b16 %v758
    %v862 = vunpack.c.l.b16 %v759
    %v863 = vunpack.c.l.b16 %v760
    %v864 = vunpack.c.l.b16 %v761
    %v865 = vunpack.c.l.b16 %v762
    %v866 = vunpack.c.l.b16 %v763
    %v867 = vunpack.c.l.b16 %v764
    %v868 = vunpack.c.l.b16 %v765
    %v869 = vunpack.c.l.b16 %v766
    %v870 = vunpack.c.l.b16 %v767
    %v871 = vunpack.c.l.b16 %v768
    %v872 = vunpack.c.l.b16 %v769
    %v873 = vunpack.c.l.b16 %v770
    %v874 = vunpack.c.l.b16 %v771
    %v875 = vunpack.c.l.b16 %v772
    %v876 = vunpack.c.l.b16 %v773
    %v877 = vunpack.c.l.b16 %v774
    %v878 = vunpack.c.l.b16 %v775
    %v879 = vunpack.c.l.b16 %v776
    %v880 = vunpack.c.l.b16 %v777
    %v881 = vunpack.c.l.b16 %v778
    %v882 = vunpack.c.l.b16 %v779
    %v883 = vunpack.c.l.b16 %v780
    %v884 = vunpack.c.l.b16 %v781
    %v885 = vunpack.c.l.b16 %v782
    %v886 = vunpack.c.l.b16 %v783
    %v887 = vunpack.c.l.b16 %v784
    %v888 = vunpack.c.l.b16 %v785
    %v889 = vunpack.c.l.b16 %v786
    %v890 = vunpack.c.l.b16 %v787
    %v891 = vunpack.c.l.b16 %v788
    %v892 = vunpack.c.l.b16 %v789
    %v893 = vunpack.c.l.b16 %v790
    %v894 = vunpack.c.l.b16 %v791
    %v895 = vunpack.c.l.b16 %v792
    %v896 = vunpack.c.l.b16 %v793
    %v897 = vunpack.c.l.b16 %v794
    %v898 = vunpack.c.l.b16 %v795
    %v899 = vunpack.c.l.b16 %v796
    %v900 = vunpack.c.l.b16 %v797
    %v901 = vunpack.c.l.b16 %v798
    %v902 = vunpack.c.l.b16 %v799
    %v903 = vunpack.c.l.b16 %v800
    %v904 = vunpack.c.l.b16 %v801
    %v905 = vunpack.c.l.b16 %v802
    %v906 = vpack.c.b16 %v859, %v858
    %v907 = vpack.c.b16 %v861, %v860
    %v908 = vpack.c.b16 %v863, %v862
    %v909 = vpack.c.b16 %v865, %v864
    %v910 = vpack.c.b16 %v867, %v866
    %v911 = vpack.c.b16 %v869, %v868
    %v912 = vpack.c.b16 %v871, %v870
    %v913 = vpack.c.b16 %v873, %v872
    %v914 = vpack.c.b16 %v875, %v874
    %v915 = vpack.c.b16 %v877, %v876
    %v916 = vpack.c.b16 %v879, %v878
    %v917 = vpack.c.b16 %v881, %v880
    %v918 = vpack.c.b16 %v883, %v882
    %v919 = vpack.c.b16 %v885, %v884
    %v920 = vpack.c.b16 %v887, %v886
    %v921 = vpack.c.b16 %v889, %v888
    %v922 = vpack.c.b16 %v891, %v890
    %v923 = vpack.c.b16 %v893, %v892
    %v924 = vpack.c.b16 %v895, %v894
    %v925 = vpack.c.b16 %v897, %v896
    %v926 = vpack.c.b16 %v899, %v898
    %v927 = vpack.c.b16 %v901, %v900
    %v928 = vpack.c.b16 %v903, %v902
    %v929 = vpack.c.b16 %v905, %v904
    %954 = vmatprep.subr.bf16.mxu0 0
    %955 = vmatpush1.bf16.msra.mxu0 %v906
    %956 = vmatprep.subr.bf16.mxu0 0
    %957 = vmatpush1.bf16.msra.mxu0 %v907
    %958 = vmatprep.subr.bf16.mxu0 0
    %959 = vmatpush1.bf16.msra.mxu0 %v908
    %960 = vmatprep.subr.bf16.mxu0 0
    %961 = vmatpush1.bf16.msra.mxu0 %v909
    %962 = vmatprep.subr.bf16.mxu0 0
    %963 = vmatpush1.bf16.msra.mxu0 %v910
    %964 = vmatprep.subr.bf16.mxu0 0
    %965 = vmatpush1.bf16.msra.mxu0 %v911
    %966 = vmatprep.subr.bf16.mxu0 0
    %967 = vmatpush1.bf16.msra.mxu0 %v912
    %968 = vmatprep.subr.bf16.mxu0 0
    %969 = vmatpush1.bf16.msra.mxu0 %v913
    %970 = vmatprep.subr.bf16.mxu0 0
    %971 = vmatpush1.bf16.msra.mxu0 %v914
    %972 = vmatprep.subr.bf16.mxu0 0
    %973 = vmatpush1.bf16.msra.mxu0 %v915
    %974 = vmatprep.subr.bf16.mxu0 0
    %975 = vmatpush1.bf16.msra.mxu0 %v916
    %976 = vmatprep.subr.bf16.mxu0 0
    %977 = vmatpush1.bf16.msra.mxu0 %v917
    %978 = vmatprep.subr.bf16.mxu0 0
    %979 = vmatpush1.bf16.msra.mxu0 %v918
    %980 = vmatprep.subr.bf16.mxu0 0
    %981 = vmatpush1.bf16.msra.mxu0 %v919
    %982 = vmatprep.subr.bf16.mxu0 0
    %983 = vmatpush1.bf16.msra.mxu0 %v920
    %984 = vmatprep.subr.bf16.mxu0 0
    %985 = vmatpush1.bf16.msra.mxu0 %v921
    %986 = vmatprep.mubr.bf16.mxu0 %v710
    %987 = vmatmul.mubr.bf16.gmra.mrb[0].mxu0 %v739
    %v988 = vpop.f32.mrb[0].mxu0
    %v989 = vadd.f32 %v808, %v988
    %v990 = vpop.f32.mrb[0].mxu0
    %v991 = vpop.f32.mrb[0].mxu0
    %v992 = vadd.f32 %v808, %v991
    %v993 = vpop.f32.mrb[0].mxu0
    %994 = vmatprep.mubr.bf16.mxu0 %v711
    %995 = vmatmul.mubr.bf16.gmra.mrb[0].mxu0 %v727
    %v996 = vpop.f32.mrb[0].mxu0
    %v997 = vadd.f32 %v808, %v996
    %v998 = vpop.f32.mrb[0].mxu0
    %v999 = vpop.f32.mrb[0].mxu0
    %v1000 = vadd.f32 %v808, %v999
    %v1001 = vpop.f32.mrb[0].mxu0
    %1002 = vmatprep.mubr.bf16.mxu0 %v712
    %1003 = vmatmul.mubr.bf16.gmra.mrb[0].mxu0 %v735
    %v1004 = vpop.f32.mrb[0].mxu0
    %v1005 = vadd.f32 %v808, %v1004
    %v1006 = vpop.f32.mrb[0].mxu0
    %v1007 = vpop.f32.mrb[0].mxu0
    %v1008 = vadd.f32 %v808, %v1007
    %v1009 = vpop.f32.mrb[0].mxu0
    %1010 = vdwg.mxu0
    %1011 = vmatprep.subr.bf16.mxu0 0
    %1012 = vmatpush1.bf16.msra.mxu0 %v922
    %1013 = vmatprep.subr.bf16.mxu0 0
    %1014 = vmatpush1.bf16.msra.mxu0 %v923
    %1015 = vmatprep.subr.bf16.mxu0 0
    %1016 = vmatpush1.bf16.msra.mxu0 %v924
    %1017 = vmatprep.subr.bf16.mxu0 0
    %1018 = vmatpush1.bf16.msra.mxu0 %v925
    %1019 = vmatprep.subr.bf16.mxu0 0
    %1020 = vmatpush1.bf16.msra.mxu0 %v926
    %1021 = vmatprep.subr.bf16.mxu0 0
    %1022 = vmatpush1.bf16.msra.mxu0 %v927
    %1023 = vmatprep.subr.bf16.mxu0 0
    %1024 = vmatpush1.bf16.msra.mxu0 %v928
    %1025 = vmatprep.subr.bf16.mxu0 0
    %1026 = vmatpush1.bf16.msra.mxu0 %v929
    %1027 = vmatprep.subr.bf16.mxu0 0
    %1028 = vmatpush1.bf16.msra.mxu0 0
    %1029 = vmatprep.subr.bf16.mxu0 0
    %1030 = vmatpush1.bf16.msra.mxu0 0
    %1031 = vmatprep.subr.bf16.mxu0 0
    %1032 = vmatpush1.bf16.msra.mxu0 0
    %1033 = vmatprep.subr.bf16.mxu0 0
    %1034 = vmatpush1.bf16.msra.mxu0 0
    %1035 = vmatprep.subr.bf16.mxu0 0
    %1036 = vmatpush1.bf16.msra.mxu0 0
    %1037 = vmatprep.subr.bf16.mxu0 0
    %1038 = vmatpush1.bf16.msra.mxu0 0
    %1039 = vmatprep.subr.bf16.mxu0 0
    %1040 = vmatpush1.bf16.msra.mxu0 0
    %1041 = vmatprep.subr.bf16.mxu0 0
    %1042 = vmatpush1.bf16.msra.mxu0 0
    %1043 = vmatprep.mubr.bf16.mxu0 0
    %1044 = vmatmul.mubr.bf16.gmra.mrb[0].mxu0 %v744
    %v1045 = vpop.f32.mrb[0].mxu0
    %v1046 = vadd.f32 %v989, %v1045
    %v1047 = vpop.f32.mrb[0].mxu0
    %v1048 = vpop.f32.mrb[0].mxu0
    %v1049 = vadd.f32 %v992, %v1048
    %v1050 = vpop.f32.mrb[0].mxu0
    %1051 = vmatprep.mubr.bf16.mxu0 0
    %1052 = vmatmul.mubr.bf16.gmra.mrb[0].mxu0 %v747
    %v1053 = vpop.f32.mrb[0].mxu0
    %v1054 = vadd.f32 %v997, %v1053
    %v1055 = vpop.f32.mrb[0].mxu0
    %v1056 = vpop.f32.mrb[0].mxu0
    %v1057 = vadd.f32 %v1000, %v1056
    %v1058 = vpop.f32.mrb[0].mxu0
    %1059 = vmatprep.mubr.bf16.mxu0 0
    %1060 = vmatmul.mubr.bf16.gmra.mrb[0].mxu0 %v754
    %v1061 = vpop.f32.mrb[0].mxu0
    %v1062 = vadd.f32 %v1005, %v1061
    %v1063 = vpop.f32.mrb[0].mxu0
    %v1064 = vpop.f32.mrb[0].mxu0
    %v1065 = vadd.f32 %v1008, %v1064
    %v1066 = vpop.f32.mrb[0].mxu0
    %1067 = vdwg.mxu0
    %v1068 = vmul.f32 %v1046, 0.1
    %v1069 = vmul.f32 %v1049, 0.1
    %v1070 = vmul.f32 %v1054, 0.1
    %v1071 = vmul.f32 %v1057, 0.1
    %v1072 = vmul.f32 %v1062, 0.1
    %v1073 = vmul.f32 %v1065, 0.1
    %v1074 = vmax.f32 %v1046, %v1068
    %v1075 = vmax.f32 %v1049, %v1069
    %v1076 = vmax.f32 %v1054, %v1070
    %v1077 = vmax.f32 %v1057, %v1071
    %v1078 = vmax.f32 %v1062, %v1072
    %v1079 = vmax.f32 %v1065, %v1073
    %v1080 = vsel %vm345, %v1074, 0.0
    %v1081 = vsel %vm346, %v1075, 0.0
    %v1082 = vsel %vm347, %v1076, 0.0
    %v1083 = vsel %vm348, %v1077, 0.0
    %v1084 = vsel %vm349, %v1078, 0.0
    %v1085 = vsel %vm350, %v1079, 0.0
    %v1086 = vunpack.c.l.bf16 %v561
    %v1087 = vunpack.c.h.bf16 %v561
    %v1088 = vunpack.c.l.bf16 %v562
    %v1089 = vunpack.c.h.bf16 %v562
    %v1090 = vunpack.c.l.bf16 %v563
    %v1091 = vunpack.c.h.bf16 %v563
    %v1092 = vadd.f32 %v1086, %v1080
    %v1093 = vadd.f32 %v1087, %v1081
    %v1094 = vadd.f32 %v1088, %v1082
    %v1095 = vadd.f32 %v1089, %v1083
    %v1096 = vadd.f32 %v1090, %v1084
    %v1097 = vadd.f32 %v1091, %v1085
    %v1098 = vpack.c.bf16 %v1093, %v1092
    %v1099 = vpack.c.bf16 %v1095, %v1094
    %v1100 = vpack.c.bf16 %v1097, %v1096
    %s1101 = scalar_lea.vmem [#allocation8], 64
    %v1102 = vld [vmem:[%s1101] sm:$0xf]
    %v1103 = vld [vmem:[%s1101 + $0x4] sm:$0xf]
    %v1104 = vld [vmem:[%s1101 + $0x8] sm:$0xf]
    %v1105 = vld [vmem:[%s1101 + $0xc] sm:$0xf]
    %v1106 = vld [vmem:[%s1101 + $0x10] sm:$0xf]
    %v1107 = vld [vmem:[%s1101 + $0x14] sm:$0xf]
    %v1108 = vld [vmem:[%s1101 + $0x18] sm:$0xf]
    %v1109 = vld [vmem:[%s1101 + $0x1c] sm:$0xf]
    %v1110 = vld [vmem:[%s1101 + $0x20] sm:$0xf]
    %v1111 = vld [vmem:[%s1101 + $0x24] sm:$0xf]
    %v1112 = vld [vmem:[%s1101 + $0x28] sm:$0xf]
    %v1113 = vld [vmem:[%s1101 + $0x2c] sm:$0xf]
    %v1114 = vld [vmem:[%s1101 + $0x30] sm:$0xf]
    %v1115 = vld [vmem:[%s1101 + $0x34] sm:$0xf]
    %v1116 = vld [vmem:[%s1101 + $0x38] sm:$0xf]
    %v1117 = vld [vmem:[%s1101 + $0x3c] sm:$0xf]
    %s1118 = scalar_lea.vmem [#allocation10], 1
    %v1119 = vld [vmem:[%s1118] sm:$0x1]
    %v1121 = vlaneseq
    %v1122 = vshrl.u32 %v1121, 7
    %v1123 = vsub.s32 0, %v1122
    %v1124 = vrot.slane %v1119, %v1123
    %v1142 = vunpack.c.l.b16 %v1102
    %v1143 = vunpack.c.l.b16 %v1103
    %v1144 = vunpack.c.l.b16 %v1104
    %v1145 = vunpack.c.l.b16 %v1105
    %v1146 = vunpack.c.l.b16 %v1106
    %v1147 = vunpack.c.l.b16 %v1107
    %v1148 = vunpack.c.l.b16 %v1108
    %v1149 = vunpack.c.l.b16 %v1109
    %v1150 = vunpack.c.l.b16 %v1110
    %v1151 = vunpack.c.l.b16 %v1111
    %v1152 = vunpack.c.l.b16 %v1112
    %v1153 = vunpack.c.l.b16 %v1113
    %v1154 = vunpack.c.l.b16 %v1114
    %v1155 = vunpack.c.l.b16 %v1115
    %v1156 = vunpack.c.l.b16 %v1116
    %v1157 = vunpack.c.l.b16 %v1117
    %v1158 = vpack.c.b16 %v1143, %v1142
    %v1159 = vpack.c.b16 %v1145, %v1144
    %v1160 = vpack.c.b16 %v1147, %v1146
    %v1161 = vpack.c.b16 %v1149, %v1148
    %v1162 = vpack.c.b16 %v1151, %v1150
    %v1163 = vpack.c.b16 %v1153, %v1152
    %v1164 = vpack.c.b16 %v1155, %v1154
    %v1165 = vpack.c.b16 %v1157, %v1156
    %1174 = vmatprep.subr.bf16.mxu0 0
    %1175 = vmatpush1.bf16.msra.mxu0 %v1158
    %1176 = vmatprep.subr.bf16.mxu0 0
    %1177 = vmatpush1.bf16.msra.mxu0 %v1159
    %1178 = vmatprep.subr.bf16.mxu0 0
    %1179 = vmatpush1.bf16.msra.mxu0 %v1160
    %1180 = vmatprep.subr.bf16.mxu0 0
    %1181 = vmatpush1.bf16.msra.mxu0 %v1161
    %1182 = vmatprep.subr.bf16.mxu0 0
    %1183 = vmatpush1.bf16.msra.mxu0 %v1162
    %1184 = vmatprep.subr.bf16.mxu0 0
    %1185 = vmatpush1.bf16.msra.mxu0 %v1163
    %1186 = vmatprep.subr.bf16.mxu0 0
    %1187 = vmatpush1.bf16.msra.mxu0 %v1164
    %1188 = vmatprep.subr.bf16.mxu0 0
    %1189 = vmatpush1.bf16.msra.mxu0 %v1165
    %1190 = vmatprep.subr.bf16.mxu0 0
    %1191 = vmatpush1.bf16.msra.mxu0 0
    %1192 = vmatprep.subr.bf16.mxu0 0
    %1193 = vmatpush1.bf16.msra.mxu0 0
    %1194 = vmatprep.subr.bf16.mxu0 0
    %1195 = vmatpush1.bf16.msra.mxu0 0
    %1196 = vmatprep.subr.bf16.mxu0 0
    %1197 = vmatpush1.bf16.msra.mxu0 0
    %1198 = vmatprep.subr.bf16.mxu0 0
    %1199 = vmatpush1.bf16.msra.mxu0 0
    %1200 = vmatprep.subr.bf16.mxu0 0
    %1201 = vmatpush1.bf16.msra.mxu0 0
    %1202 = vmatprep.subr.bf16.mxu0 0
    %1203 = vmatpush1.bf16.msra.mxu0 0
    %1204 = vmatprep.subr.bf16.mxu0 0
    %1205 = vmatpush1.bf16.msra.mxu0 0
    %1206 = vmatprep.mubr.bf16.mxu0 0
    %1207 = vmatmul.mubr.bf16.gmra.mrb[0].mxu0 %v1098
    %v1208 = vpop.f32.mrb[0].mxu0
    %v1209 = vadd.f32 %v1124, %v1208
    %v1210 = vpop.f32.mrb[0].mxu0
    %v1211 = vpop.f32.mrb[0].mxu0
    %v1212 = vadd.f32 %v1124, %v1211
    %v1213 = vpop.f32.mrb[0].mxu0
    %1214 = vmatprep.mubr.bf16.mxu0 0
    %1215 = vmatmul.mubr.bf16.gmra.mrb[0].mxu0 %v1099
    %v1216 = vpop.f32.mrb[0].mxu0
    %v1217 = vadd.f32 %v1124, %v1216
    %v1218 = vpop.f32.mrb[0].mxu0
    %v1219 = vpop.f32.mrb[0].mxu0
    %v1220 = vadd.f32 %v1124, %v1219
    %v1221 = vpop.f32.mrb[0].mxu0
    %1222 = vmatprep.mubr.bf16.mxu0 0
    %1223 = vmatmul.mubr.bf16.gmra.mrb[0].mxu0 %v1100
    %v1224 = vpop.f32.mrb[0].mxu0
    %v1225 = vadd.f32 %v1124, %v1224
    %v1226 = vpop.f32.mrb[0].mxu0
    %v1227 = vpop.f32.mrb[0].mxu0
    %v1228 = vadd.f32 %v1124, %v1227
    %v1229 = vpop.f32.mrb[0].mxu0
    %1230 = vdwg.mxu0
    %v1231 = vmul.f32 %v1209, 0.1
    %v1232 = vmul.f32 %v1212, 0.1
    %v1233 = vmul.f32 %v1217, 0.1
    %v1234 = vmul.f32 %v1220, 0.1
    %v1235 = vmul.f32 %v1225, 0.1
    %v1236 = vmul.f32 %v1228, 0.1
    %v1237 = vmax.f32 %v1209, %v1231
    %v1238 = vmax.f32 %v1212, %v1232
    %v1239 = vmax.f32 %v1217, %v1233
    %v1240 = vmax.f32 %v1220, %v1234
    %v1241 = vmax.f32 %v1225, %v1235
    %v1242 = vmax.f32 %v1228, %v1236
    %v1243 = vsel %vm345, %v1237, 0.0
    %v1244 = vsel %vm346, %v1238, 0.0
    %v1245 = vsel %vm347, %v1239, 0.0
    %v1246 = vsel %vm348, %v1240, 0.0
    %v1247 = vsel %vm349, %v1241, 0.0
    %v1248 = vsel %vm350, %v1242, 0.0
    %v1249 = vpack.c.bf16 %v1244, %v1243
    %v1250 = vpack.c.bf16 %v1246, %v1245
    %v1251 = vpack.c.bf16 %v1248, %v1247
    %v1253 = vshrl.u32 %v1249, 16
    %v1255 = vrot.slane %v1253, 7
    %v1256 = vshll.u32 %v1249, 16
    %v1258 = vor.u32 %v1255, %v1256
    %v1260 = vshrl.u32 %v1250, 16
    %v1262 = vrot.slane %v1260, 7
    %v1263 = vshll.u32 %v1250, 16
    %v1265 = vor.u32 %v1262, %v1263
    %v1266 = vsel %vm281, %v1255, %v1265
    %v1268 = vshrl.u32 %v1251, 16
    %v1270 = vrot.slane %v1268, 7
    %v1271 = vshll.u32 %v1251, 16
    %v1273 = vor.u32 %v1270, %v1271
    %v1274 = vsel %vm281, %v1262, %v1273
    %v1278 = vsel %vm282, 0, %v1258
    %v1279 = vrot.slane %v1256, 1
    %v1280 = vor.u32 %v1253, %v1279
    %v1281 = vrot.slane %v1263, 1
    %v1282 = vsel %vm740, %v1280, %v1281
    %v1283 = vor.u32 %v1260, %v1281
    %v1284 = vrot.slane %v1271, 1
    %v1285 = vsel %vm740, %v1283, %v1284
    %v1286 = vor.u32 %v1268, %v1284
    %v1290 = vsel %vm753, %v1286, 0
    %s1291 = scalar_lea.vmem [#allocation11], 192
    %v1292 = vld [vmem:[%s1291] sm:$0xf]
    %v1293 = vld [vmem:[%s1291 + $0x4] sm:$0xf]
    %v1294 = vld [vmem:[%s1291 + $0x8] sm:$0xf]
    %v1295 = vld [vmem:[%s1291 + $0xc] sm:$0xf]
    %v1296 = vld [vmem:[%s1291 + $0x10] sm:$0xf]
    %v1297 = vld [vmem:[%s1291 + $0x14] sm:$0xf]
    %v1298 = vld [vmem:[%s1291 + $0x18] sm:$0xf]
    %v1299 = vld [vmem:[%s1291 + $0x1c] sm:$0xf]
    %v1300 = vld [vmem:[%s1291 + $0x20] sm:$0xf]
    %v1301 = vld [vmem:[%s1291 + $0x24] sm:$0xf]
    %v1302 = vld [vmem:[%s1291 + $0x28] sm:$0xf]
    %v1303 = vld [vmem:[%s1291 + $0x2c] sm:$0xf]
    %v1304 = vld [vmem:[%s1291 + $0x30] sm:$0xf]
    %v1305 = vld [vmem:[%s1291 + $0x34] sm:$0xf]
    %v1306 = vld [vmem:[%s1291 + $0x38] sm:$0xf]
    %v1307 = vld [vmem:[%s1291 + $0x3c] sm:$0xf]
    %v1308 = vld [vmem:[%s1291 + $0x40] sm:$0xf]
    %v1309 = vld [vmem:[%s1291 + $0x44] sm:$0xf]
    %v1310 = vld [vmem:[%s1291 + $0x48] sm:$0xf]
    %v1311 = vld [vmem:[%s1291 + $0x4c] sm:$0xf]
    %v1312 = vld [vmem:[%s1291 + $0x50] sm:$0xf]
    %v1313 = vld [vmem:[%s1291 + $0x54] sm:$0xf]
    %v1314 = vld [vmem:[%s1291 + $0x58] sm:$0xf]
    %v1315 = vld [vmem:[%s1291 + $0x5c] sm:$0xf]
    %v1316 = vld [vmem:[%s1291 + $0x60] sm:$0xf]
    %v1317 = vld [vmem:[%s1291 + $0x64] sm:$0xf]
    %v1318 = vld [vmem:[%s1291 + $0x68] sm:$0xf]
    %v1319 = vld [vmem:[%s1291 + $0x6c] sm:$0xf]
    %v1320 = vld [vmem:[%s1291 + $0x70] sm:$0xf]
    %v1321 = vld [vmem:[%s1291 + $0x74] sm:$0xf]
    %v1322 = vld [vmem:[%s1291 + $0x78] sm:$0xf]
    %v1323 = vld [vmem:[%s1291 + $0x7c] sm:$0xf]
    %v1324 = vld [vmem:[%s1291 + $0x80] sm:$0xf]
    %v1325 = vld [vmem:[%s1291 + $0x84] sm:$0xf]
    %v1326 = vld [vmem:[%s1291 + $0x88] sm:$0xf]
    %v1327 = vld [vmem:[%s1291 + $0x8c] sm:$0xf]
    %v1328 = vld [vmem:[%s1291 + $0x90] sm:$0xf]
    %v1329 = vld [vmem:[%s1291 + $0x94] sm:$0xf]
    %v1330 = vld [vmem:[%s1291 + $0x98] sm:$0xf]
    %v1331 = vld [vmem:[%s1291 + $0x9c] sm:$0xf]
    %v1332 = vld [vmem:[%s1291 + $0xa0] sm:$0xf]
    %v1333 = vld [vmem:[%s1291 + $0xa4] sm:$0xf]
    %v1334 = vld [vmem:[%s1291 + $0xa8] sm:$0xf]
    %v1335 = vld [vmem:[%s1291 + $0xac] sm:$0xf]
    %v1336 = vld [vmem:[%s1291 + $0xb0] sm:$0xf]
    %v1337 = vld [vmem:[%s1291 + $0xb4] sm:$0xf]
    %v1338 = vld [vmem:[%s1291 + $0xb8] sm:$0xf]
    %v1339 = vld [vmem:[%s1291 + $0xbc] sm:$0xf]
    %s1340 = scalar_lea.vmem [#allocation13], 1
    %v1341 = vld [vmem:[%s1340] sm:$0x1]
    %v1343 = vlaneseq
    %v1344 = vshrl.u32 %v1343, 7
    %v1345 = vsub.s32 0, %v1344
    %v1346 = vrot.slane %v1341, %v1345
    %v1396 = vunpack.c.l.b16 %v1292
    %v1397 = vunpack.c.l.b16 %v1293
    %v1398 = vunpack.c.l.b16 %v1294
    %v1399 = vunpack.c.l.b16 %v1295
    %v1400 = vunpack.c.l.b16 %v1296
    %v1401 = vunpack.c.l.b16 %v1297
    %v1402 = vunpack.c.l.b16 %v1298
    %v1403 = vunpack.c.l.b16 %v1299
    %v1404 = vunpack.c.l.b16 %v1300
    %v1405 = vunpack.c.l.b16 %v1301
    %v1406 = vunpack.c.l.b16 %v1302
    %v1407 = vunpack.c.l.b16 %v1303
    %v1408 = vunpack.c.l.b16 %v1304
    %v1409 = vunpack.c.l.b16 %v1305
    %v1410 = vunpack.c.l.b16 %v1306
    %v1411 = vunpack.c.l.b16 %v1307
    %v1412 = vunpack.c.l.b16 %v1308
    %v1413 = vunpack.c.l.b16 %v1309
    %v1414 = vunpack.c.l.b16 %v1310
    %v1415 = vunpack.c.l.b16 %v1311
    %v1416 = vunpack.c.l.b16 %v1312
    %v1417 = vunpack.c.l.b16 %v1313
    %v1418 = vunpack.c.l.b16 %v1314
    %v1419 = vunpack.c.l.b16 %v1315
    %v1420 = vunpack.c.l.b16 %v1316
    %v1421 = vunpack.c.l.b16 %v1317
    %v1422 = vunpack.c.l.b16 %v1318
    %v1423 = vunpack.c.l.b16 %v1319
    %v1424 = vunpack.c.l.b16 %v1320
    %v1425 = vunpack.c.l.b16 %v1321
    %v1426 = vunpack.c.l.b16 %v1322
    %v1427 = vunpack.c.l.b16 %v1323
    %v1428 = vunpack.c.l.b16 %v1324
    %v1429 = vunpack.c.l.b16 %v1325
    %v1430 = vunpack.c.l.b16 %v1326
    %v1431 = vunpack.c.l.b16 %v1327
    %v1432 = vunpack.c.l.b16 %v1328
    %v1433 = vunpack.c.l.b16 %v1329
    %v1434 = vunpack.c.l.b16 %v1330
    %v1435 = vunpack.c.l.b16 %v1331
    %v1436 = vunpack.c.l.b16 %v1332
    %v1437 = vunpack.c.l.b16 %v1333
    %v1438 = vunpack.c.l.b16 %v1334
    %v1439 = vunpack.c.l.b16 %v1335
    %v1440 = vunpack.c.l.b16 %v1336
    %v1441 = vunpack.c.l.b16 %v1337
    %v1442 = vunpack.c.l.b16 %v1338
    %v1443 = vunpack.c.l.b16 %v1339
    %v1444 = vpack.c.b16 %v1397, %v1396
    %v1445 = vpack.c.b16 %v1399, %v1398
    %v1446 = vpack.c.b16 %v1401, %v1400
    %v1447 = vpack.c.b16 %v1403, %v1402
    %v1448 = vpack.c.b16 %v1405, %v1404
    %v1449 = vpack.c.b16 %v1407, %v1406
    %v1450 = vpack.c.b16 %v1409, %v1408
    %v1451 = vpack.c.b16 %v1411, %v1410
    %v1452 = vpack.c.b16 %v1413, %v1412
    %v1453 = vpack.c.b16 %v1415, %v1414
    %v1454 = vpack.c.b16 %v1417, %v1416
    %v1455 = vpack.c.b16 %v1419, %v1418
    %v1456 = vpack.c.b16 %v1421, %v1420
    %v1457 = vpack.c.b16 %v1423, %v1422
    %v1458 = vpack.c.b16 %v1425, %v1424
    %v1459 = vpack.c.b16 %v1427, %v1426
    %v1460 = vpack.c.b16 %v1429, %v1428
    %v1461 = vpack.c.b16 %v1431, %v1430
    %v1462 = vpack.c.b16 %v1433, %v1432
    %v1463 = vpack.c.b16 %v1435, %v1434
    %v1464 = vpack.c.b16 %v1437, %v1436
    %v1465 = vpack.c.b16 %v1439, %v1438
    %v1466 = vpack.c.b16 %v1441, %v1440
    %v1467 = vpack.c.b16 %v1443, %v1442
    %1492 = vmatprep.subr.bf16.mxu0 0
    %1493 = vmatpush1.bf16.msra.mxu0 %v1444
    %1494 = vmatprep.subr.bf16.mxu0 0
    %1495 = vmatpush1.bf16.msra.mxu0 %v1445
    %1496 = vmatprep.subr.bf16.mxu0 0
    %1497 = vmatpush1.bf16.msra.mxu0 %v1446
    %1498 = vmatprep.subr.bf16.mxu0 0
    %1499 = vmatpush1.bf16.msra.mxu0 %v1447
    %1500 = vmatprep.subr.bf16.mxu0 0
    %1501 = vmatpush1.bf16.msra.mxu0 %v1448
    %1502 = vmatprep.subr.bf16.mxu0 0
    %1503 = vmatpush1.bf16.msra.mxu0 %v1449
    %1504 = vmatprep.subr.bf16.mxu0 0
    %1505 = vmatpush1.bf16.msra.mxu0 %v1450
    %1506 = vmatprep.subr.bf16.mxu0 0
    %1507 = vmatpush1.bf16.msra.mxu0 %v1451
    %1508 = vmatprep.subr.bf16.mxu0 0
    %1509 = vmatpush1.bf16.msra.mxu0 %v1452
    %1510 = vmatprep.subr.bf16.mxu0 0
    %1511 = vmatpush1.bf16.msra.mxu0 %v1453
    %1512 = vmatprep.subr.bf16.mxu0 0
    %1513 = vmatpush1.bf16.msra.mxu0 %v1454
    %1514 = vmatprep.subr.bf16.mxu0 0
    %1515 = vmatpush1.bf16.msra.mxu0 %v1455
    %1516 = vmatprep.subr.bf16.mxu0 0
    %1517 = vmatpush1.bf16.msra.mxu0 %v1456
    %1518 = vmatprep.subr.bf16.mxu0 0
    %1519 = vmatpush1.bf16.msra.mxu0 %v1457
    %1520 = vmatprep.subr.bf16.mxu0 0
    %1521 = vmatpush1.bf16.msra.mxu0 %v1458
    %1522 = vmatprep.subr.bf16.mxu0 0
    %1523 = vmatpush1.bf16.msra.mxu0 %v1459
    %1524 = vmatprep.mubr.bf16.mxu0 %v1249
    %1525 = vmatmul.mubr.bf16.gmra.mrb[0].mxu0 %v1278
    %v1526 = vpop.f32.mrb[0].mxu0
    %v1527 = vadd.f32 %v1346, %v1526
    %v1528 = vpop.f32.mrb[0].mxu0
    %v1529 = vpop.f32.mrb[0].mxu0
    %v1530 = vadd.f32 %v1346, %v1529
    %v1531 = vpop.f32.mrb[0].mxu0
    %1532 = vmatprep.mubr.bf16.mxu0 %v1250
    %1533 = vmatmul.mubr.bf16.gmra.mrb[0].mxu0 %v1266
    %v1534 = vpop.f32.mrb[0].mxu0
    %v1535 = vadd.f32 %v1346, %v1534
    %v1536 = vpop.f32.mrb[0].mxu0
    %v1537 = vpop.f32.mrb[0].mxu0
    %v1538 = vadd.f32 %v1346, %v1537
    %v1539 = vpop.f32.mrb[0].mxu0
    %1540 = vmatprep.mubr.bf16.mxu0 %v1251
    %1541 = vmatmul.mubr.bf16.gmra.mrb[0].mxu0 %v1274
    %v1542 = vpop.f32.mrb[0].mxu0
    %v1543 = vadd.f32 %v1346, %v1542
    %v1544 = vpop.f32.mrb[0].mxu0
    %v1545 = vpop.f32.mrb[0].mxu0
    %v1546 = vadd.f32 %v1346, %v1545
    %v1547 = vpop.f32.mrb[0].mxu0
    %1548 = vdwg.mxu0
    %1549 = vmatprep.subr.bf16.mxu0 0
    %1550 = vmatpush1.bf16.msra.mxu0 %v1460
    %1551 = vmatprep.subr.bf16.mxu0 0
    %1552 = vmatpush1.bf16.msra.mxu0 %v1461
    %1553 = vmatprep.subr.bf16.mxu0 0
    %1554 = vmatpush1.bf16.msra.mxu0 %v1462
    %1555 = vmatprep.subr.bf16.mxu0 0
    %1556 = vmatpush1.bf16.msra.mxu0 %v1463
    %1557 = vmatprep.subr.bf16.mxu0 0
    %1558 = vmatpush1.bf16.msra.mxu0 %v1464
    %1559 = vmatprep.subr.bf16.mxu0 0
    %1560 = vmatpush1.bf16.msra.mxu0 %v1465
    %1561 = vmatprep.subr.bf16.mxu0 0
    %1562 = vmatpush1.bf16.msra.mxu0 %v1466
    %1563 = vmatprep.subr.bf16.mxu0 0
    %1564 = vmatpush1.bf16.msra.mxu0 %v1467
    %1565 = vmatprep.subr.bf16.mxu0 0
    %1566 = vmatpush1.bf16.msra.mxu0 0
    %1567 = vmatprep.subr.bf16.mxu0 0
    %1568 = vmatpush1.bf16.msra.mxu0 0
    %1569 = vmatprep.subr.bf16.mxu0 0
    %1570 = vmatpush1.bf16.msra.mxu0 0
    %1571 = vmatprep.subr.bf16.mxu0 0
    %1572 = vmatpush1.bf16.msra.mxu0 0
    %1573 = vmatprep.subr.bf16.mxu0 0
    %1574 = vmatpush1.bf16.msra.mxu0 0
    %1575 = vmatprep.subr.bf16.mxu0 0
    %1576 = vmatpush1.bf16.msra.mxu0 0
    %1577 = vmatprep.subr.bf16.mxu0 0
    %1578 = vmatpush1.bf16.msra.mxu0 0
    %1579 = vmatprep.subr.bf16.mxu0 0
    %1580 = vmatpush1.bf16.msra.mxu0 0
    %1581 = vmatprep.mubr.bf16.mxu0 0
    %1582 = vmatmul.mubr.bf16.gmra.mrb[0].mxu0 %v1282
    %v1583 = vpop.f32.mrb[0].mxu0
    %v1584 = vadd.f32 %v1527, %v1583
    %v1585 = vpop.f32.mrb[0].mxu0
    %v1586 = vpop.f32.mrb[0].mxu0
    %v1587 = vadd.f32 %v1530, %v1586
    %v1588 = vpop.f32.mrb[0].mxu0
    %1589 = vmatprep.mubr.bf16.mxu0 0
    %1590 = vmatmul.mubr.bf16.gmra.mrb[0].mxu0 %v1285
    %v1591 = vpop.f32.mrb[0].mxu0
    %v1592 = vadd.f32 %v1535, %v1591
    %v1593 = vpop.f32.mrb[0].mxu0
    %v1594 = vpop.f32.mrb[0].mxu0
    %v1595 = vadd.f32 %v1538, %v1594
    %v1596 = vpop.f32.mrb[0].mxu0
    %1597 = vmatprep.mubr.bf16.mxu0 0
    %1598 = vmatmul.mubr.bf16.gmra.mrb[0].mxu0 %v1290
    %v1599 = vpop.f32.mrb[0].mxu0
    %v1600 = vadd.f32 %v1543, %v1599
    %v1601 = vpop.f32.mrb[0].mxu0
    %v1602 = vpop.f32.mrb[0].mxu0
    %v1603 = vadd.f32 %v1546, %v1602
    %v1604 = vpop.f32.mrb[0].mxu0
    %1605 = vdwg.mxu0
    %v1606 = vmul.f32 %v1584, 0.1
    %v1607 = vmul.f32 %v1587, 0.1
    %v1608 = vmul.f32 %v1592, 0.1
    %v1609 = vmul.f32 %v1595, 0.1
    %v1610 = vmul.f32 %v1600, 0.1
    %v1611 = vmul.f32 %v1603, 0.1
    %v1612 = vmax.f32 %v1584, %v1606
    %v1613 = vmax.f32 %v1587, %v1607
    %v1614 = vmax.f32 %v1592, %v1608
    %v1615 = vmax.f32 %v1595, %v1609
    %v1616 = vmax.f32 %v1600, %v1610
    %v1617 = vmax.f32 %v1603, %v1611
    %v1618 = vsel %vm345, %v1612, 0.0
    %v1619 = vsel %vm346, %v1613, 0.0
    %v1620 = vsel %vm347, %v1614, 0.0
    %v1621 = vsel %vm348, %v1615, 0.0
    %v1622 = vsel %vm349, %v1616, 0.0
    %v1623 = vsel %vm350, %v1617, 0.0
    %v1624 = vunpack.c.l.bf16 %v1098
    %v1625 = vunpack.c.h.bf16 %v1098
    %v1626 = vunpack.c.l.bf16 %v1099
    %v1627 = vunpack.c.h.bf16 %v1099
    %v1628 = vunpack.c.l.bf16 %v1100
    %v1629 = vunpack.c.h.bf16 %v1100
    %v1630 = vadd.f32 %v1624, %v1618
    %v1631 = vadd.f32 %v1625, %v1619
    %v1632 = vadd.f32 %v1626, %v1620
    %v1633 = vadd.f32 %v1627, %v1621
    %v1634 = vadd.f32 %v1628, %v1622
    %v1635 = vadd.f32 %v1629, %v1623
    %v1636 = vpack.c.bf16 %v1631, %v1630
    %v1637 = vpack.c.bf16 %v1633, %v1632
    %v1638 = vpack.c.bf16 %v1635, %v1634
    %v1639 = vld [vmem:[#allocation14] sm:$0xf]
    %v1640 = vld [vmem:[#allocation14 + $0x4] sm:$0xf]
    %v1641 = vld [vmem:[#allocation14 + $0x8] sm:$0xf]
    %v1642 = vld [vmem:[#allocation14 + $0xc] sm:$0xf]
    %v1643 = vld [vmem:[#allocation14 + $0x10] sm:$0xf]
    %v1644 = vld [vmem:[#allocation14 + $0x14] sm:$0xf]
    %v1645 = vld [vmem:[#allocation14 + $0x18] sm:$0xf]
    %v1646 = vld [vmem:[#allocation14 + $0x1c] sm:$0xf]
    %v1647 = vld [vmem:[#allocation14 + $0x20] sm:$0xf]
    %v1648 = vld [vmem:[#allocation14 + $0x24] sm:$0xf]
    %v1649 = vld [vmem:[#allocation14 + $0x28] sm:$0xf]
    %v1650 = vld [vmem:[#allocation14 + $0x2c] sm:$0xf]
    %v1651 = vld [vmem:[#allocation14 + $0x30] sm:$0xf]
    %v1652 = vld [vmem:[#allocation14 + $0x34] sm:$0xf]
    %v1653 = vld [vmem:[#allocation14 + $0x38] sm:$0xf]
    %v1654 = vld [vmem:[#allocation14 + $0x3c] sm:$0xf]
    %v1655 = vld [vmem:[#allocation16] sm:$0x1]
    %v1657 = vlaneseq
    %v1658 = vshrl.u32 %v1657, 7
    %v1659 = vsub.s32 0, %v1658
    %v1660 = vrot.slane %v1655, %v1659
    %v1678 = vunpack.c.l.b16 %v1639
    %v1679 = vunpack.c.l.b16 %v1640
    %v1680 = vunpack.c.l.b16 %v1641
    %v1681 = vunpack.c.l.b16 %v1642
    %v1682 = vunpack.c.l.b16 %v1643
    %v1683 = vunpack.c.l.b16 %v1644
    %v1684 = vunpack.c.l.b16 %v1645
    %v1685 = vunpack.c.l.b16 %v1646
    %v1686 = vunpack.c.l.b16 %v1647
    %v1687 = vunpack.c.l.b16 %v1648
    %v1688 = vunpack.c.l.b16 %v1649
    %v1689 = vunpack.c.l.b16 %v1650
    %v1690 = vunpack.c.l.b16 %v1651
    %v1691 = vunpack.c.l.b16 %v1652
    %v1692 = vunpack.c.l.b16 %v1653
    %v1693 = vunpack.c.l.b16 %v1654
    %v1694 = vpack.c.b16 %v1679, %v1678
    %v1695 = vpack.c.b16 %v1681, %v1680
    %v1696 = vpack.c.b16 %v1683, %v1682
    %v1697 = vpack.c.b16 %v1685, %v1684
    %v1698 = vpack.c.b16 %v1687, %v1686
    %v1699 = vpack.c.b16 %v1689, %v1688
    %v1700 = vpack.c.b16 %v1691, %v1690
    %v1701 = vpack.c.b16 %v1693, %v1692
    %1710 = vmatprep.subr.bf16.mxu0 0
    %1711 = vmatpush1.bf16.msra.mxu0 %v1694
    %1712 = vmatprep.subr.bf16.mxu0 0
    %1713 = vmatpush1.bf16.msra.mxu0 %v1695
    %1714 = vmatprep.subr.bf16.mxu0 0
    %1715 = vmatpush1.bf16.msra.mxu0 %v1696
    %1716 = vmatprep.subr.bf16.mxu0 0
    %1717 = vmatpush1.bf16.msra.mxu0 %v1697
    %1718 = vmatprep.subr.bf16.mxu0 0
    %1719 = vmatpush1.bf16.msra.mxu0 %v1698
    %1720 = vmatprep.subr.bf16.mxu0 0
    %1721 = vmatpush1.bf16.msra.mxu0 %v1699
    %1722 = vmatprep.subr.bf16.mxu0 0
    %1723 = vmatpush1.bf16.msra.mxu0 %v1700
    %1724 = vmatprep.subr.bf16.mxu0 0
    %1725 = vmatpush1.bf16.msra.mxu0 %v1701
    %1726 = vmatprep.subr.bf16.mxu0 0
    %1727 = vmatpush1.bf16.msra.mxu0 0
    %1728 = vmatprep.subr.bf16.mxu0 0
    %1729 = vmatpush1.bf16.msra.mxu0 0
    %1730 = vmatprep.subr.bf16.mxu0 0
    %1731 = vmatpush1.bf16.msra.mxu0 0
    %1732 = vmatprep.subr.bf16.mxu0 0
    %1733 = vmatpush1.bf16.msra.mxu0 0
    %1734 = vmatprep.subr.bf16.mxu0 0
    %1735 = vmatpush1.bf16.msra.mxu0 0
    %1736 = vmatprep.subr.bf16.mxu0 0
    %1737 = vmatpush1.bf16.msra.mxu0 0
    %1738 = vmatprep.subr.bf16.mxu0 0
    %1739 = vmatpush1.bf16.msra.mxu0 0
    %1740 = vmatprep.subr.bf16.mxu0 0
    %1741 = vmatpush1.bf16.msra.mxu0 0
    %1742 = vmatprep.mubr.bf16.mxu0 0
    %1743 = vmatmul.mubr.bf16.gmra.mrb[0].mxu0 %v1636
    %v1744 = vpop.f32.mrb[0].mxu0
    %v1745 = vadd.f32 %v1660, %v1744
    %v1746 = vpop.f32.mrb[0].mxu0
    %v1747 = vpop.f32.mrb[0].mxu0
    %v1748 = vadd.f32 %v1660, %v1747
    %v1749 = vpop.f32.mrb[0].mxu0
    %1750 = vmatprep.mubr.bf16.mxu0 0
    %1751 = vmatmul.mubr.bf16.gmra.mrb[0].mxu0 %v1637
    %v1752 = vpop.f32.mrb[0].mxu0
    %v1753 = vadd.f32 %v1660, %v1752
    %v1754 = vpop.f32.mrb[0].mxu0
    %v1755 = vpop.f32.mrb[0].mxu0
    %v1756 = vadd.f32 %v1660, %v1755
    %v1757 = vpop.f32.mrb[0].mxu0
    %1758 = vmatprep.mubr.bf16.mxu0 0
    %1759 = vmatmul.mubr.bf16.gmra.mrb[0].mxu0 %v1638
    %v1760 = vpop.f32.mrb[0].mxu0
    %v1761 = vadd.f32 %v1660, %v1760
    %v1762 = vpop.f32.mrb[0].mxu0
    %v1763 = vpop.f32.mrb[0].mxu0
    %v1764 = vadd.f32 %v1660, %v1763
    %v1765 = vpop.f32.mrb[0].mxu0
    %1766 = vdwg.mxu0
    %v1767 = vmul.f32 %v1745, 0.1
    %v1768 = vmul.f32 %v1748, 0.1
    %v1769 = vmul.f32 %v1753, 0.1
    %v1770 = vmul.f32 %v1756, 0.1
    %v1771 = vmul.f32 %v1761, 0.1
    %v1772 = vmul.f32 %v1764, 0.1
    %v1773 = vmax.f32 %v1745, %v1767
    %v1774 = vmax.f32 %v1748, %v1768
    %v1775 = vmax.f32 %v1753, %v1769
    %v1776 = vmax.f32 %v1756, %v1770
    %v1777 = vmax.f32 %v1761, %v1771
    %v1778 = vmax.f32 %v1764, %v1772
    %v1779 = vpack.c.bf16 %v1774, %v1773
    %v1780 = vpack.c.bf16 %v1776, %v1775
    %v1781 = vpack.c.bf16 %v1778, %v1777
    %v1782 = vld [vmem:[#allocation17] sm:$0xf]
    %v1783 = vld [vmem:[#allocation17 + $0x4] sm:$0xf]
    %v1784 = vld [vmem:[#allocation17 + $0x8] sm:$0xf]
    %v1785 = vld [vmem:[#allocation17 + $0xc] sm:$0xf]
    %v1786 = vld [vmem:[#allocation17 + $0x10] sm:$0xf]
    %v1787 = vld [vmem:[#allocation17 + $0x14] sm:$0xf]
    %v1788 = vld [vmem:[#allocation17 + $0x18] sm:$0xf]
    %v1789 = vld [vmem:[#allocation17 + $0x1c] sm:$0xf]
    %v1790 = vld [vmem:[#allocation17 + $0x20] sm:$0xf]
    %v1791 = vld [vmem:[#allocation17 + $0x24] sm:$0xf]
    %v1792 = vld [vmem:[#allocation17 + $0x28] sm:$0xf]
    %v1793 = vld [vmem:[#allocation17 + $0x2c] sm:$0xf]
    %v1794 = vld [vmem:[#allocation17 + $0x30] sm:$0xf]
    %v1795 = vld [vmem:[#allocation17 + $0x34] sm:$0xf]
    %v1796 = vld [vmem:[#allocation17 + $0x38] sm:$0xf]
    %v1797 = vld [vmem:[#allocation17 + $0x3c] sm:$0xf]
    %v1798 = vld [vmem:[#allocation17 + $0x40] sm:$0xf]
    %v1799 = vld [vmem:[#allocation17 + $0x44] sm:$0xf]
    %v1800 = vld [vmem:[#allocation17 + $0x48] sm:$0xf]
    %v1801 = vld [vmem:[#allocation17 + $0x4c] sm:$0xf]
    %v1802 = vld [vmem:[#allocation17 + $0x50] sm:$0xf]
    %v1803 = vld [vmem:[#allocation17 + $0x54] sm:$0xf]
    %v1804 = vld [vmem:[#allocation17 + $0x58] sm:$0xf]
    %v1805 = vld [vmem:[#allocation17 + $0x5c] sm:$0xf]
    %v1806 = vld [vmem:[#allocation17 + $0x60] sm:$0xf]
    %v1807 = vld [vmem:[#allocation17 + $0x64] sm:$0xf]
    %v1808 = vld [vmem:[#allocation17 + $0x68] sm:$0xf]
    %v1809 = vld [vmem:[#allocation17 + $0x6c] sm:$0xf]
    %v1810 = vld [vmem:[#allocation17 + $0x70] sm:$0xf]
    %v1811 = vld [vmem:[#allocation17 + $0x74] sm:$0xf]
    %v1812 = vld [vmem:[#allocation17 + $0x78] sm:$0xf]
    %v1813 = vld [vmem:[#allocation17 + $0x7c] sm:$0xf]
    %v1814 = vld [vmem:[#allocation19] sm:$0x1]
    %v1816 = vlaneseq
    %v1817 = vshrl.u32 %v1816, 7
    %v1818 = vsub.s32 0, %v1817
    %v1819 = vrot.slane %v1814, %v1818
    %v1853 = vunpack.c.l.b16 %v1782
    %v1854 = vunpack.c.l.b16 %v1783
    %v1855 = vunpack.c.l.b16 %v1784
    %v1856 = vunpack.c.l.b16 %v1785
    %v1857 = vunpack.c.l.b16 %v1786
    %v1858 = vunpack.c.l.b16 %v1787
    %v1859 = vunpack.c.l.b16 %v1788
    %v1860 = vunpack.c.l.b16 %v1789
    %v1861 = vunpack.c.l.b16 %v1790
    %v1862 = vunpack.c.l.b16 %v1791
    %v1863 = vunpack.c.l.b16 %v1792
    %v1864 = vunpack.c.l.b16 %v1793
    %v1865 = vunpack.c.l.b16 %v1794
    %v1866 = vunpack.c.l.b16 %v1795
    %v1867 = vunpack.c.l.b16 %v1796
    %v1868 = vunpack.c.l.b16 %v1797
    %v1869 = vunpack.c.l.b16 %v1798
    %v1870 = vunpack.c.l.b16 %v1799
    %v1871 = vunpack.c.l.b16 %v1800
    %v1872 = vunpack.c.l.b16 %v1801
    %v1873 = vunpack.c.l.b16 %v1802
    %v1874 = vunpack.c.l.b16 %v1803
    %v1875 = vunpack.c.l.b16 %v1804
    %v1876 = vunpack.c.l.b16 %v1805
    %v1877 = vunpack.c.l.b16 %v1806
    %v1878 = vunpack.c.l.b16 %v1807
    %v1879 = vunpack.c.l.b16 %v1808
    %v1880 = vunpack.c.l.b16 %v1809
    %v1881 = vunpack.c.l.b16 %v1810
    %v1882 = vunpack.c.l.b16 %v1811
    %v1883 = vunpack.c.l.b16 %v1812
    %v1884 = vunpack.c.l.b16 %v1813
    %v1885 = vpack.c.b16 %v1854, %v1853
    %v1886 = vpack.c.b16 %v1856, %v1855
    %v1887 = vpack.c.b16 %v1858, %v1857
    %v1888 = vpack.c.b16 %v1860, %v1859
    %v1889 = vpack.c.b16 %v1862, %v1861
    %v1890 = vpack.c.b16 %v1864, %v1863
    %v1891 = vpack.c.b16 %v1866, %v1865
    %v1892 = vpack.c.b16 %v1868, %v1867
    %v1893 = vpack.c.b16 %v1870, %v1869
    %v1894 = vpack.c.b16 %v1872, %v1871
    %v1895 = vpack.c.b16 %v1874, %v1873
    %v1896 = vpack.c.b16 %v1876, %v1875
    %v1897 = vpack.c.b16 %v1878, %v1877
    %v1898 = vpack.c.b16 %v1880, %v1879
    %v1899 = vpack.c.b16 %v1882, %v1881
    %v1900 = vpack.c.b16 %v1884, %v1883
    %1917 = vmatprep.subr.bf16.mxu0 0
    %1918 = vmatpush1.bf16.msra.mxu0 %v1885
    %1919 = vmatprep.subr.bf16.mxu0 0
    %1920 = vmatpush1.bf16.msra.mxu0 %v1886
    %1921 = vmatprep.subr.bf16.mxu0 0
    %1922 = vmatpush1.bf16.msra.mxu0 %v1887
    %1923 = vmatprep.subr.bf16.mxu0 0
    %1924 = vmatpush1.bf16.msra.mxu0 %v1888
    %1925 = vmatprep.subr.bf16.mxu0 0
    %1926 = vmatpush1.bf16.msra.mxu0 %v1889
    %1927 = vmatprep.subr.bf16.mxu0 0
    %1928 = vmatpush1.bf16.msra.mxu0 %v1890
    %1929 = vmatprep.subr.bf16.mxu0 0
    %1930 = vmatpush1.bf16.msra.mxu0 %v1891
    %1931 = vmatprep.subr.bf16.mxu0 0
    %1932 = vmatpush1.bf16.msra.mxu0 %v1892
    %1933 = vmatprep.subr.bf16.mxu0 0
    %1934 = vmatpush1.bf16.msra.mxu0 %v1893
    %1935 = vmatprep.subr.bf16.mxu0 0
    %1936 = vmatpush1.bf16.msra.mxu0 %v1894
    %1937 = vmatprep.subr.bf16.mxu0 0
    %1938 = vmatpush1.bf16.msra.mxu0 %v1895
    %1939 = vmatprep.subr.bf16.mxu0 0
    %1940 = vmatpush1.bf16.msra.mxu0 %v1896
    %1941 = vmatprep.subr.bf16.mxu0 0
    %1942 = vmatpush1.bf16.msra.mxu0 %v1897
    %1943 = vmatprep.subr.bf16.mxu0 0
    %1944 = vmatpush1.bf16.msra.mxu0 %v1898
    %1945 = vmatprep.subr.bf16.mxu0 0
    %1946 = vmatpush1.bf16.msra.mxu0 %v1899
    %1947 = vmatprep.subr.bf16.mxu0 0
    %1948 = vmatpush1.bf16.msra.mxu0 %v1900
    %1949 = vmatprep.mubr.bf16.mxu0 %v284
    %1950 = vmatmul.mubr.bf16.gmra.mrb[0].mxu0 %v283
    %v1951 = vpop.f32.mrb[0].mxu0
    %v1952 = vadd.f32 %v1819, %v1951
    %v1953 = vpop.f32.mrb[0].mxu0
    %v1954 = vpop.f32.mrb[0].mxu0
    %v1955 = vadd.f32 %v1819, %v1954
    %v1956 = vpop.f32.mrb[0].mxu0
    %1957 = vmatprep.mubr.bf16.mxu0 %v299
    %1958 = vmatmul.mubr.bf16.gmra.mrb[0].mxu0 %v298
    %v1959 = vpop.f32.mrb[0].mxu0
    %v1960 = vadd.f32 %v1819, %v1959
    %v1961 = vpop.f32.mrb[0].mxu0
    %v1962 = vpop.f32.mrb[0].mxu0
    %v1963 = vadd.f32 %v1819, %v1962
    %v1964 = vpop.f32.mrb[0].mxu0
    %1965 = vmatprep.mubr.bf16.mxu0 %v301
    %1966 = vmatmul.mubr.bf16.gmra.mrb[0].mxu0 %v300
    %v1967 = vpop.f32.mrb[0].mxu0
    %v1968 = vadd.f32 %v1819, %v1967
    %v1969 = vpop.f32.mrb[0].mxu0
    %v1970 = vpop.f32.mrb[0].mxu0
    %v1971 = vadd.f32 %v1819, %v1970
    %v1972 = vpop.f32.mrb[0].mxu0
    %1973 = vdwg.mxu0
    %v1974 = vmul.f32 %v1952, 0.1
    %v1975 = vmul.f32 %v1955, 0.1
    %v1976 = vmul.f32 %v1960, 0.1
    %v1977 = vmul.f32 %v1963, 0.1
    %v1978 = vmul.f32 %v1968, 0.1
    %v1979 = vmul.f32 %v1971, 0.1
    %v1980 = vmax.f32 %v1952, %v1974
    %v1981 = vmax.f32 %v1955, %v1975
    %v1982 = vmax.f32 %v1960, %v1976
    %v1983 = vmax.f32 %v1963, %v1977
    %v1984 = vmax.f32 %v1968, %v1978
    %v1985 = vmax.f32 %v1971, %v1979
    %v1986 = vpack.c.bf16 %v1981, %v1980
    %v1987 = vpack.c.bf16 %v1983, %v1982
    %v1988 = vpack.c.bf16 %v1985, %v1984
    %v1989 = vld [vmem:[#allocation20] sm:$0xff]
    %v1990 = vld [vmem:[#allocation20 + $0x8] sm:$0xff]
    %v1991 = vld [vmem:[#allocation20 + $0x10] sm:$0xff]
    %v1992 = vld [vmem:[#allocation20 + $0x18] sm:$0xff]
    %v1993 = vld [vmem:[#allocation20 + $0x20] sm:$0xff]
    %v1994 = vld [vmem:[#allocation20 + $0x28] sm:$0xff]
    %v1995 = vld [vmem:[#allocation20 + $0x30] sm:$0xff]
    %v1996 = vld [vmem:[#allocation20 + $0x38] sm:$0xff]
    %v1997 = vld [vmem:[#allocation20 + $0x40] sm:$0xff]
    %v1998 = vld [vmem:[#allocation20 + $0x48] sm:$0xff]
    %v1999 = vld [vmem:[#allocation20 + $0x50] sm:$0xff]
    %v2000 = vld [vmem:[#allocation20 + $0x58] sm:$0xff]
    %v2001 = vld [vmem:[#allocation20 + $0x60] sm:$0xff]
    %v2002 = vld [vmem:[#allocation20 + $0x68] sm:$0xff]
    %v2003 = vld [vmem:[#allocation20 + $0x70] sm:$0xff]
    %v2004 = vld [vmem:[#allocation20 + $0x78] sm:$0xff]
    %v2005 = vld [vmem:[#allocation22] sm:$0xff]
    %v2006 = vld [vmem:[#allocation22 + $0x8] sm:$0xff]
    %v2007 = vld [vmem:[#allocation22 + $0x10] sm:$0xff]
    %v2008 = vld [vmem:[#allocation22 + $0x18] sm:$0xff]
    %v2009 = vld [vmem:[#allocation22 + $0x20] sm:$0xff]
    %v2010 = vld [vmem:[#allocation22 + $0x28] sm:$0xff]
    %v2011 = vld [vmem:[#allocation22 + $0x30] sm:$0xff]
    %v2012 = vld [vmem:[#allocation22 + $0x38] sm:$0xff]
    %v2013 = vld [vmem:[#allocation22 + $0x40] sm:$0xff]
    %v2014 = vld [vmem:[#allocation22 + $0x48] sm:$0xff]
    %v2015 = vld [vmem:[#allocation22 + $0x50] sm:$0xff]
    %v2016 = vld [vmem:[#allocation22 + $0x58] sm:$0xff]
    %v2017 = vld [vmem:[#allocation22 + $0x60] sm:$0xff]
    %v2018 = vld [vmem:[#allocation22 + $0x68] sm:$0xff]
    %v2019 = vld [vmem:[#allocation22 + $0x70] sm:$0xff]
    %v2020 = vld [vmem:[#allocation22 + $0x78] sm:$0xff]
    %v2037 = vunpack.c.l.b16 %v2005
    %v2038 = vunpack.c.h.b16 %v2005
    %v2039 = vunpack.c.l.b16 %v2006
    %v2040 = vunpack.c.h.b16 %v2006
    %v2041 = vunpack.c.l.b16 %v2007
    %v2042 = vunpack.c.h.b16 %v2007
    %v2043 = vunpack.c.l.b16 %v2008
    %v2044 = vunpack.c.h.b16 %v2008
    %v2045 = vunpack.c.l.b16 %v2009
    %v2046 = vunpack.c.h.b16 %v2009
    %v2047 = vunpack.c.l.b16 %v2010
    %v2048 = vunpack.c.h.b16 %v2010
    %v2049 = vunpack.c.l.b16 %v2011
    %v2050 = vunpack.c.h.b16 %v2011
    %v2051 = vunpack.c.l.b16 %v2012
    %v2052 = vunpack.c.h.b16 %v2012
    %v2053 = vunpack.c.l.b16 %v2013
    %v2054 = vunpack.c.h.b16 %v2013
    %v2055 = vunpack.c.l.b16 %v2014
    %v2056 = vunpack.c.h.b16 %v2014
    %v2057 = vunpack.c.l.b16 %v2015
    %v2058 = vunpack.c.h.b16 %v2015
    %v2059 = vunpack.c.l.b16 %v2016
    %v2060 = vunpack.c.h.b16 %v2016
    %v2061 = vunpack.c.l.b16 %v2017
    %v2062 = vunpack.c.h.b16 %v2017
    %v2063 = vunpack.c.l.b16 %v2018
    %v2064 = vunpack.c.h.b16 %v2018
    %v2065 = vunpack.c.l.b16 %v2019
    %v2066 = vunpack.c.h.b16 %v2019
    %v2067 = vunpack.c.l.b16 %v2020
    %v2068 = vunpack.c.h.b16 %v2020
    %v2069 = vpack.c.b16 %v2039, %v2037
    %v2070 = vpack.c.b16 %v2040, %v2038
    %v2071 = vpack.c.b16 %v2043, %v2041
    %v2072 = vpack.c.b16 %v2044, %v2042
    %v2073 = vpack.c.b16 %v2047, %v2045
    %v2074 = vpack.c.b16 %v2048, %v2046
    %v2075 = vpack.c.b16 %v2051, %v2049
    %v2076 = vpack.c.b16 %v2052, %v2050
    %v2077 = vpack.c.b16 %v2055, %v2053
    %v2078 = vpack.c.b16 %v2056, %v2054
    %v2079 = vpack.c.b16 %v2059, %v2057
    %v2080 = vpack.c.b16 %v2060, %v2058
    %v2081 = vpack.c.b16 %v2063, %v2061
    %v2082 = vpack.c.b16 %v2064, %v2062
    %v2083 = vpack.c.b16 %v2067, %v2065
    %v2084 = vpack.c.b16 %v2068, %v2066
    %2101 = vmatprep.subr.bf16.mxu0 %v2070
    %2102 = vmatpush1.bf16.msra.mxu0 %v2069
    %2103 = vmatprep.subr.bf16.mxu0 %v2072
    %2104 = vmatpush1.bf16.msra.mxu0 %v2071
    %2105 = vmatprep.subr.bf16.mxu0 %v2074
    %2106 = vmatpush1.bf16.msra.mxu0 %v2073
    %2107 = vmatprep.subr.bf16.mxu0 %v2076
    %2108 = vmatpush1.bf16.msra.mxu0 %v2075
    %2109 = vmatprep.subr.bf16.mxu0 %v2078
    %2110 = vmatpush1.bf16.msra.mxu0 %v2077
    %2111 = vmatprep.subr.bf16.mxu0 %v2080
    %2112 = vmatpush1.bf16.msra.mxu0 %v2079
    %2113 = vmatprep.subr.bf16.mxu0 %v2082
    %2114 = vmatpush1.bf16.msra.mxu0 %v2081
    %2115 = vmatprep.subr.bf16.mxu0 %v2084
    %2116 = vmatpush1.bf16.msra.mxu0 %v2083
    %2117 = vmatprep.subr.bf16.mxu0 0
    %2118 = vmatpush1.bf16.msra.mxu0 0
    %2119 = vmatprep.subr.bf16.mxu0 0
    %2120 = vmatpush1.bf16.msra.mxu0 0
    %2121 = vmatprep.subr.bf16.mxu0 0
    %2122 = vmatpush1.bf16.msra.mxu0 0
    %2123 = vmatprep.subr.bf16.mxu0 0
    %2124 = vmatpush1.bf16.msra.mxu0 0
    %2125 = vmatprep.subr.bf16.mxu0 0
    %2126 = vmatpush1.bf16.msra.mxu0 0
    %2127 = vmatprep.subr.bf16.mxu0 0
    %2128 = vmatpush1.bf16.msra.mxu0 0
    %2129 = vmatprep.subr.bf16.mxu0 0
    %2130 = vmatpush1.bf16.msra.mxu0 0
    %2131 = vmatprep.subr.bf16.mxu0 0
    %2132 = vmatpush1.bf16.msra.mxu0 0
    %2133 = vmatprep.mubr.bf16.mxu0 0
    %2134 = vmatmul.mubr.bf16.gmra.mrb[0].mxu0 %v1986
    %v2135 = vpop.f32.mrb[0].mxu0
    %v2136 = vadd.f32 0.0, %v2135
    %v2137 = vpop.f32.mrb[0].mxu0
    %v2138 = vadd.f32 0.0, %v2137
    %v2139 = vpop.f32.mrb[0].mxu0
    %v2140 = vadd.f32 0.0, %v2139
    %v2141 = vpop.f32.mrb[0].mxu0
    %v2142 = vadd.f32 0.0, %v2141
    %2143 = vmatprep.mubr.bf16.mxu0 0
    %2144 = vmatmul.mubr.bf16.gmra.mrb[0].mxu0 %v1987
    %v2145 = vpop.f32.mrb[0].mxu0
    %v2146 = vadd.f32 0.0, %v2145
    %v2147 = vpop.f32.mrb[0].mxu0
    %v2148 = vadd.f32 0.0, %v2147
    %v2149 = vpop.f32.mrb[0].mxu0
    %v2150 = vadd.f32 0.0, %v2149
    %v2151 = vpop.f32.mrb[0].mxu0
    %v2152 = vadd.f32 0.0, %v2151
    %2153 = vmatprep.mubr.bf16.mxu0 0
    %2154 = vmatmul.mubr.bf16.gmra.mrb[0].mxu0 %v1988
    %v2155 = vpop.f32.mrb[0].mxu0
    %v2156 = vadd.f32 0.0, %v2155
    %v2157 = vpop.f32.mrb[0].mxu0
    %v2158 = vadd.f32 0.0, %v2157
    %v2159 = vpop.f32.mrb[0].mxu0
    %v2160 = vadd.f32 0.0, %v2159
    %v2161 = vpop.f32.mrb[0].mxu0
    %v2162 = vadd.f32 0.0, %v2161
    %2163 = vdwg.mxu0
    %v2180 = vunpack.c.l.b16 %v1989
    %v2181 = vunpack.c.h.b16 %v1989
    %v2182 = vunpack.c.l.b16 %v1990
    %v2183 = vunpack.c.h.b16 %v1990
    %v2184 = vunpack.c.l.b16 %v1991
    %v2185 = vunpack.c.h.b16 %v1991
    %v2186 = vunpack.c.l.b16 %v1992
    %v2187 = vunpack.c.h.b16 %v1992
    %v2188 = vunpack.c.l.b16 %v1993
    %v2189 = vunpack.c.h.b16 %v1993
    %v2190 = vunpack.c.l.b16 %v1994
    %v2191 = vunpack.c.h.b16 %v1994
    %v2192 = vunpack.c.l.b16 %v1995
    %v2193 = vunpack.c.h.b16 %v1995
    %v2194 = vunpack.c.l.b16 %v1996
    %v2195 = vunpack.c.h.b16 %v1996
    %v2196 = vunpack.c.l.b16 %v1997
    %v2197 = vunpack.c.h.b16 %v1997
    %v2198 = vunpack.c.l.b16 %v1998
    %v2199 = vunpack.c.h.b16 %v1998
    %v2200 = vunpack.c.l.b16 %v1999
    %v2201 = vunpack.c.h.b16 %v1999
    %v2202 = vunpack.c.l.b16 %v2000
    %v2203 = vunpack.c.h.b16 %v2000
    %v2204 = vunpack.c.l.b16 %v2001
    %v2205 = vunpack.c.h.b16 %v2001
    %v2206 = vunpack.c.l.b16 %v2002
    %v2207 = vunpack.c.h.b16 %v2002
    %v2208 = vunpack.c.l.b16 %v2003
    %v2209 = vunpack.c.h.b16 %v2003
    %v2210 = vunpack.c.l.b16 %v2004
    %v2211 = vunpack.c.h.b16 %v2004
    %v2212 = vpack.c.b16 %v2182, %v2180
    %v2213 = vpack.c.b16 %v2183, %v2181
    %v2214 = vpack.c.b16 %v2186, %v2184
    %v2215 = vpack.c.b16 %v2187, %v2185
    %v2216 = vpack.c.b16 %v2190, %v2188
    %v2217 = vpack.c.b16 %v2191, %v2189
    %v2218 = vpack.c.b16 %v2194, %v2192
    %v2219 = vpack.c.b16 %v2195, %v2193
    %v2220 = vpack.c.b16 %v2198, %v2196
    %v2221 = vpack.c.b16 %v2199, %v2197
    %v2222 = vpack.c.b16 %v2202, %v2200
    %v2223 = vpack.c.b16 %v2203, %v2201
    %v2224 = vpack.c.b16 %v2206, %v2204
    %v2225 = vpack.c.b16 %v2207, %v2205
    %v2226 = vpack.c.b16 %v2210, %v2208
    %v2227 = vpack.c.b16 %v2211, %v2209
    %2244 = vmatprep.subr.bf16.mxu0 %v2213
    %2245 = vmatpush1.bf16.msra.mxu0 %v2212
    %2246 = vmatprep.subr.bf16.mxu0 %v2215
    %2247 = vmatpush1.bf16.msra.mxu0 %v2214
    %2248 = vmatprep.subr.bf16.mxu0 %v2217
    %2249 = vmatpush1.bf16.msra.mxu0 %v2216
    %2250 = vmatprep.subr.bf16.mxu0 %v2219
    %2251 = vmatpush1.bf16.msra.mxu0 %v2218
    %2252 = vmatprep.subr.bf16.mxu0 %v2221
    %2253 = vmatpush1.bf16.msra.mxu0 %v2220
    %2254 = vmatprep.subr.bf16.mxu0 %v2223
    %2255 = vmatpush1.bf16.msra.mxu0 %v2222
    %2256 = vmatprep.subr.bf16.mxu0 %v2225
    %2257 = vmatpush1.bf16.msra.mxu0 %v2224
    %2258 = vmatprep.subr.bf16.mxu0 %v2227
    %2259 = vmatpush1.bf16.msra.mxu0 %v2226
    %2260 = vmatprep.subr.bf16.mxu0 0
    %2261 = vmatpush1.bf16.msra.mxu0 0
    %2262 = vmatprep.subr.bf16.mxu0 0
    %2263 = vmatpush1.bf16.msra.mxu0 0
    %2264 = vmatprep.subr.bf16.mxu0 0
    %2265 = vmatpush1.bf16.msra.mxu0 0
    %2266 = vmatprep.subr.bf16.mxu0 0
    %2267 = vmatpush1.bf16.msra.mxu0 0
    %2268 = vmatprep.subr.bf16.mxu0 0
    %2269 = vmatpush1.bf16.msra.mxu0 0
    %2270 = vmatprep.subr.bf16.mxu0 0
    %2271 = vmatpush1.bf16.msra.mxu0 0
    %2272 = vmatprep.subr.bf16.mxu0 0
    %2273 = vmatpush1.bf16.msra.mxu0 0
    %2274 = vmatprep.subr.bf16.mxu0 0
    %2275 = vmatpush1.bf16.msra.mxu0 0
    %2276 = vmatprep.mubr.bf16.mxu0 0
    %2277 = vmatmul.mubr.bf16.gmra.mrb[0].mxu0 %v1779
    %v2278 = vpop.f32.mrb[0].mxu0
    %v2279 = vadd.f32 %v2136, %v2278
    %v2280 = vpop.f32.mrb[0].mxu0
    %v2281 = vadd.f32 %v2138, %v2280
    %v2282 = vpop.f32.mrb[0].mxu0
    %v2283 = vadd.f32 %v2140, %v2282
    %v2284 = vpop.f32.mrb[0].mxu0
    %v2285 = vadd.f32 %v2142, %v2284
    %2286 = vmatprep.mubr.bf16.mxu0 0
    %2287 = vmatmul.mubr.bf16.gmra.mrb[0].mxu0 %v1780
    %v2288 = vpop.f32.mrb[0].mxu0
    %v2289 = vadd.f32 %v2146, %v2288
    %v2290 = vpop.f32.mrb[0].mxu0
    %v2291 = vadd.f32 %v2148, %v2290
    %v2292 = vpop.f32.mrb[0].mxu0
    %v2293 = vadd.f32 %v2150, %v2292
    %v2294 = vpop.f32.mrb[0].mxu0
    %v2295 = vadd.f32 %v2152, %v2294
    %2296 = vmatprep.mubr.bf16.mxu0 0
    %2297 = vmatmul.mubr.bf16.gmra.mrb[0].mxu0 %v1781
    %v2298 = vpop.f32.mrb[0].mxu0
    %v2299 = vadd.f32 %v2156, %v2298
    %v2300 = vpop.f32.mrb[0].mxu0
    %v2301 = vadd.f32 %v2158, %v2300
    %v2302 = vpop.f32.mrb[0].mxu0
    %v2303 = vadd.f32 %v2160, %v2302
    %v2304 = vpop.f32.mrb[0].mxu0
    %v2305 = vadd.f32 %v2162, %v2304
    %2306 = vdwg.mxu0
    %v2307 = vld [vmem:[#allocation23] sm:$0x3]
    %v2309 = vlaneseq
    %v2310 = vshrl.u32 %v2309, 7
    %v2311 = vsub.s32 0, %v2310
    %v2312 = vrot.slane %v2307, %v2311
    %v2313 = vlaneseq
    %v2314 = vshrl.u32 %v2313, 7
    %v2315 = vsub.s32 1, %v2314
    %v2316 = vrot.slane %v2307, %v2315
    %v2319 = vadd.f32 %v2279, %v2312
    %v2320 = vadd.f32 %v2281, %v2316
    %v2321 = vadd.f32 %v2283, %v2312
    %v2322 = vadd.f32 %v2285, %v2316
    %v2323 = vadd.f32 %v2289, %v2312
    %v2324 = vadd.f32 %v2291, %v2316
    %v2325 = vadd.f32 %v2293, %v2312
    %v2326 = vadd.f32 %v2295, %v2316
    %v2327 = vadd.f32 %v2299, %v2312
    %v2328 = vadd.f32 %v2301, %v2316
    %v2329 = vadd.f32 %v2303, %v2312
    %v2330 = vadd.f32 %v2305, %v2316
    %v2331 = vmul.f32 %v2319, 0.1
    %v2332 = vmul.f32 %v2320, 0.1
    %v2333 = vmul.f32 %v2321, 0.1
    %v2334 = vmul.f32 %v2322, 0.1
    %v2335 = vmul.f32 %v2323, 0.1
    %v2336 = vmul.f32 %v2324, 0.1
    %v2337 = vmul.f32 %v2325, 0.1
    %v2338 = vmul.f32 %v2326, 0.1
    %v2339 = vmul.f32 %v2327, 0.1
    %v2340 = vmul.f32 %v2328, 0.1
    %v2341 = vmul.f32 %v2329, 0.1
    %v2342 = vmul.f32 %v2330, 0.1
    %v2343 = vmax.f32 %v2319, %v2331
    %v2344 = vmax.f32 %v2320, %v2332
    %v2345 = vmax.f32 %v2321, %v2333
    %v2346 = vmax.f32 %v2322, %v2334
    %v2347 = vmax.f32 %v2323, %v2335
    %v2348 = vmax.f32 %v2324, %v2336
    %v2349 = vmax.f32 %v2325, %v2337
    %v2350 = vmax.f32 %v2326, %v2338
    %v2351 = vmax.f32 %v2327, %v2339
    %v2352 = vmax.f32 %v2328, %v2340
    %v2353 = vmax.f32 %v2329, %v2341
    %v2354 = vmax.f32 %v2330, %v2342
    %v2355 = vpack.c.bf16 %v2345, %v2343
    %v2356 = vpack.c.bf16 %v2346, %v2344
    %v2357 = vpack.c.bf16 %v2349, %v2347
    %v2358 = vpack.c.bf16 %v2350, %v2348
    %v2359 = vpack.c.bf16 %v2353, %v2351
    %v2360 = vpack.c.bf16 %v2354, %v2352
    %v2365 = vunpack.c.l.b16 %v2355
    %v2366 = vunpack.c.l.b16 %v2356
    %v2367 = vunpack.c.h.b16 %v2355
    %v2368 = vunpack.c.h.b16 %v2356
    %v2369 = vunpack.c.l.b16 %v2357
    %v2370 = vunpack.c.l.b16 %v2358
    %v2371 = vpack.c.b16 %v2366, %v2365
    %v2372 = vpack.c.b16 %v2368, %v2367
    %v2373 = vpack.c.b16 %v2370, %v2369
    %vm2374 = vsmask.f32 3328
    %vm2375 = vsmask.f32 7440
    %vm2376 = vmor %vm2374, %vm2375
    %v2378 = vshrl.u32 %v2371, 16
    %v2380 = vrot.slane %v2378, 4
    %v2381 = vshll.u32 %v2371, 16
    %v2383 = vrot.slane %v2381, 5
    %v2384 = vor.u32 %v2380, %v2383
    %v2385 = vrot.slane %v2384, 4
    %v2387 = vshll.u32 %v2372, 16
    %v2389 = vrot.slane %v2387, 5
    %v2390 = vsel %vm2376, %v2385, %v2389
    %v2391 = vshrl.u32 %v2372, 16
    %v2393 = vrot.slane %v2391, 4
    %v2394 = vor.u32 %v2393, %v2389
    %v2395 = vrot.slane %v2394, 4
    %v2397 = vshll.u32 %v2373, 16
    %v2399 = vrot.slane %v2397, 5
    %v2400 = vsel %vm2376, %v2395, %v2399
    %2403 = vst [vmem:[#allocation25] sm:$0xff] %v2390
    %2404 = vst [vmem:[#allocation25 + $0x8] sm:$0xff] %v2400
    %v2407 = vunpack.c.h.b16 %v2357
    %v2408 = vunpack.c.h.b16 %v2358
    %v2409 = vunpack.c.l.b16 %v2359
    %v2410 = vunpack.c.l.b16 %v2360
    %v2411 = vunpack.c.h.b16 %v2359
    %v2412 = vunpack.c.h.b16 %v2360
    %v2413 = vpack.c.b16 %v2408, %v2407
    %v2414 = vpack.c.b16 %v2410, %v2409
    %v2415 = vpack.c.b16 %v2412, %v2411
    %v2417 = vshrl.u32 %v2413, 16
    %v2419 = vrot.slane %v2417, 4
    %v2420 = vshll.u32 %v2413, 16
    %v2422 = vrot.slane %v2420, 5
    %v2423 = vor.u32 %v2419, %v2422
    %v2424 = vrot.slane %v2423, 4
    %v2426 = vshll.u32 %v2414, 16
    %v2428 = vrot.slane %v2426, 5
    %v2429 = vsel %vm2376, %v2424, %v2428
    %v2430 = vshrl.u32 %v2414, 16
    %v2432 = vrot.slane %v2430, 4
    %v2433 = vor.u32 %v2432, %v2428
    %v2434 = vrot.slane %v2433, 4
    %v2436 = vshll.u32 %v2415, 16
    %v2438 = vrot.slane %v2436, 5
    %v2439 = vsel %vm2376, %v2434, %v2438
    %s2442 = scalar_lea.vmem [#allocation25], 16
    %2443 = vst [vmem:[%s2442] sm:$0xff] %v2429
    %2444 = vst [vmem:[%s2442 + $0x8] sm:$0xff] %v2439
    // Predicated region
    $region114: #{_lambda_.1} parent=1 // pred_check
      _
    $region115: #{_lambda_.1} parent=1 // pred_check_branch
      %2446 = sbr.rel (0) target = $region117
    $region116: #{_lambda_.1} parent=1 // pred_region
      %s2448 = ssub.s32 512, 512
      %2449 = vsyncadd [#allocation4], %s2448
      %s2450 = sshll.u32 [#allocation25], 4
      %s2451 = int_to_ptr.vmem [resolvable:$true] %s2450
      %2456 = dma.vmem_to_hbm [thread:$0]  %s2451, 512, %s14, [#allocation4], 128, 128, 8
    $region117: #{_lambda_.1} parent=1 // pred_fallthru
      _
    // Predicated region
    $region118: #{_lambda_.1} parent=1 // pred_check
      _
    $region119: #{_lambda_.1} parent=1 // pred_check_branch
      %2458 = sbr.rel (0) target = $region121
    $region120: #{_lambda_.1} parent=1 // pred_region
      %2459 = dma.done [#allocation4], 512
    $region121: #{_lambda_.1} parent=1 // pred_fallthru
      _
    %2460 = vsyncpa [#allocation3], 1
    %2461 = vsyncpa [#allocation6], 1
    %2462 = vsyncpa [#allocation9], 1
    %2463 = vsyncpa [#allocation12], 1
    %2464 = vsyncpa [#allocation15], 1
    %2465 = vsyncpa [#allocation18], 1
    %2466 = vsyncpa [#allocation21], 1
    %2467 = vsyncpa [#allocation24], 1
    %2468 = vsyncpa [#allocation4], 1

</llo_original>
